<compile_context>
chip_gen: v5e
topology: v5e:2x2
jax: 0.10.0
libtpu: 0.0.40
codegen_flags: <defaults>
</compile_context>

<pallas_src>
import math

import jax
import jax.numpy as jnp
from jax import lax
from jax.experimental import pallas as pl
from jax.experimental.pallas import tpu as pltpu

# ----------------------------- configuration --------------------------------
B = 2              # batch
C_IN = 8           # latent channels after set_adapter (conv_in -> 8 ch)
C_OUT = 4          # predicted-noise channels
H = W = 16         # latent spatial size
HW = H * W         # 256  -> lane-dense
BHW = B * HW       # 512  -> batch folded into lanes
HIDDEN = 64        # unet block hidden size
HALF = HIDDEN // 2
D_TXT = 64         # raw text-embed dim fed to the resampler
D_CTX = 64         # resampler output dim == unet cross_attention_dim
S_TXT = 8          # text tokens into the resampler
NUM_Q = 8          # resampler learned query tokens
D_POOL_IN = 32     # pooled text-embed dim (resampler input)
D_POOL_OUT = 32    # pooled text-embed dim (resampler output)
N_TIME_IDS = 6     # SDXL time_ids length
LORA_RANK = 16


def _round8(n):
    return ((n + 7) // 8) * 8


# --------------- packed parameter slab (single DMA, 8-row aligned) ----------
W_COLS = 2 * HIDDEN      # 128: widest entry is the packed to_k||to_v weight
_W_ENTRIES = (
    ("res_w_in",    (D_TXT, D_CTX)),
    ("res_latents", (NUM_Q, D_CTX)),
    ("res_w_out",   (D_CTX, D_CTX)),
    ("w_t",         (HIDDEN, HIDDEN)),
    ("w_add_time",  (N_TIME_IDS, HIDDEN)),
    ("res_w_pool",  (D_POOL_IN, D_POOL_OUT)),
    ("w_add_pool",  (D_POOL_OUT, HIDDEN)),
    ("w_cin",       (C_IN, HIDDEN)),
    ("w_q",         (HIDDEN, HIDDEN)),
    ("a_q_t",       (LORA_RANK, HIDDEN)),     # LoRA A stored transposed
    ("b_q",         (LORA_RANK, HIDDEN)),
    ("w_kv",        (D_CTX, 2 * HIDDEN)),     # packed to_k || to_v
    ("w_o",         (HIDDEN, HIDDEN)),
    ("a_o_t",       (LORA_RANK, HIDDEN)),
    ("b_o",         (LORA_RANK, HIDDEN)),
    ("w_cout",      (C_OUT, HIDDEN)),
)
_W_SHAPES = dict(_W_ENTRIES)
_W_OFF = {}
_r = 0
for _name, (_rows, _cols) in _W_ENTRIES:
    _W_OFF[_name] = _r
    _r += _round8(_rows)
W_ROWS = _r              # 544

# ------- packed small-vector slab (activations + bias/frequency columns) ----
V_TS = 0                                  # timesteps           (1, B) in rows 0:1
V_TID = 8                                 # time_ids^T (padded) (8, B)
V_POOL = 16                               # pooled^T            (32, B)
V_BT = V_POOL + D_POOL_IN                 # 48   b_t column     (64, 1)
V_BCIN = V_BT + HIDDEN                    # 112  b_cin column   (64, 1)
V_BCOUT = V_BCIN + HIDDEN                 # 176  b_cout column  (4, 1)
V_FREQ = V_BCOUT + 8                      # 184  sinusoid freqs (32, 1)
V_ROWS = V_FREQ + HALF                    # 216


# ------------------------------ fused kernel --------------------------------
def fused_adapter_kernel(lat_ref, noise_ref, txt_ref, wslab_ref, vslab_ref,
                         pred_ref, loss_ref):
    f32 = jnp.float32
    dn_tt = (((0,), (0,)), ((), ()))      # contract dim0 x dim0  (lhs^T @ rhs)
    dn_nn = (((1,), (0,)), ((), ()))      # plain matmul

    def wp(name, rows=None, cols=None):
        off = _W_OFF[name]
        r, c = _W_SHAPES[name]
        r = rows if rows is not None else r
        c = cols if cols is not None else c
        return wslab_ref[off:off + r, 0:c]

    # ---- LoRA fold (set_adapter: to_q / to_out[0] carry LoRA layers) -------
    w_q_eff = wp("w_q") + lax.dot_general(wp("a_q_t"), wp("b_q"), dn_tt,
                                          preferred_element_type=f32)
    w_o_eff = wp("w_o") + lax.dot_general(wp("a_o_t"), wp("b_o"), dn_tt,
                                          preferred_element_type=f32)

    # ---- timestep + SDXL added-cond embedding, feature-major (HIDDEN, B) ---
    tsteps = vslab_ref[V_TS:V_TS + 1, 0:B]                       # (1, B)
    tids = vslab_ref[V_TID:V_TID + 8, 0:B]                       # (8, B) 2 zero rows
    pooled_in = vslab_ref[V_POOL:V_POOL + D_POOL_IN, 0:B]        # (32, B)
    b_t = vslab_ref[V_BT:V_BT + HIDDEN, 0:1]                     # (64, 1)
    b_cin = vslab_ref[V_BCIN:V_BCIN + HIDDEN, 0:1]               # (64, 1)
    b_cout = vslab_ref[V_BCOUT:V_BCOUT + C_OUT, 0:1]             # (4, 1)
    freqs = vslab_ref[V_FREQ:V_FREQ + HALF, 0:1]                 # (32, 1)

    angles = freqs * tsteps                                      # (32, B), EUP sin/cos
    wt = _W_OFF["w_t"]
    pooled = lax.dot_general(wp("res_w_pool"), pooled_in, dn_tt,
                             preferred_element_type=f32)         # resampler pooled head
    temb = (lax.dot_general(wslab_ref[wt:wt + HALF, 0:HIDDEN], jnp.sin(angles),
                            dn_tt, preferred_element_type=f32)
            + lax.dot_general(wslab_ref[wt + HALF:wt + HIDDEN, 0:HIDDEN],
                              jnp.cos(angles), dn_tt, preferred_element_type=f32)
            + lax.dot_general(wp("w_add_time", rows=8), tids, dn_tt,
                              preferred_element_type=f32)
            + lax.dot_general(wp("w_add_pool"), pooled, dn_tt,
                              preferred_element_type=f32)
            + b_t + b_cin)                                       # (HIDDEN, B)

    # ---- resampler: learned latent queries attend over the text embeds -----
    xp_all = jnp.dot(txt_ref[...], wp("res_w_in"),
                     preferred_element_type=f32)                 # (B*S_TXT, D_CTX)
    lq = wp("res_latents")                                       # (NUM_Q, D_CTX)
    inv_sqrt_ctx = 1.0 / math.sqrt(D_CTX)
    attended = []
    for b in range(B):
        xp_b = xp_all[b * S_TXT:(b + 1) * S_TXT, :]
        rl = lax.dot_general(lq, xp_b, (((1,), (1,)), ((), ())),
                             preferred_element_type=f32) * inv_sqrt_ctx
        rl = rl - jnp.max(rl, axis=-1, keepdims=True)
        re = jnp.exp(rl)
        ra = re * pl.reciprocal(jnp.sum(re, axis=-1, keepdims=True), approx=True)
        attended.append(jnp.dot(ra, xp_b, preferred_element_type=f32))
    ctx_all = jnp.dot(jnp.concatenate(attended, axis=0), wp("res_w_out"),
                      preferred_element_type=f32)                # (B*NUM_Q, D_CTX)
    kv_all = jnp.dot(ctx_all, wp("w_kv"),
                     preferred_element_type=f32)                 # (B*NUM_Q, 2*HIDDEN)

    # ---- unet: 1x1 conv_in, feature-major, batch folded along lanes --------
    h = lax.dot_general(wp("w_cin"), lat_ref[...], dn_tt,
                        preferred_element_type=f32)              # (HIDDEN, B*HW)
    temb_cols = jnp.concatenate(
        [jnp.broadcast_to(temb[:, b:b + 1], (HIDDEN, HW)) for b in range(B)],
        axis=1)                                                  # (HIDDEN, B*HW)
    h = h + temb_cols

    # ---- cross attention: LoRA q/out, packed k||v, softmax over sublanes ---
    q_all = lax.dot_general(w_q_eff, h, dn_tt,
                            preferred_element_type=f32)          # (HIDDEN, B*HW)
    inv_sqrt_h = 1.0 / math.sqrt(HIDDEN)
    attn_out = []
    for b in range(B):       # only the softmaxes are per-batch; slices 256-aligned
        k_b = kv_all[b * NUM_Q:(b + 1) * NUM_Q, 0:HIDDEN]
        v_b = kv_all[b * NUM_Q:(b + 1) * NUM_Q, HIDDEN:2 * HIDDEN]
        q_b = q_all[:, b * HW:(b + 1) * HW]                      # (HIDDEN, HW)
        s = lax.dot_general(k_b, q_b, dn_nn,
                            preferred_element_type=f32) * inv_sqrt_h   # (NUM_Q, HW)
        s = s - jnp.max(s, axis=0, keepdims=True)
        e = jnp.exp(s)
        p = e * pl.reciprocal(jnp.sum(e, axis=0, keepdims=True), approx=True)
        attn_out.append(lax.dot_general(v_b, p, dn_tt,
                                        preferred_element_type=f32))   # (HIDDEN, HW)
    a_all = jnp.concatenate(attn_out, axis=1)                    # (HIDDEN, B*HW)
    h = h + lax.dot_general(w_o_eff, a_all, dn_tt,
                            preferred_element_type=f32)          # residual

    # ---- 1x1 conv_out: already feature-major -> unmasked lane-dense stores -
    pred = lax.dot_general(wp("w_cout"), h, dn_nn,
                           preferred_element_type=f32) + b_cout  # (C_OUT, B*HW)
    for b in range(B):
        pred_ref[b, :, :] = pred[:, b * HW:(b + 1) * HW]         # (C_OUT, HW)

    # ---- single fused MSE over the folded block -----------------------------
    diff = pred - noise_ref[...]
    loss_ref[0, 0] = jnp.sum(diff * diff) * (1.0 / float(B * C_OUT * HW))


def run_fused(lat_fm, noise_fm, txt, wslab, vslab):
    vmem = pltpu.MemorySpace.VMEM
    return pl.pallas_call(
        fused_adapter_kernel,
        out_shape=(jax.ShapeDtypeStruct((B, C_OUT, HW), jnp.float32),
                   jax.ShapeDtypeStruct((1, 1), jnp.float32)),
        in_specs=[pl.BlockSpec(memory_space=vmem)] * 5,
        out_specs=(pl.BlockSpec(memory_space=vmem),
                   pl.BlockSpec(memory_space=pltpu.MemorySpace.SMEM)),
    )(lat_fm, noise_fm, txt, wslab, vslab)


# ------------------------------ slab packing ---------------------------------
def pack_wslab(params):
    """All 2-D weights in one (W_ROWS, 128) f32 slab, 8-row-aligned entries."""
    t = dict(params)
    t["a_q_t"] = params["a_q"].T
    t["a_o_t"] = params["a_o"].T
    blocks = []
    for name, (r, c) in _W_ENTRIES:
        blk = jnp.zeros((_round8(r), W_COLS), jnp.float32)
        blocks.append(blk.at[:r, :c].set(t[name].astype(jnp.float32)))
    return jnp.concatenate(blocks, axis=0)


def _colpad(vec, rows):
    v = vec.astype(jnp.float32).reshape(-1, 1)
    v = jnp.pad(v, ((0, rows - v.shape[0]), (0, 0)))
    return jnp.concatenate([v, jnp.zeros((rows, B - 1), jnp.float32)], axis=1)


def pack_vslab(params, timesteps, time_ids, pooled):
    """Timestep/time_ids/pooled activations + bias & frequency columns, one DMA."""
    f32 = jnp.float32
    freqs = jnp.exp(-math.log(10000.0) * jnp.arange(HALF, dtype=f32) / HALF)
    ts_blk = jnp.zeros((8, B), f32).at[0, :].set(timesteps.astype(f32))
    tid_blk = jnp.zeros((8, B), f32).at[:N_TIME_IDS, :].set(time_ids.astype(f32).T)
    pool_blk = pooled.astype(f32).T                              # (32, B)
    return jnp.concatenate(
        [ts_blk, tid_blk, pool_blk,
         _colpad(params["b_t"], HIDDEN), _colpad(params["b_cin"], HIDDEN),
         _colpad(params["b_cout"], 8), _colpad(freqs, HALF)], axis=0)


# ------------------------------- glue / wrapper ------------------------------
@jax.jit
def sdxl_adapter_forward(params, noisy_latents, timesteps, image_embeds,
                         text_embeds, noise, time_ids, pooled_text_embeds):
    del image_embeds  # present in the PyTorch forward signature but unused
    f32 = jnp.float32
    # Fold batch into the lane axis: (B, C, H, W) -> (C, B*HW).  HW stays the
    # minor (lane) dim; only the tiny (C, B) leading axes are permuted.
    lat_fm = jnp.transpose(noisy_latents.astype(f32).reshape(B, C_IN, HW),
                           (1, 0, 2)).reshape(C_IN, BHW)
    noise_fm = jnp.transpose(noise.astype(f32).reshape(B, C_OUT, HW),
                             (1, 0, 2)).reshape(C_OUT, BHW)
    txt = text_embeds.astype(f32).reshape(B * S_TXT, D_TXT)
    wslab = pack_wslab(params)
    vslab = pack_vslab(params, timesteps, time_ids, pooled_text_embeds)
    pred, loss = run_fused(lat_fm, noise_fm, txt, wslab, vslab)
    # kernel already emits (B, C_OUT, HW); reshape to NCHW is free.
    return {"total_loss": loss[0, 0],
            "noise_pred": pred.reshape(B, C_OUT, H, W)}


def init_params(key):
    ks = jax.random.split(key, 20)
    n = lambda k, shape, s=0.02: (s * jax.random.normal(k, shape)
                                  ).astype(jnp.float32)
    return {
        # resampler
        "res_w_in": n(ks[0], (D_TXT, D_CTX)),
        "res_latents": n(ks[1], (NUM_Q, D_CTX)),
        "res_w_out": n(ks[2], (D_CTX, D_CTX)),
        "res_w_pool": n(ks[3], (D_POOL_IN, D_POOL_OUT)),
        # timestep + SDXL added conditions
        "w_t": n(ks[4], (HIDDEN, HIDDEN)),
        "b_t": n(ks[5], (HIDDEN,), s=0.01),
        "w_add_time": n(ks[6], (N_TIME_IDS, HIDDEN), s=0.001),
        "w_add_pool": n(ks[7], (D_POOL_OUT, HIDDEN)),
        # unet block
        "w_cin": n(ks[8], (C_IN, HIDDEN)),
        "b_cin": n(ks[9], (HIDDEN,), s=0.01),
        "w_q": n(ks[10], (HIDDEN, HIDDEN)),
        "a_q": n(ks[11], (HIDDEN, LORA_RANK)),
        "b_q": n(ks[12], (LORA_RANK, HIDDEN)),
        "w_kv": n(ks[13], (D_CTX, 2 * HIDDEN)),      # packed to_k || to_v
        "w_o": n(ks[14], (HIDDEN, HIDDEN)),
        "a_o": n(ks[15], (HIDDEN, LORA_RANK)),
        "b_o": n(ks[16], (LORA_RANK, HIDDEN)),
        "w_cout": n(ks[17], (C_OUT, HIDDEN)),        # (out, in) layout
        "b_cout": n(ks[18], (C_OUT,), s=0.01),
    }


# ------------------------------ pure-JAX reference ---------------------------
def reference_forward(params, noisy_latents, timesteps, image_embeds,
                      text_embeds, noise, time_ids, pooled_text_embeds):
    del image_embeds
    f32 = jnp.float32
    lat = jnp.transpose(noisy_latents.reshape(B, C_IN, HW), (0, 2, 1))
    freqs = jnp.exp(-math.log(10000.0) * jnp.arange(HALF, dtype=f32) / HALF)
    args = timesteps.astype(f32)[:, None] * freqs[None, :]
    t_feat = jnp.concatenate([jnp.sin(args), jnp.cos(args)], axis=-1)

    w_q = params["w_q"] + params["a_q"] @ params["b_q"]
    w_o = params["w_o"] + params["a_o"] @ params["b_o"]

    # resampler
    xp = text_embeds @ params["res_w_in"]
    r_logits = jnp.einsum("qd,bsd->bqs", params["res_latents"], xp) \
        / math.sqrt(D_CTX)
    r_attn = jax.nn.softmax(r_logits, axis=-1)
    ctx = jnp.einsum("bqs,bsd->bqd", r_attn, xp) @ params["res_w_out"]
    pooled = pooled_text_embeds @ params["res_w_pool"]

    temb = (t_feat @ params["w_t"] + params["b_t"][None, :]
            + time_ids.astype(f32) @ params["w_add_time"]
            + pooled @ params["w_add_pool"])

    h = lat @ params["w_cin"] + params["b_cin"][None, None, :] + temb[:, None, :]
    q = h @ w_q
    kv = ctx @ params["w_kv"]
    k, v = kv[..., :HIDDEN], kv[..., HIDDEN:]
    logits = jnp.einsum("bnd,bsd->bns", q, k) / math.sqrt(HIDDEN)
    attn = jax.nn.softmax(logits, axis=-1)
    h = h + jnp.einsum("bns,bsd->bnd", attn, v) @ w_o
    pred = jnp.einsum("bnd,cd->bcn", h, params["w_cout"]) \
        + params["b_cout"][None, :, None]
    loss = jnp.mean((pred - noise.reshape(B, C_OUT, HW)) ** 2)
    return {"total_loss": loss,
            "noise_pred": pred.reshape(B, C_OUT, H, W)}


# ------------------------------------ main -----------------------------------
if __name__ == "__main__":
    key = jax.random.PRNGKey(0)
    kp, k1, k2, k3, k4, k5, k6 = jax.random.split(key, 7)
    params = init_params(kp)

    noisy_latents = jax.random.normal(k1, (B, C_IN, H, W), jnp.float32)
    timesteps = jax.random.randint(k2, (B,), 0, 1000).astype(jnp.int32)
    image_embeds = jax.random.normal(k3, (B, 8, 64), jnp.float32)  # unused
    text_embeds = jax.random.normal(k4, (B, S_TXT, D_TXT), jnp.float32)
    noise = jax.random.normal(k5, (B, C_OUT, H, W), jnp.float32)
    time_ids = jnp.tile(
        jnp.array([[H * 8, W * 8, 0.0, 0.0, H * 8, W * 8]], jnp.float32),
        (B, 1))
    pooled_text_embeds = jax.random.normal(k6, (B, D_POOL_IN), jnp.float32)

    out = sdxl_adapter_forward(params, noisy_latents, timesteps, image_embeds,
                               text_embeds, noise, time_ids,
                               pooled_text_embeds)
    jax.block_until_ready(out)

    ref = reference_forward(params, noisy_latents, timesteps, image_embeds,
                            text_embeds, noise, time_ids, pooled_text_embeds)
    assert out["noise_pred"].shape == (B, C_OUT, H, W)
    assert jnp.allclose(out["noise_pred"], ref["noise_pred"],
                        rtol=1e-2, atol=2e-3)
    assert jnp.allclose(out["total_loss"], ref["total_loss"],
                        rtol=1e-2, atol=2e-3)

    print("KERNEL_OK")
</pallas_src>

<mosaic_0001>
module attributes {stable_mosaic.version = 11 : i64} {
  func.func @fused_adapter_kernel(%arg0: memref<8x512xf32, #tpu.memory_space<vmem>>, %arg1: memref<4x512xf32, #tpu.memory_space<vmem>>, %arg2: memref<16x64xf32, #tpu.memory_space<vmem>>, %arg3: memref<544x128xf32, #tpu.memory_space<vmem>>, %arg4: memref<216x2xf32, #tpu.memory_space<vmem>>, %arg5: memref<2x4x256xf32, #tpu.memory_space<vmem>>, %arg6: memref<1x1xf32, #tpu.memory_space<smem>>) attributes {dimension_semantics = [], scalar_prefetch = 0 : i64, scratch_operands = 0 : i64, tpu.core_type = #tpu.core_type<tc>} {
    %c280 = arith.constant 280 : index
    %c0 = arith.constant 0 : index
    %0 = vector.load %arg3[%c280, %c0] : memref<544x128xf32, #tpu.memory_space<vmem>>, vector<64x64xf32>
    %c344 = arith.constant 344 : index
    %c0_0 = arith.constant 0 : index
    %1 = vector.load %arg3[%c344, %c0_0] : memref<544x128xf32, #tpu.memory_space<vmem>>, vector<16x64xf32>
    %c360 = arith.constant 360 : index
    %c0_1 = arith.constant 0 : index
    %2 = vector.load %arg3[%c360, %c0_1] : memref<544x128xf32, #tpu.memory_space<vmem>>, vector<16x64xf32>
    %cst = arith.constant dense<0.000000e+00> : vector<64x64xf32>
    %3 = tpu.matmul %1, %2, %cst {dimension_numbers = #tpu.dot_dimension_numbers<[0], [0], [1], [1], [0, 1, 1, 1], [], []>} : vector<16x64xf32>, vector<16x64xf32>, vector<64x64xf32> -> vector<64x64xf32>
    %4 = arith.addf %0, %3 : vector<64x64xf32>
    %c440 = arith.constant 440 : index
    %c0_2 = arith.constant 0 : index
    %5 = vector.load %arg3[%c440, %c0_2] : memref<544x128xf32, #tpu.memory_space<vmem>>, vector<64x64xf32>
    %c504 = arith.constant 504 : index
    %c0_3 = arith.constant 0 : index
    %6 = vector.load %arg3[%c504, %c0_3] : memref<544x128xf32, #tpu.memory_space<vmem>>, vector<16x64xf32>
    %c520 = arith.constant 520 : index
    %c0_4 = arith.constant 0 : index
    %7 = vector.load %arg3[%c520, %c0_4] : memref<544x128xf32, #tpu.memory_space<vmem>>, vector<16x64xf32>
    %cst_5 = arith.constant dense<0.000000e+00> : vector<64x64xf32>
    %8 = tpu.matmul %6, %7, %cst_5 {dimension_numbers = #tpu.dot_dimension_numbers<[0], [0], [1], [1], [0, 1, 1, 1], [], []>} : vector<16x64xf32>, vector<16x64xf32>, vector<64x64xf32> -> vector<64x64xf32>
    %9 = arith.addf %5, %8 : vector<64x64xf32>
    %c0_6 = arith.constant 0 : index
    %c0_7 = arith.constant 0 : index
    %10 = vector.load %arg4[%c0_6, %c0_7] : memref<216x2xf32, #tpu.memory_space<vmem>>, vector<1x2xf32>
    %c8 = arith.constant 8 : index
    %c0_8 = arith.constant 0 : index
    %11 = vector.load %arg4[%c8, %c0_8] : memref<216x2xf32, #tpu.memory_space<vmem>>, vector<8x2xf32>
    %c16 = arith.constant 16 : index
    %c0_9 = arith.constant 0 : index
    %12 = vector.load %arg4[%c16, %c0_9] : memref<216x2xf32, #tpu.memory_space<vmem>>, vector<32x2xf32>
    %c48 = arith.constant 48 : index
    %c0_10 = arith.constant 0 : index
    %13 = vector.load %arg4[%c48, %c0_10] : memref<216x2xf32, #tpu.memory_space<vmem>>, vector<64x1xf32>
    %c112 = arith.constant 112 : index
    %c0_11 = arith.constant 0 : index
    %14 = vector.load %arg4[%c112, %c0_11] : memref<216x2xf32, #tpu.memory_space<vmem>>, vector<64x1xf32>
    %c176 = arith.constant 176 : index
    %c0_12 = arith.constant 0 : index
    %15 = vector.load %arg4[%c176, %c0_12] : memref<216x2xf32, #tpu.memory_space<vmem>>, vector<4x1xf32>
    %c184 = arith.constant 184 : index
    %c0_13 = arith.constant 0 : index
    %16 = vector.load %arg4[%c184, %c0_13] : memref<216x2xf32, #tpu.memory_space<vmem>>, vector<32x1xf32>
    %17 = vector.broadcast %16 : vector<32x1xf32> to vector<32x2xf32>
    %18 = vector.broadcast %10 : vector<1x2xf32> to vector<32x2xf32>
    %19 = arith.mulf %17, %18 : vector<32x2xf32>
    %c208 = arith.constant 208 : index
    %c0_14 = arith.constant 0 : index
    %20 = vector.load %arg3[%c208, %c0_14] : memref<544x128xf32, #tpu.memory_space<vmem>>, vector<32x32xf32>
    %cst_15 = arith.constant dense<0.000000e+00> : vector<32x2xf32>
    %21 = tpu.matmul %20, %12, %cst_15 {dimension_numbers = #tpu.dot_dimension_numbers<[0], [0], [1], [1], [0, 1, 1, 1], [], []>} : vector<32x32xf32>, vector<32x2xf32>, vector<32x2xf32> -> vector<32x2xf32>
    %c136 = arith.constant 136 : index
    %c0_16 = arith.constant 0 : index
    %22 = vector.load %arg3[%c136, %c0_16] : memref<544x128xf32, #tpu.memory_space<vmem>>, vector<32x64xf32>
    %23 = math.sin %19 : vector<32x2xf32>
    %cst_17 = arith.constant dense<0.000000e+00> : vector<64x2xf32>
    %24 = tpu.matmul %22, %23, %cst_17 {dimension_numbers = #tpu.dot_dimension_numbers<[0], [0], [1], [1], [0, 1, 1, 1], [], []>} : vector<32x64xf32>, vector<32x2xf32>, vector<64x2xf32> -> vector<64x2xf32>
    %c168 = arith.constant 168 : index
    %c0_18 = arith.constant 0 : index
    %25 = vector.load %arg3[%c168, %c0_18] : memref<544x128xf32, #tpu.memory_space<vmem>>, vector<32x64xf32>
    %26 = math.cos %19 : vector<32x2xf32>
    %cst_19 = arith.constant dense<0.000000e+00> : vector<64x2xf32>
    %27 = tpu.matmul %25, %26, %cst_19 {dimension_numbers = #tpu.dot_dimension_numbers<[0], [0], [1], [1], [0, 1, 1, 1], [], []>} : vector<32x64xf32>, vector<32x2xf32>, vector<64x2xf32> -> vector<64x2xf32>
    %28 = arith.addf %24, %27 : vector<64x2xf32>
    %c200 = arith.constant 200 : index
    %c0_20 = arith.constant 0 : index
    %29 = vector.load %arg3[%c200, %c0_20] : memref<544x128xf32, #tpu.memory_space<vmem>>, vector<8x64xf32>
    %cst_21 = arith.constant dense<0.000000e+00> : vector<64x2xf32>
    %30 = tpu.matmul %29, %11, %cst_21 {dimension_numbers = #tpu.dot_dimension_numbers<[0], [0], [1], [1], [0, 1, 1, 1], [], []>} : vector<8x64xf32>, vector<8x2xf32>, vector<64x2xf32> -> vector<64x2xf32>
    %31 = arith.addf %28, %30 : vector<64x2xf32>
    %c240 = arith.constant 240 : index
    %c0_22 = arith.constant 0 : index
    %32 = vector.load %arg3[%c240, %c0_22] : memref<544x128xf32, #tpu.memory_space<vmem>>, vector<32x64xf32>
    %cst_23 = arith.constant dense<0.000000e+00> : vector<64x2xf32>
    %33 = tpu.matmul %32, %21, %cst_23 {dimension_numbers = #tpu.dot_dimension_numbers<[0], [0], [1], [1], [0, 1, 1, 1], [], []>} : vector<32x64xf32>, vector<32x2xf32>, vector<64x2xf32> -> vector<64x2xf32>
    %34 = arith.addf %31, %33 : vector<64x2xf32>
    %35 = vector.broadcast %13 : vector<64x1xf32> to vector<64x2xf32>
    %36 = arith.addf %34, %35 : vector<64x2xf32>
    %37 = vector.broadcast %14 : vector<64x1xf32> to vector<64x2xf32>
    %38 = arith.addf %36, %37 : vector<64x2xf32>
    %c0_24 = arith.constant 0 : index
    %c0_25 = arith.constant 0 : index
    %39 = vector.load %arg2[%c0_24, %c0_25] : memref<16x64xf32, #tpu.memory_space<vmem>>, vector<16x64xf32>
    %c0_26 = arith.constant 0 : index
    %c0_27 = arith.constant 0 : index
    %40 = vector.load %arg3[%c0_26, %c0_27] : memref<544x128xf32, #tpu.memory_space<vmem>>, vector<64x64xf32>
    %cst_28 = arith.constant dense<0.000000e+00> : vector<16x64xf32>
    %41 = tpu.matmul %39, %40, %cst_28 {dimension_numbers = #tpu.dot_dimension_numbers<[1], [0], [0], [1], [0, 0, 1, 1], [], []>} : vector<16x64xf32>, vector<64x64xf32>, vector<16x64xf32> -> vector<16x64xf32>
    %c64 = arith.constant 64 : index
    %c0_29 = arith.constant 0 : index
    %42 = vector.load %arg3[%c64, %c0_29] : memref<544x128xf32, #tpu.memory_space<vmem>>, vector<8x64xf32>
    %43 = vector.extract_strided_slice %41 {offsets = [0, 0], sizes = [8, 64], strides = [1, 1]} : vector<16x64xf32> to vector<8x64xf32>
    %cst_30 = arith.constant dense<0.000000e+00> : vector<8x8xf32>
    %44 = tpu.matmul %42, %43, %cst_30 {dimension_numbers = #tpu.dot_dimension_numbers<[1], [1], [0], [0], [0, 0, 1, 0], [], []>} : vector<8x64xf32>, vector<8x64xf32>, vector<8x8xf32> -> vector<8x8xf32>
    %cst_31 = arith.constant 1.250000e-01 : f32
    %45 = vector.broadcast %cst_31 : f32 to vector<8x8xf32>
    %46 = arith.mulf %44, %45 : vector<8x8xf32>
    %cst_32 = arith.constant dense<0xFF800000> : vector<8xf32>
    %47 = vector.multi_reduction <maximumf>, %46, %cst_32 [1] : vector<8x8xf32> to vector<8xf32>
    %48 = vector.shape_cast %47 : vector<8xf32> to vector<8x1xf32>
    %49 = vector.broadcast %48 : vector<8x1xf32> to vector<8x8xf32>
    %50 = arith.subf %46, %49 : vector<8x8xf32>
    %51 = math.exp %50 : vector<8x8xf32>
    %cst_33 = arith.constant dense<0.000000e+00> : vector<8xf32>
    %52 = vector.multi_reduction <add>, %51, %cst_33 [1] : vector<8x8xf32> to vector<8xf32>
    %53 = vector.shape_cast %52 : vector<8xf32> to vector<8x1xf32>
    %54 = tpu.reciprocal %53 {approx = true} : vector<8x1xf32> -> vector<8x1xf32>
    %55 = vector.broadcast %54 : vector<8x1xf32> to vector<8x8xf32>
    %56 = arith.mulf %51, %55 : vector<8x8xf32>
    %cst_34 = arith.constant dense<0.000000e+00> : vector<8x64xf32>
    %57 = tpu.matmul %56, %43, %cst_34 {dimension_numbers = #tpu.dot_dimension_numbers<[1], [0], [0], [1], [0, 0, 1, 1], [], []>} : vector<8x8xf32>, vector<8x64xf32>, vector<8x64xf32> -> vector<8x64xf32>
    %58 = vector.extract_strided_slice %41 {offsets = [8, 0], sizes = [8, 64], strides = [1, 1]} : vector<16x64xf32> to vector<8x64xf32>
    %cst_35 = arith.constant dense<0.000000e+00> : vector<8x8xf32>
    %59 = tpu.matmul %42, %58, %cst_35 {dimension_numbers = #tpu.dot_dimension_numbers<[1], [1], [0], [0], [0, 0, 1, 0], [], []>} : vector<8x64xf32>, vector<8x64xf32>, vector<8x8xf32> -> vector<8x8xf32>
    %cst_36 = arith.constant 1.250000e-01 : f32
    %60 = vector.broadcast %cst_36 : f32 to vector<8x8xf32>
    %61 = arith.mulf %59, %60 : vector<8x8xf32>
    %cst_37 = arith.constant dense<0xFF800000> : vector<8xf32>
    %62 = vector.multi_reduction <maximumf>, %61, %cst_37 [1] : vector<8x8xf32> to vector<8xf32>
    %63 = vector.shape_cast %62 : vector<8xf32> to vector<8x1xf32>
    %64 = vector.broadcast %63 : vector<8x1xf32> to vector<8x8xf32>
    %65 = arith.subf %61, %64 : vector<8x8xf32>
    %66 = math.exp %65 : vector<8x8xf32>
    %cst_38 = arith.constant dense<0.000000e+00> : vector<8xf32>
    %67 = vector.multi_reduction <add>, %66, %cst_38 [1] : vector<8x8xf32> to vector<8xf32>
    %68 = vector.shape_cast %67 : vector<8xf32> to vector<8x1xf32>
    %69 = tpu.reciprocal %68 {approx = true} : vector<8x1xf32> -> vector<8x1xf32>
    %70 = vector.broadcast %69 : vector<8x1xf32> to vector<8x8xf32>
    %71 = arith.mulf %66, %70 : vector<8x8xf32>
    %cst_39 = arith.constant dense<0.000000e+00> : vector<8x64xf32>
    %72 = tpu.matmul %71, %58, %cst_39 {dimension_numbers = #tpu.dot_dimension_numbers<[1], [0], [0], [1], [0, 0, 1, 1], [], []>} : vector<8x8xf32>, vector<8x64xf32>, vector<8x64xf32> -> vector<8x64xf32>
    %73 = tpu.concatenate %57, %72 in 0 : vector<8x64xf32>, vector<8x64xf32> -> vector<16x64xf32>
    %c72 = arith.constant 72 : index
    %c0_40 = arith.constant 0 : index
    %74 = vector.load %arg3[%c72, %c0_40] : memref<544x128xf32, #tpu.memory_space<vmem>>, vector<64x64xf32>
    %cst_41 = arith.constant dense<0.000000e+00> : vector<16x64xf32>
    %75 = tpu.matmul %73, %74, %cst_41 {dimension_numbers = #tpu.dot_dimension_numbers<[1], [0], [0], [1], [0, 0, 1, 1], [], []>} : vector<16x64xf32>, vector<64x64xf32>, vector<16x64xf32> -> vector<16x64xf32>
    %c376 = arith.constant 376 : index
    %c0_42 = arith.constant 0 : index
    %76 = vector.load %arg3[%c376, %c0_42] : memref<544x128xf32, #tpu.memory_space<vmem>>, vector<64x128xf32>
    %cst_43 = arith.constant dense<0.000000e+00> : vector<16x128xf32>
    %77 = tpu.matmul %75, %76, %cst_43 {dimension_numbers = #tpu.dot_dimension_numbers<[1], [0], [0], [1], [0, 0, 1, 1], [], []>} : vector<16x64xf32>, vector<64x128xf32>, vector<16x128xf32> -> vector<16x128xf32>
    %c272 = arith.constant 272 : index
    %c0_44 = arith.constant 0 : index
    %78 = vector.load %arg3[%c272, %c0_44] : memref<544x128xf32, #tpu.memory_space<vmem>>, vector<8x64xf32>
    %c0_45 = arith.constant 0 : index
    %c0_46 = arith.constant 0 : index
    %79 = vector.load %arg0[%c0_45, %c0_46] : memref<8x512xf32, #tpu.memory_space<vmem>>, vector<8x512xf32>
    %cst_47 = arith.constant dense<0.000000e+00> : vector<64x512xf32>
    %80 = tpu.matmul %78, %79, %cst_47 {dimension_numbers = #tpu.dot_dimension_numbers<[0], [0], [1], [1], [0, 1, 1, 1], [], []>} : vector<8x64xf32>, vector<8x512xf32>, vector<64x512xf32> -> vector<64x512xf32>
    %81 = vector.extract_strided_slice %38 {offsets = [0, 0], sizes = [64, 1], strides = [1, 1]} : vector<64x2xf32> to vector<64x1xf32>
    %82 = vector.shape_cast %81 : vector<64x1xf32> to vector<64x1xf32>
    %83 = vector.broadcast %82 : vector<64x1xf32> to vector<64x256xf32>
    %84 = vector.extract_strided_slice %38 {offsets = [0, 1], sizes = [64, 1], strides = [1, 1]} : vector<64x2xf32> to vector<64x1xf32>
    %85 = vector.shape_cast %84 : vector<64x1xf32> to vector<64x1xf32>
    %86 = vector.broadcast %85 : vector<64x1xf32> to vector<64x256xf32>
    %87 = tpu.concatenate %83, %86 in 1 : vector<64x256xf32>, vector<64x256xf32> -> vector<64x512xf32>
    %88 = arith.addf %80, %87 : vector<64x512xf32>
    %cst_48 = arith.constant dense<0.000000e+00> : vector<64x512xf32>
    %89 = tpu.matmul %4, %88, %cst_48 {dimension_numbers = #tpu.dot_dimension_numbers<[0], [0], [1], [1], [0, 1, 1, 1], [], []>} : vector<64x64xf32>, vector<64x512xf32>, vector<64x512xf32> -> vector<64x512xf32>
    %90 = vector.extract_strided_slice %77 {offsets = [0, 0], sizes = [8, 64], strides = [1, 1]} : vector<16x128xf32> to vector<8x64xf32>
    %91 = vector.extract_strided_slice %77 {offsets = [0, 64], sizes = [8, 64], strides = [1, 1]} : vector<16x128xf32> to vector<8x64xf32>
    %92 = vector.extract_strided_slice %89 {offsets = [0, 0], sizes = [64, 256], strides = [1, 1]} : vector<64x512xf32> to vector<64x256xf32>
    %cst_49 = arith.constant dense<0.000000e+00> : vector<8x256xf32>
    %93 = tpu.matmul %90, %92, %cst_49 {dimension_numbers = #tpu.dot_dimension_numbers<[1], [0], [0], [1], [0, 0, 1, 1], [], []>} : vector<8x64xf32>, vector<64x256xf32>, vector<8x256xf32> -> vector<8x256xf32>
    %cst_50 = arith.constant 1.250000e-01 : f32
    %94 = vector.broadcast %cst_50 : f32 to vector<8x256xf32>
    %95 = arith.mulf %93, %94 : vector<8x256xf32>
    %cst_51 = arith.constant dense<0xFF800000> : vector<256xf32>
    %96 = vector.multi_reduction <maximumf>, %95, %cst_51 [0] : vector<8x256xf32> to vector<256xf32>
    %97 = vector.shape_cast %96 : vector<256xf32> to vector<1x256xf32>
    %98 = vector.broadcast %97 : vector<1x256xf32> to vector<8x256xf32>
    %99 = arith.subf %95, %98 : vector<8x256xf32>
    %100 = math.exp %99 : vector<8x256xf32>
    %cst_52 = arith.constant dense<0.000000e+00> : vector<256xf32>
    %101 = vector.multi_reduction <add>, %100, %cst_52 [0] : vector<8x256xf32> to vector<256xf32>
    %102 = vector.shape_cast %101 : vector<256xf32> to vector<1x256xf32>
    %103 = tpu.reciprocal %102 {approx = true} : vector<1x256xf32> -> vector<1x256xf32>
    %104 = vector.broadcast %103 : vector<1x256xf32> to vector<8x256xf32>
    %105 = arith.mulf %100, %104 : vector<8x256xf32>
    %cst_53 = arith.constant dense<0.000000e+00> : vector<64x256xf32>
    %106 = tpu.matmul %91, %105, %cst_53 {dimension_numbers = #tpu.dot_dimension_numbers<[0], [0], [1], [1], [0, 1, 1, 1], [], []>} : vector<8x64xf32>, vector<8x256xf32>, vector<64x256xf32> -> vector<64x256xf32>
    %107 = vector.extract_strided_slice %77 {offsets = [8, 0], sizes = [8, 64], strides = [1, 1]} : vector<16x128xf32> to vector<8x64xf32>
    %108 = vector.extract_strided_slice %77 {offsets = [8, 64], sizes = [8, 64], strides = [1, 1]} : vector<16x128xf32> to vector<8x64xf32>
    %109 = vector.extract_strided_slice %89 {offsets = [0, 256], sizes = [64, 256], strides = [1, 1]} : vector<64x512xf32> to vector<64x256xf32>
    %cst_54 = arith.constant dense<0.000000e+00> : vector<8x256xf32>
    %110 = tpu.matmul %107, %109, %cst_54 {dimension_numbers = #tpu.dot_dimension_numbers<[1], [0], [0], [1], [0, 0, 1, 1], [], []>} : vector<8x64xf32>, vector<64x256xf32>, vector<8x256xf32> -> vector<8x256xf32>
    %cst_55 = arith.constant 1.250000e-01 : f32
    %111 = vector.broadcast %cst_55 : f32 to vector<8x256xf32>
    %112 = arith.mulf %110, %111 : vector<8x256xf32>
    %cst_56 = arith.constant dense<0xFF800000> : vector<256xf32>
    %113 = vector.multi_reduction <maximumf>, %112, %cst_56 [0] : vector<8x256xf32> to vector<256xf32>
    %114 = vector.shape_cast %113 : vector<256xf32> to vector<1x256xf32>
    %115 = vector.broadcast %114 : vector<1x256xf32> to vector<8x256xf32>
    %116 = arith.subf %112, %115 : vector<8x256xf32>
    %117 = math.exp %116 : vector<8x256xf32>
    %cst_57 = arith.constant dense<0.000000e+00> : vector<256xf32>
    %118 = vector.multi_reduction <add>, %117, %cst_57 [0] : vector<8x256xf32> to vector<256xf32>
    %119 = vector.shape_cast %118 : vector<256xf32> to vector<1x256xf32>
    %120 = tpu.reciprocal %119 {approx = true} : vector<1x256xf32> -> vector<1x256xf32>
    %121 = vector.broadcast %120 : vector<1x256xf32> to vector<8x256xf32>
    %122 = arith.mulf %117, %121 : vector<8x256xf32>
    %cst_58 = arith.constant dense<0.000000e+00> : vector<64x256xf32>
    %123 = tpu.matmul %108, %122, %cst_58 {dimension_numbers = #tpu.dot_dimension_numbers<[0], [0], [1], [1], [0, 1, 1, 1], [], []>} : vector<8x64xf32>, vector<8x256xf32>, vector<64x256xf32> -> vector<64x256xf32>
    %124 = tpu.concatenate %106, %123 in 1 : vector<64x256xf32>, vector<64x256xf32> -> vector<64x512xf32>
    %cst_59 = arith.constant dense<0.000000e+00> : vector<64x512xf32>
    %125 = tpu.matmul %9, %124, %cst_59 {dimension_numbers = #tpu.dot_dimension_numbers<[0], [0], [1], [1], [0, 1, 1, 1], [], []>} : vector<64x64xf32>, vector<64x512xf32>, vector<64x512xf32> -> vector<64x512xf32>
    %126 = arith.addf %88, %125 : vector<64x512xf32>
    %c536 = arith.constant 536 : index
    %c0_60 = arith.constant 0 : index
    %127 = vector.load %arg3[%c536, %c0_60] : memref<544x128xf32, #tpu.memory_space<vmem>>, vector<4x64xf32>
    %cst_61 = arith.constant dense<0.000000e+00> : vector<4x512xf32>
    %128 = tpu.matmul %127, %126, %cst_61 {dimension_numbers = #tpu.dot_dimension_numbers<[1], [0], [0], [1], [0, 0, 1, 1], [], []>} : vector<4x64xf32>, vector<64x512xf32>, vector<4x512xf32> -> vector<4x512xf32>
    %129 = vector.broadcast %15 : vector<4x1xf32> to vector<4x512xf32>
    %130 = arith.addf %128, %129 : vector<4x512xf32>
    %131 = vector.extract_strided_slice %130 {offsets = [0, 0], sizes = [4, 256], strides = [1, 1]} : vector<4x512xf32> to vector<4x256xf32>
    %c0_62 = arith.constant 0 : index
    %c0_63 = arith.constant 0 : index
    %c0_64 = arith.constant 0 : index
    %132 = vector.load %arg5[%c0_62, %c0_63, %c0_64] : memref<2x4x256xf32, #tpu.memory_space<vmem>>, vector<1x4x256xf32>
    %133 = vector.shape_cast %132 : vector<1x4x256xf32> to vector<4x256xf32>
    %134 = vector.shape_cast %131 : vector<4x256xf32> to vector<1x4x256xf32>
    tpu.vector_store %arg5[%c0_62, %c0_63, %c0_64], %134 {strides = array<i32>} : memref<2x4x256xf32, #tpu.memory_space<vmem>>, vector<1x4x256xf32>,
    %135 = vector.extract_strided_slice %130 {offsets = [0, 256], sizes = [4, 256], strides = [1, 1]} : vector<4x512xf32> to vector<4x256xf32>
    %c1 = arith.constant 1 : index
    %c0_65 = arith.constant 0 : index
    %c0_66 = arith.constant 0 : index
    %136 = vector.load %arg5[%c1, %c0_65, %c0_66] : memref<2x4x256xf32, #tpu.memory_space<vmem>>, vector<1x4x256xf32>
    %137 = vector.shape_cast %136 : vector<1x4x256xf32> to vector<4x256xf32>
    %138 = vector.shape_cast %135 : vector<4x256xf32> to vector<1x4x256xf32>
    tpu.vector_store %arg5[%c1, %c0_65, %c0_66], %138 {strides = array<i32>} : memref<2x4x256xf32, #tpu.memory_space<vmem>>, vector<1x4x256xf32>,
    %c0_67 = arith.constant 0 : index
    %c0_68 = arith.constant 0 : index
    %139 = vector.load %arg1[%c0_67, %c0_68] : memref<4x512xf32, #tpu.memory_space<vmem>>, vector<4x512xf32>
    %140 = arith.subf %130, %139 : vector<4x512xf32>
    %141 = arith.mulf %140, %140 : vector<4x512xf32>
    %142 = vector.shape_cast %141 : vector<4x512xf32> to vector<1x4x512xf32>
    %cst_69 = arith.constant dense<0.000000e+00> : vector<1xf32>
    %143 = vector.multi_reduction <add>, %142, %cst_69 [1, 2] : vector<1x4x512xf32> to vector<1xf32>
    %144 = vector.shape_cast %143 : vector<1xf32> to vector<1x1x1xf32>
    %145 = vector.extract %144[0, 0, 0] : f32 from vector<1x1x1xf32>
    %cst_70 = arith.constant 4.8828125E-4 : f32
    %146 = arith.mulf %145, %cst_70 : f32
    %c0_71 = arith.constant 0 : index
    %c0_72 = arith.constant 0 : index
    %147 = memref.load %arg6[%c0_71, %c0_72] : memref<1x1xf32, #tpu.memory_space<smem>>
    memref.store %146, %arg6[%c0_71, %c0_72] : memref<1x1xf32, #tpu.memory_space<smem>>
    return
  }
}

</mosaic_0001>

<llo_original>
// kernel: sdxl_adapter_forward.1
$region0: #{sdxl_adapter_forward.1}
  #allocation0 [shape = 'u32[]', space=smem, size = 0x4, offset = 0x4, fixed_abs, tag = 'smem constant byte address 0x4 - core index']
  #allocation1 [shape = 'u32[72,128]{1,0:T(1,128)}', space=vmem, size = 0x9000, scoped, tag = 'internal scratch']
  %s0 = inlined_call_operand.vmem [shape: f32[8,512], index: 0, kind: input, shape index: {}]
  %s1 = inlined_call_operand.vmem [shape: f32[4,512], index: 1, kind: input, shape index: {}]
  %s2 = inlined_call_operand.vmem [shape: f32[16,64], index: 2, kind: input, shape index: {}]
  %s3 = inlined_call_operand.vmem [shape: f32[544,128], index: 3, kind: input, shape index: {}]
  %s4 = inlined_call_operand.vmem [shape: f32[216,2], index: 4, kind: input, shape index: {}]
  %s5 = inlined_call_operand.vmem [shape: f32[2,4,256], index: 5, kind: output, shape index: {0}]
  %s6 = inlined_call_operand.hbm [shape: f32[1,1], index: 6, kind: output, shape index: {1}]
  %7 = xla_tuple %s5, %s6
  %s8 = sld [smem:[#allocation0]]
  $region38: #{sdxl_adapter_forward.1} parent=0
    _
  %s10 = ssub.s32 1, %s8
  %s11 = scalar_select 0, %s10, %s8
  $region1: #{sdxl_adapter_forward.1} parent=0
    #allocation2 [shape = 'u8[512]{0}', space=smem, size = 0x200, scoped, tag = 'output window, operand 1, single buffered']
    #allocation3 [shape = 's32[1]{0}', space=sflag, size = 0x4, scoped, tag = 'scoped memory for sdxl_adapter_forward.1']
    %12 = vsyncpa [#allocation3], 0
    // Predicated region
    $region2: #{sdxl_adapter_forward.1} parent=1 // pred_check
      _
    $region3: #{sdxl_adapter_forward.1} parent=1 // pred_check_branch
      %14 = sbr.rel (0) target = $region5
    $region4: #{sdxl_adapter_forward.1} parent=1 // pred_region
      _
    $region5: #{sdxl_adapter_forward.1} parent=1 // pred_fallthru
      _
    // Predicated region
    $region6: #{sdxl_adapter_forward.1} parent=1 // pred_check
      _
    $region7: #{sdxl_adapter_forward.1} parent=1 // pred_check_branch
      %16 = sbr.rel (0) target = $region9
    $region8: #{sdxl_adapter_forward.1} parent=1 // pred_region
      _
    $region9: #{sdxl_adapter_forward.1} parent=1 // pred_fallthru
      _
    // Predicated region
    $region10: #{sdxl_adapter_forward.1} parent=1 // pred_check
      _
    $region11: #{sdxl_adapter_forward.1} parent=1 // pred_check_branch
      %18 = sbr.rel (0) target = $region13
    $region12: #{sdxl_adapter_forward.1} parent=1 // pred_region
      _
    $region13: #{sdxl_adapter_forward.1} parent=1 // pred_fallthru
      _
    // Predicated region
    $region14: #{sdxl_adapter_forward.1} parent=1 // pred_check
      _
    $region15: #{sdxl_adapter_forward.1} parent=1 // pred_check_branch
      %20 = sbr.rel (0) target = $region17
    $region16: #{sdxl_adapter_forward.1} parent=1 // pred_region
      _
    $region17: #{sdxl_adapter_forward.1} parent=1 // pred_fallthru
      _
    // Predicated region
    $region18: #{sdxl_adapter_forward.1} parent=1 // pred_check
      _
    $region19: #{sdxl_adapter_forward.1} parent=1 // pred_check_branch
      %22 = sbr.rel (0) target = $region21
    $region20: #{sdxl_adapter_forward.1} parent=1 // pred_region
      _
    $region21: #{sdxl_adapter_forward.1} parent=1 // pred_fallthru
      _
    %v23 = vld [vmem:[%s3 + $0x118] sm:$0xff]
    %v24 = vld [vmem:[%s3 + $0x120] sm:$0xff]
    %v25 = vld [vmem:[%s3 + $0x128] sm:$0xff]
    %v26 = vld [vmem:[%s3 + $0x130] sm:$0xff]
    %v27 = vld [vmem:[%s3 + $0x138] sm:$0xff]
    %v28 = vld [vmem:[%s3 + $0x140] sm:$0xff]
    %v29 = vld [vmem:[%s3 + $0x148] sm:$0xff]
    %v30 = vld [vmem:[%s3 + $0x150] sm:$0xff]
    %v31 = vld [vmem:[%s3 + $0x158] sm:$0xff]
    %v32 = vld [vmem:[%s3 + $0x160] sm:$0xff]
    %v33 = vld [vmem:[%s3 + $0x168] sm:$0xff]
    %v34 = vld [vmem:[%s3 + $0x170] sm:$0xff]
    %35 = vxpose.xlu0.b32.start [1/16] %v31, 128
    %36 = vxpose.xlu0.b32.cont [2/16] %v32, 128
    %37 = vxpose.xlu0.b32.cont [3/16] 0.0, 128
    %38 = vxpose.xlu0.b32.cont [4/16] 0.0, 128
    %39 = vxpose.xlu0.b32.cont [5/16] 0.0, 128
    %40 = vxpose.xlu0.b32.cont [6/16] 0.0, 128
    %41 = vxpose.xlu0.b32.cont [7/16] 0.0, 128
    %42 = vxpose.xlu0.b32.cont [8/16] 0.0, 128
    %43 = vxpose.xlu0.b32.cont [9/16] 0.0, 128
    %44 = vxpose.xlu0.b32.cont [10/16] 0.0, 128
    %45 = vxpose.xlu0.b32.cont [11/16] 0.0, 128
    %46 = vxpose.xlu0.b32.cont [12/16] 0.0, 128
    %47 = vxpose.xlu0.b32.cont [13/16] 0.0, 128
    %48 = vxpose.xlu0.b32.cont [14/16] 0.0, 128
    %49 = vxpose.xlu0.b32.cont [15/16] 0.0, 128
    %50 = vxpose.xlu0.b32.end [16/16] 0.0, 128
    %v51 = vpop.trf.xlu0
    %v52 = vpop.trf.xlu0
    %v53 = vpop.trf.xlu0
    %v54 = vpop.trf.xlu0
    %v55 = vpop.trf.xlu0
    %v56 = vpop.trf.xlu0
    %v57 = vpop.trf.xlu0
    %v58 = vpop.trf.xlu0
    %v59 = vpop.trf.xlu0
    %v60 = vpop.trf.xlu0
    %v61 = vpop.trf.xlu0
    %v62 = vpop.trf.xlu0
    %v63 = vpop.trf.xlu0
    %v64 = vpop.trf.xlu0
    %v65 = vpop.trf.xlu0
    %v66 = vpop.trf.xlu0
    %vm67 = vcmask 130048
    %v69 = vsel %vm67, %v51, 0
    %v72 = vsel %vm67, %v52, 0
    %v75 = vsel %vm67, %v53, 0
    %v78 = vsel %vm67, %v54, 0
    %v81 = vsel %vm67, %v55, 0
    %v84 = vsel %vm67, %v56, 0
    %v87 = vsel %vm67, %v57, 0
    %v90 = vsel %vm67, %v58, 0
    %92 = vmatpush.msra.mxu0 0.0
    %93 = vmatpush.msra.mxu0 0.0
    %94 = vmatpush.msra.mxu0 0.0
    %95 = vmatpush.msra.mxu0 0.0
    %96 = vmatpush.msra.mxu0 0.0
    %97 = vmatpush.msra.mxu0 0.0
    %98 = vmatpush.msra.mxu0 0.0
    %99 = vmatpush.msra.mxu0 0.0
    %100 = vmatpush.msra.mxu0 0.0
    %101 = vmatpush.msra.mxu0 0.0
    %102 = vmatpush.msra.mxu0 0.0
    %103 = vmatpush.msra.mxu0 0.0
    %104 = vmatpush.msra.mxu0 0.0
    %105 = vmatpush.msra.mxu0 0.0
    %106 = vmatpush.msra.mxu0 %v34
    %107 = vmatpush.msra.mxu0 %v33
    %108 = vmatmul.f32.gmra.mxu0 %v69
    %v109 = vpop.f32.mrf.mxu0
    %v110 = vadd.f32 0.0, %v109
    %111 = vmatmul.f32.gmra.mxu0 %v72
    %v112 = vpop.f32.mrf.mxu0
    %v113 = vadd.f32 0.0, %v112
    %114 = vmatmul.f32.gmra.mxu0 %v75
    %v115 = vpop.f32.mrf.mxu0
    %v116 = vadd.f32 0.0, %v115
    %117 = vmatmul.f32.gmra.mxu0 %v78
    %v118 = vpop.f32.mrf.mxu0
    %v119 = vadd.f32 0.0, %v118
    %120 = vmatmul.f32.gmra.mxu0 %v81
    %v121 = vpop.f32.mrf.mxu0
    %v122 = vadd.f32 0.0, %v121
    %123 = vmatmul.f32.gmra.mxu0 %v84
    %v124 = vpop.f32.mrf.mxu0
    %v125 = vadd.f32 0.0, %v124
    %126 = vmatmul.f32.gmra.mxu0 %v87
    %v127 = vpop.f32.mrf.mxu0
    %v128 = vadd.f32 0.0, %v127
    %129 = vmatmul.f32.gmra.mxu0 %v90
    %v130 = vpop.f32.mrf.mxu0
    %v131 = vadd.f32 0.0, %v130
    %132 = vdwg.mxu0
    %v133 = vadd.f32 %v23, %v110
    %v134 = vadd.f32 %v24, %v113
    %v135 = vadd.f32 %v25, %v116
    %v136 = vadd.f32 %v26, %v119
    %v137 = vadd.f32 %v27, %v122
    %v138 = vadd.f32 %v28, %v125
    %v139 = vadd.f32 %v29, %v128
    %v140 = vadd.f32 %v30, %v131
    %v141 = vld [vmem:[%s3 + $0x1b8] sm:$0xff]
    %v142 = vld [vmem:[%s3 + $0x1c0] sm:$0xff]
    %v143 = vld [vmem:[%s3 + $0x1c8] sm:$0xff]
    %v144 = vld [vmem:[%s3 + $0x1d0] sm:$0xff]
    %v145 = vld [vmem:[%s3 + $0x1d8] sm:$0xff]
    %v146 = vld [vmem:[%s3 + $0x1e0] sm:$0xff]
    %v147 = vld [vmem:[%s3 + $0x1e8] sm:$0xff]
    %v148 = vld [vmem:[%s3 + $0x1f0] sm:$0xff]
    %v149 = vld [vmem:[%s3 + $0x1f8] sm:$0xff]
    %v150 = vld [vmem:[%s3 + $0x200] sm:$0xff]
    %v151 = vld [vmem:[%s3 + $0x208] sm:$0xff]
    %v152 = vld [vmem:[%s3 + $0x210] sm:$0xff]
    %153 = vxpose.xlu0.b32.start [1/16] %v149, 128
    %154 = vxpose.xlu0.b32.cont [2/16] %v150, 128
    %155 = vxpose.xlu0.b32.cont [3/16] 0.0, 128
    %156 = vxpose.xlu0.b32.cont [4/16] 0.0, 128
    %157 = vxpose.xlu0.b32.cont [5/16] 0.0, 128
    %158 = vxpose.xlu0.b32.cont [6/16] 0.0, 128
    %159 = vxpose.xlu0.b32.cont [7/16] 0.0, 128
    %160 = vxpose.xlu0.b32.cont [8/16] 0.0, 128
    %161 = vxpose.xlu0.b32.cont [9/16] 0.0, 128
    %162 = vxpose.xlu0.b32.cont [10/16] 0.0, 128
    %163 = vxpose.xlu0.b32.cont [11/16] 0.0, 128
    %164 = vxpose.xlu0.b32.cont [12/16] 0.0, 128
    %165 = vxpose.xlu0.b32.cont [13/16] 0.0, 128
    %166 = vxpose.xlu0.b32.cont [14/16] 0.0, 128
    %167 = vxpose.xlu0.b32.cont [15/16] 0.0, 128
    %168 = vxpose.xlu0.b32.end [16/16] 0.0, 128
    %v169 = vpop.trf.xlu0
    %v170 = vpop.trf.xlu0
    %v171 = vpop.trf.xlu0
    %v172 = vpop.trf.xlu0
    %v173 = vpop.trf.xlu0
    %v174 = vpop.trf.xlu0
    %v175 = vpop.trf.xlu0
    %v176 = vpop.trf.xlu0
    %v177 = vpop.trf.xlu0
    %v178 = vpop.trf.xlu0
    %v179 = vpop.trf.xlu0
    %v180 = vpop.trf.xlu0
    %v181 = vpop.trf.xlu0
    %v182 = vpop.trf.xlu0
    %v183 = vpop.trf.xlu0
    %v184 = vpop.trf.xlu0
    %v186 = vsel %vm67, %v169, 0
    %v189 = vsel %vm67, %v170, 0
    %v192 = vsel %vm67, %v171, 0
    %v195 = vsel %vm67, %v172, 0
    %v198 = vsel %vm67, %v173, 0
    %v201 = vsel %vm67, %v174, 0
    %v204 = vsel %vm67, %v175, 0
    %v207 = vsel %vm67, %v176, 0
    %209 = vmatpush.msra.mxu0 0.0
    %210 = vmatpush.msra.mxu0 0.0
    %211 = vmatpush.msra.mxu0 0.0
    %212 = vmatpush.msra.mxu0 0.0
    %213 = vmatpush.msra.mxu0 0.0
    %214 = vmatpush.msra.mxu0 0.0
    %215 = vmatpush.msra.mxu0 0.0
    %216 = vmatpush.msra.mxu0 0.0
    %217 = vmatpush.msra.mxu0 0.0
    %218 = vmatpush.msra.mxu0 0.0
    %219 = vmatpush.msra.mxu0 0.0
    %220 = vmatpush.msra.mxu0 0.0
    %221 = vmatpush.msra.mxu0 0.0
    %222 = vmatpush.msra.mxu0 0.0
    %223 = vmatpush.msra.mxu0 %v152
    %224 = vmatpush.msra.mxu0 %v151
    %225 = vmatmul.f32.gmra.mxu0 %v186
    %v226 = vpop.f32.mrf.mxu0
    %v227 = vadd.f32 0.0, %v226
    %228 = vmatmul.f32.gmra.mxu0 %v189
    %v229 = vpop.f32.mrf.mxu0
    %v230 = vadd.f32 0.0, %v229
    %231 = vmatmul.f32.gmra.mxu0 %v192
    %v232 = vpop.f32.mrf.mxu0
    %v233 = vadd.f32 0.0, %v232
    %234 = vmatmul.f32.gmra.mxu0 %v195
    %v235 = vpop.f32.mrf.mxu0
    %v236 = vadd.f32 0.0, %v235
    %237 = vmatmul.f32.gmra.mxu0 %v198
    %v238 = vpop.f32.mrf.mxu0
    %v239 = vadd.f32 0.0, %v238
    %240 = vmatmul.f32.gmra.mxu0 %v201
    %v241 = vpop.f32.mrf.mxu0
    %v242 = vadd.f32 0.0, %v241
    %243 = vmatmul.f32.gmra.mxu0 %v204
    %v244 = vpop.f32.mrf.mxu0
    %v245 = vadd.f32 0.0, %v244
    %246 = vmatmul.f32.gmra.mxu0 %v207
    %v247 = vpop.f32.mrf.mxu0
    %v248 = vadd.f32 0.0, %v247
    %249 = vdwg.mxu0
    %v250 = vadd.f32 %v141, %v227
    %v251 = vadd.f32 %v142, %v230
    %v252 = vadd.f32 %v143, %v233
    %v253 = vadd.f32 %v144, %v236
    %v254 = vadd.f32 %v145, %v239
    %v255 = vadd.f32 %v146, %v242
    %v256 = vadd.f32 %v147, %v245
    %v257 = vadd.f32 %v148, %v248
    %v258 = vld [vmem:[%s4] sm:$0x1]
    %v259 = vld [vmem:[%s4 + $0x8] sm:$0xff]
    %v260 = vld [vmem:[%s4 + $0x10] sm:$0xff]
    %v261 = vld [vmem:[%s4 + $0x18] sm:$0xff]
    %v262 = vld [vmem:[%s4 + $0x20] sm:$0xff]
    %v263 = vld [vmem:[%s4 + $0x28] sm:$0xff]
    %v264 = vld [vmem:[%s4 + $0x30] sm:$0xff]
    %v265 = vld [vmem:[%s4 + $0x38] sm:$0xff]
    %v266 = vld [vmem:[%s4 + $0x40] sm:$0xff]
    %v267 = vld [vmem:[%s4 + $0x48] sm:$0xff]
    %v268 = vld [vmem:[%s4 + $0x50] sm:$0xff]
    %v269 = vld [vmem:[%s4 + $0x58] sm:$0xff]
    %v270 = vld [vmem:[%s4 + $0x60] sm:$0xff]
    %v271 = vld [vmem:[%s4 + $0x68] sm:$0xff]
    %v272 = vld [vmem:[%s4 + $0x70] sm:$0xff]
    %v273 = vld [vmem:[%s4 + $0x78] sm:$0xff]
    %v274 = vld [vmem:[%s4 + $0x80] sm:$0xff]
    %v275 = vld [vmem:[%s4 + $0x88] sm:$0xff]
    %v276 = vld [vmem:[%s4 + $0x90] sm:$0xff]
    %v277 = vld [vmem:[%s4 + $0x98] sm:$0xff]
    %v278 = vld [vmem:[%s4 + $0xa0] sm:$0xff]
    %v279 = vld [vmem:[%s4 + $0xa8] sm:$0xff]
    %v280 = vld [vmem:[%s4 + $0xb0] sm:$0xf]
    %v281 = vld [vmem:[%s4 + $0xb8] sm:$0xff]
    %v282 = vld [vmem:[%s4 + $0xc0] sm:$0xff]
    %v283 = vld [vmem:[%s4 + $0xc8] sm:$0xff]
    %v284 = vld [vmem:[%s4 + $0xd0] sm:$0xff]
    %286 = vset.pattern.permute.xlu0 0
    %287 = vperm.xlu0 %286, %v281
    %v288 = vpop.permute.xlu0 %287
    %291 = vset.pattern.permute.xlu0 0
    %292 = vperm.xlu0 %291, %v282
    %v293 = vpop.permute.xlu0 %292
    %296 = vset.pattern.permute.xlu0 0
    %297 = vperm.xlu0 %296, %v283
    %v298 = vpop.permute.xlu0 %297
    %301 = vset.pattern.permute.xlu0 0
    %302 = vperm.xlu0 %301, %v284
    %v303 = vpop.permute.xlu0 %302
    %v305 = vperm.slane %v258, 0
    %v306 = vmul.f32 %v288, %v305
    %v307 = vmul.f32 %v293, %v305
    %v308 = vmul.f32 %v298, %v305
    %v309 = vmul.f32 %v303, %v305
    %v310 = vld [vmem:[%s3 + $0xd0] sm:$0xff]
    %v311 = vld [vmem:[%s3 + $0xd8] sm:$0xff]
    %v312 = vld [vmem:[%s3 + $0xe0] sm:$0xff]
    %v313 = vld [vmem:[%s3 + $0xe8] sm:$0xff]
    %314 = vxpose.xlu0.b32.start [1/16] %v310, 128
    %315 = vxpose.xlu0.b32.cont [2/16] %v311, 128
    %316 = vxpose.xlu0.b32.cont [3/16] %v312, 128
    %317 = vxpose.xlu0.b32.cont [4/16] %v313, 128
    %318 = vxpose.xlu0.b32.cont [5/16] 0.0, 128
    %319 = vxpose.xlu0.b32.cont [6/16] 0.0, 128
    %320 = vxpose.xlu0.b32.cont [7/16] 0.0, 128
    %321 = vxpose.xlu0.b32.cont [8/16] 0.0, 128
    %322 = vxpose.xlu0.b32.cont [9/16] 0.0, 128
    %323 = vxpose.xlu0.b32.cont [10/16] 0.0, 128
    %324 = vxpose.xlu0.b32.cont [11/16] 0.0, 128
    %325 = vxpose.xlu0.b32.cont [12/16] 0.0, 128
    %326 = vxpose.xlu0.b32.cont [13/16] 0.0, 128
    %327 = vxpose.xlu0.b32.cont [14/16] 0.0, 128
    %328 = vxpose.xlu0.b32.cont [15/16] 0.0, 128
    %329 = vxpose.xlu0.b32.end [16/16] 0.0, 128
    %v330 = vpop.trf.xlu0
    %v331 = vpop.trf.xlu0
    %v332 = vpop.trf.xlu0
    %v333 = vpop.trf.xlu0
    %v334 = vpop.trf.xlu0
    %v335 = vpop.trf.xlu0
    %v336 = vpop.trf.xlu0
    %v337 = vpop.trf.xlu0
    %v338 = vpop.trf.xlu0
    %v339 = vpop.trf.xlu0
    %v340 = vpop.trf.xlu0
    %v341 = vpop.trf.xlu0
    %v342 = vpop.trf.xlu0
    %v343 = vpop.trf.xlu0
    %v344 = vpop.trf.xlu0
    %v345 = vpop.trf.xlu0
    %vm346 = vcmask 261120
    %v348 = vsel %vm346, %v330, 0
    %v351 = vsel %vm346, %v331, 0
    %v354 = vsel %vm346, %v332, 0
    %v357 = vsel %vm346, %v333, 0
    %359 = vmatpush.msra.mxu0 0.0
    %360 = vmatpush.msra.mxu0 0.0
    %361 = vmatpush.msra.mxu0 0.0
    %362 = vmatpush.msra.mxu0 0.0
    %363 = vmatpush.msra.mxu0 0.0
    %364 = vmatpush.msra.mxu0 0.0
    %365 = vmatpush.msra.mxu0 0.0
    %366 = vmatpush.msra.mxu0 0.0
    %367 = vmatpush.msra.mxu0 0.0
    %368 = vmatpush.msra.mxu0 0.0
    %369 = vmatpush.msra.mxu0 0.0
    %370 = vmatpush.msra.mxu0 0.0
    %371 = vmatpush.msra.mxu0 %v263
    %372 = vmatpush.msra.mxu0 %v262
    %373 = vmatpush.msra.mxu0 %v261
    %374 = vmatpush.msra.mxu0 %v260
    %375 = vmatmul.f32.gmra.mxu0 %v348
    %v376 = vpop.f32.mrf.mxu0
    %v377 = vadd.f32 0.0, %v376
    %378 = vmatmul.f32.gmra.mxu0 %v351
    %v379 = vpop.f32.mrf.mxu0
    %v380 = vadd.f32 0.0, %v379
    %381 = vmatmul.f32.gmra.mxu0 %v354
    %v382 = vpop.f32.mrf.mxu0
    %v383 = vadd.f32 0.0, %v382
    %384 = vmatmul.f32.gmra.mxu0 %v357
    %v385 = vpop.f32.mrf.mxu0
    %v386 = vadd.f32 0.0, %v385
    %387 = vdwg.mxu0
    %v388 = vld [vmem:[%s3 + $0x88] sm:$0xff]
    %v389 = vld [vmem:[%s3 + $0x90] sm:$0xff]
    %v390 = vld [vmem:[%s3 + $0x98] sm:$0xff]
    %v391 = vld [vmem:[%s3 + $0xa0] sm:$0xff]
    %v392 = vand.u32 2147483647, %v306
    %vm393 = vcmp.le.f32.partialorder %v392, 0.7853982
    %vm394 = vcmp.lt.s32.totalorder %v306, 0
    %v395 = vand.u32 %v306, 2139095040
    %v396 = vshrl.u32 %v395, 23
    %v397 = vsub.s32 %v396, 127
    %v398 = vand.u32 2147483647, %v306
    %v399 = vand.u32 %v398, 8388607
    %v400 = vor.u32 %v399, 8388608
    %v401 = vsub.s32 0, %v400
    %v402 = vadd.s32 %v397, 1
    %vm403 = vcmp.gt.s32.totalorder %v402, 0
    %v404 = vsel %vm403, %v402, 0
    %v405 = vshrl.u32 %v404, 5
    %v406 = vand.u32 %v404, 31
    %v407 = vsub.s32 32, %v406
    %v408 = vshrl.u32 683565275, %v407
    %v409 = vshll.u32 683565275, %v406
    %v410 = vshrl.u32 2475754826, %v407
    %v411 = vor.u32 %v409, %v410
    %v412 = vshll.u32 2475754826, %v406
    %v413 = vshrl.u32 2131351028, %v407
    %v414 = vor.u32 %v412, %v413
    %v415 = vshll.u32 2131351028, %v406
    %v416 = vshrl.u32 2102212464, %v407
    %v417 = vor.u32 %v415, %v416
    %v418 = vshll.u32 2102212464, %v406
    %v419 = vshrl.u32 920167782, %v407
    %v420 = vor.u32 %v418, %v419
    %v421 = vshll.u32 920167782, %v406
    %v422 = vshrl.u32 1326507024, %v407
    %v423 = vor.u32 %v421, %v422
    %vm424 = vcmp.lt.s32.totalorder %v405, 1
    %vm425 = vcmp.lt.s32.totalorder %v405, 2
    %vm426 = vcmp.lt.s32.totalorder %v405, 3
    %vm427 = vcmp.lt.s32.totalorder %v405, 4
    %v428 = vsel %vm424, %v408, %v411
    %v429 = vsel %vm427, %v417, 2102212464
    %v430 = vsel %vm426, %v414, %v429
    %v431 = vsel %vm425, %v428, %v430
    %v432 = vsel %vm424, %v411, %v414
    %v433 = vsel %vm427, %v420, 920167782
    %v434 = vsel %vm426, %v417, %v433
    %v435 = vsel %vm425, %v432, %v434
    %v436 = vsel %vm424, %v414, %v417
    %v437 = vsel %vm427, %v423, 1326507024
    %v438 = vsel %vm426, %v420, %v437
    %v439 = vsel %vm425, %v436, %v438
    %v440 = vshll.u32 %v400, 8
    %v441 = vand.u32 %v440, 65535
    %v442 = vshrl.u32 %v440, 16
    %v443 = vand.u32 %v439, 65535
    %v444 = vshrl.u32 %v439, 16
    %v445 = vmul.u32 %v441, %v443
    %v446 = vmul.u32 %v441, %v444
    %v447 = vmul.u32 %v442, %v443
    %v448 = vmul.u32 %v442, %v444
    %v449 = vshll.u32 %v446, 16
    %v450 = vshrl.u32 %v446, 16
    %v451 = vshll.u32 %v447, 16
    %v452 = vshrl.u32 %v447, 16
    %vm453 = vc.u32 %v445, %v449
    %v454 = vsel %vm453, 1, 0
    %v455 = vadd.s32 %v445, %v449
    %v456 = vadd.s32 %v448, %v454
    %vm457 = vc.u32 %v455, %v451
    %v458 = vsel %vm457, 1, 0
    %v459 = vadd.s32 %v455, %v451
    %v460 = vadd.s32 %v456, %v458
    %v461 = vadd.s32 %v460, %v450
    %v462 = vadd.s32 %v461, %v452
    %v463 = vand.u32 %v440, 65535
    %v464 = vshrl.u32 %v440, 16
    %v465 = vand.u32 %v435, 65535
    %v466 = vshrl.u32 %v435, 16
    %v467 = vmul.u32 %v463, %v465
    %v468 = vmul.u32 %v463, %v466
    %v469 = vmul.u32 %v464, %v465
    %v470 = vmul.u32 %v464, %v466
    %v471 = vshll.u32 %v468, 16
    %v472 = vshrl.u32 %v468, 16
    %v473 = vshll.u32 %v469, 16
    %v474 = vshrl.u32 %v469, 16
    %vm475 = vc.u32 %v467, %v471
    %v476 = vsel %vm475, 1, 0
    %v477 = vadd.s32 %v467, %v471
    %v478 = vadd.s32 %v470, %v476
    %vm479 = vc.u32 %v477, %v473
    %v480 = vsel %vm479, 1, 0
    %v481 = vadd.s32 %v477, %v473
    %v482 = vadd.s32 %v478, %v480
    %v483 = vadd.s32 %v482, %v472
    %v484 = vadd.s32 %v483, %v474
    %v485 = vmul.u32 %v440, %v431
    %v486 = vadd.s32 %v462, %v481
    %vm487 = vc.u32 %v462, %v481
    %v488 = vadd.s32 %v484, 1
    %v489 = vsel %vm487, %v488, %v484
    %v490 = vadd.s32 %v485, %v489
    %v491 = vadd.s32 %v490, 536870912
    %v492 = vshrl.u32 %v491, 30
    %v493 = vshll.u32 %v492, 30
    %v494 = vsub.s32 %v490, %v493
    %vm495 = vcmp.lt.s32.totalorder %v494, 0
    %v496 = vsub.s32 0, %v494
    %v497 = vsel %vm495, %v496, %v494
    %v498 = vclz %v497
    %v499 = vsub.s32 %v498, 2
    %vm500 = vcmp.gt.s32.totalorder 0, %v499
    %v501 = vsel %vm500, 0, %v499
    %v502 = vsub.s32 32, %v501
    %v503 = vshll.u32 %v494, %v501
    %v504 = vshrl.u32 %v486, %v502
    %v505 = vor.u32 %v503, %v504
    %v506 = vsub.s32 4294967266, %v501
    %v507 = vadd.s32 %v506, 127
    %v508 = vshll.u32 %v507, 23
    %v509 = vor.u32 4788187, %v508
    %v510 = vand.u32 2147483647, %v509
    %v512 = vcvt.s32.f32 %v505
    %v513 = vmul.f32 %v512, %v510
    %v514 = vxor.u32 %v513, 2147483648
    %v515 = vsel %vm394, %v514, %v513
    %v516 = vsub.s32 4, %v492
    %v517 = vsel %vm394, %v516, %v492
    %v518 = vsel %vm393, %v306, %v515
    %v519 = vsel %vm393, 0, %v517
    %v520 = vmul.f32 %v518, %v518
    %v521 = vmul.f32 %v520, -0.001358992
    %v522 = vadd.f32 %v521, 0.041655596
    %v523 = vmul.f32 %v520, %v522
    %v524 = vadd.f32 %v523, -0.4999988
    %v525 = vmul.f32 %v520, %v524
    %v526 = vadd.f32 1.0, %v525
    %v527 = vmul.f32 %v518, %v518
    %v528 = vmul.f32 %v527, -0.00019511016
    %v529 = vadd.f32 %v528, 0.008332121
    %v530 = vmul.f32 %v527, %v529
    %v531 = vadd.f32 %v530, -0.16666654
    %v532 = vmul.f32 %v527, %v531
    %v533 = vadd.f32 %v532, 1.0
    %v534 = vmul.f32 %v533, %v518
    %vm535 = vweird.f32 %v306
    %v536 = vadd.s32 %v519, 3
    %v537 = vand.u32 %v536, 3
    %vm538 = vcmp.lt.s32.totalorder %v537, 2
    %vm539 = vcmp.eq.s32.totalorder %v537, 0
    %v540 = vxor.u32 %v534, 2147483648
    %v541 = vsel %vm539, %v526, %v540
    %vm542 = vcmp.eq.s32.totalorder %v537, 2
    %v543 = vxor.u32 %v526, 2147483648
    %v544 = vsel %vm542, %v543, %v534
    %v545 = vsel %vm538, %v541, %v544
    %v546 = vsel %vm535, nan, %v545
    %v547 = vand.u32 2147483647, %v307
    %vm548 = vcmp.le.f32.partialorder %v547, 0.7853982
    %vm549 = vcmp.lt.s32.totalorder %v307, 0
    %v550 = vand.u32 %v307, 2139095040
    %v551 = vshrl.u32 %v550, 23
    %v552 = vsub.s32 %v551, 127
    %v553 = vand.u32 2147483647, %v307
    %v554 = vand.u32 %v553, 8388607
    %v555 = vor.u32 %v554, 8388608
    %v556 = vsub.s32 0, %v555
    %v557 = vadd.s32 %v552, 1
    %vm558 = vcmp.gt.s32.totalorder %v557, 0
    %v559 = vsel %vm558, %v557, 0
    %v560 = vshrl.u32 %v559, 5
    %v561 = vand.u32 %v559, 31
    %v562 = vsub.s32 32, %v561
    %v563 = vshrl.u32 683565275, %v562
    %v564 = vshll.u32 683565275, %v561
    %v565 = vshrl.u32 2475754826, %v562
    %v566 = vor.u32 %v564, %v565
    %v567 = vshll.u32 2475754826, %v561
    %v568 = vshrl.u32 2131351028, %v562
    %v569 = vor.u32 %v567, %v568
    %v570 = vshll.u32 2131351028, %v561
    %v571 = vshrl.u32 2102212464, %v562
    %v572 = vor.u32 %v570, %v571
    %v573 = vshll.u32 2102212464, %v561
    %v574 = vshrl.u32 920167782, %v562
    %v575 = vor.u32 %v573, %v574
    %v576 = vshll.u32 920167782, %v561
    %v577 = vshrl.u32 1326507024, %v562
    %v578 = vor.u32 %v576, %v577
    %vm579 = vcmp.lt.s32.totalorder %v560, 1
    %vm580 = vcmp.lt.s32.totalorder %v560, 2
    %vm581 = vcmp.lt.s32.totalorder %v560, 3
    %vm582 = vcmp.lt.s32.totalorder %v560, 4
    %v583 = vsel %vm579, %v563, %v566
    %v584 = vsel %vm582, %v572, 2102212464
    %v585 = vsel %vm581, %v569, %v584
    %v586 = vsel %vm580, %v583, %v585
    %v587 = vsel %vm579, %v566, %v569
    %v588 = vsel %vm582, %v575, 920167782
    %v589 = vsel %vm581, %v572, %v588
    %v590 = vsel %vm580, %v587, %v589
    %v591 = vsel %vm579, %v569, %v572
    %v592 = vsel %vm582, %v578, 1326507024
    %v593 = vsel %vm581, %v575, %v592
    %v594 = vsel %vm580, %v591, %v593
    %v595 = vshll.u32 %v555, 8
    %v596 = vand.u32 %v595, 65535
    %v597 = vshrl.u32 %v595, 16
    %v598 = vand.u32 %v594, 65535
    %v599 = vshrl.u32 %v594, 16
    %v600 = vmul.u32 %v596, %v598
    %v601 = vmul.u32 %v596, %v599
    %v602 = vmul.u32 %v597, %v598
    %v603 = vmul.u32 %v597, %v599
    %v604 = vshll.u32 %v601, 16
    %v605 = vshrl.u32 %v601, 16
    %v606 = vshll.u32 %v602, 16
    %v607 = vshrl.u32 %v602, 16
    %vm608 = vc.u32 %v600, %v604
    %v609 = vsel %vm608, 1, 0
    %v610 = vadd.s32 %v600, %v604
    %v611 = vadd.s32 %v603, %v609
    %vm612 = vc.u32 %v610, %v606
    %v613 = vsel %vm612, 1, 0
    %v614 = vadd.s32 %v610, %v606
    %v615 = vadd.s32 %v611, %v613
    %v616 = vadd.s32 %v615, %v605
    %v617 = vadd.s32 %v616, %v607
    %v618 = vand.u32 %v595, 65535
    %v619 = vshrl.u32 %v595, 16
    %v620 = vand.u32 %v590, 65535
    %v621 = vshrl.u32 %v590, 16
    %v622 = vmul.u32 %v618, %v620
    %v623 = vmul.u32 %v618, %v621
    %v624 = vmul.u32 %v619, %v620
    %v625 = vmul.u32 %v619, %v621
    %v626 = vshll.u32 %v623, 16
    %v627 = vshrl.u32 %v623, 16
    %v628 = vshll.u32 %v624, 16
    %v629 = vshrl.u32 %v624, 16
    %vm630 = vc.u32 %v622, %v626
    %v631 = vsel %vm630, 1, 0
    %v632 = vadd.s32 %v622, %v626
    %v633 = vadd.s32 %v625, %v631
    %vm634 = vc.u32 %v632, %v628
    %v635 = vsel %vm634, 1, 0
    %v636 = vadd.s32 %v632, %v628
    %v637 = vadd.s32 %v633, %v635
    %v638 = vadd.s32 %v637, %v627
    %v639 = vadd.s32 %v638, %v629
    %v640 = vmul.u32 %v595, %v586
    %v641 = vadd.s32 %v617, %v636
    %vm642 = vc.u32 %v617, %v636
    %v643 = vadd.s32 %v639, 1
    %v644 = vsel %vm642, %v643, %v639
    %v645 = vadd.s32 %v640, %v644
    %v646 = vadd.s32 %v645, 536870912
    %v647 = vshrl.u32 %v646, 30
    %v648 = vshll.u32 %v647, 30
    %v649 = vsub.s32 %v645, %v648
    %vm650 = vcmp.lt.s32.totalorder %v649, 0
    %v651 = vsub.s32 0, %v649
    %v652 = vsel %vm650, %v651, %v649
    %v653 = vclz %v652
    %v654 = vsub.s32 %v653, 2
    %vm655 = vcmp.gt.s32.totalorder 0, %v654
    %v656 = vsel %vm655, 0, %v654
    %v657 = vsub.s32 32, %v656
    %v658 = vshll.u32 %v649, %v656
    %v659 = vshrl.u32 %v641, %v657
    %v660 = vor.u32 %v658, %v659
    %v661 = vsub.s32 4294967266, %v656
    %v662 = vadd.s32 %v661, 127
    %v663 = vshll.u32 %v662, 23
    %v664 = vor.u32 4788187, %v663
    %v665 = vand.u32 2147483647, %v664
    %v667 = vcvt.s32.f32 %v660
    %v668 = vmul.f32 %v667, %v665
    %v669 = vxor.u32 %v668, 2147483648
    %v670 = vsel %vm549, %v669, %v668
    %v671 = vsub.s32 4, %v647
    %v672 = vsel %vm549, %v671, %v647
    %v673 = vsel %vm548, %v307, %v670
    %v674 = vsel %vm548, 0, %v672
    %v675 = vmul.f32 %v673, %v673
    %v676 = vmul.f32 %v675, -0.001358992
    %v677 = vadd.f32 %v676, 0.041655596
    %v678 = vmul.f32 %v675, %v677
    %v679 = vadd.f32 %v678, -0.4999988
    %v680 = vmul.f32 %v675, %v679
    %v681 = vadd.f32 1.0, %v680
    %v682 = vmul.f32 %v673, %v673
    %v683 = vmul.f32 %v682, -0.00019511016
    %v684 = vadd.f32 %v683, 0.008332121
    %v685 = vmul.f32 %v682, %v684
    %v686 = vadd.f32 %v685, -0.16666654
    %v687 = vmul.f32 %v682, %v686
    %v688 = vadd.f32 %v687, 1.0
    %v689 = vmul.f32 %v688, %v673
    %vm690 = vweird.f32 %v307
    %v691 = vadd.s32 %v674, 3
    %v692 = vand.u32 %v691, 3
    %vm693 = vcmp.lt.s32.totalorder %v692, 2
    %vm694 = vcmp.eq.s32.totalorder %v692, 0
    %v695 = vxor.u32 %v689, 2147483648
    %v696 = vsel %vm694, %v681, %v695
    %vm697 = vcmp.eq.s32.totalorder %v692, 2
    %v698 = vxor.u32 %v681, 2147483648
    %v699 = vsel %vm697, %v698, %v689
    %v700 = vsel %vm693, %v696, %v699
    %v701 = vsel %vm690, nan, %v700
    %v702 = vand.u32 2147483647, %v308
    %vm703 = vcmp.le.f32.partialorder %v702, 0.7853982
    %vm704 = vcmp.lt.s32.totalorder %v308, 0
    %v705 = vand.u32 %v308, 2139095040
    %v706 = vshrl.u32 %v705, 23
    %v707 = vsub.s32 %v706, 127
    %v708 = vand.u32 2147483647, %v308
    %v709 = vand.u32 %v708, 8388607
    %v710 = vor.u32 %v709, 8388608
    %v711 = vsub.s32 0, %v710
    %v712 = vadd.s32 %v707, 1
    %vm713 = vcmp.gt.s32.totalorder %v712, 0
    %v714 = vsel %vm713, %v712, 0
    %v715 = vshrl.u32 %v714, 5
    %v716 = vand.u32 %v714, 31
    %v717 = vsub.s32 32, %v716
    %v718 = vshrl.u32 683565275, %v717
    %v719 = vshll.u32 683565275, %v716
    %v720 = vshrl.u32 2475754826, %v717
    %v721 = vor.u32 %v719, %v720
    %v722 = vshll.u32 2475754826, %v716
    %v723 = vshrl.u32 2131351028, %v717
    %v724 = vor.u32 %v722, %v723
    %v725 = vshll.u32 2131351028, %v716
    %v726 = vshrl.u32 2102212464, %v717
    %v727 = vor.u32 %v725, %v726
    %v728 = vshll.u32 2102212464, %v716
    %v729 = vshrl.u32 920167782, %v717
    %v730 = vor.u32 %v728, %v729
    %v731 = vshll.u32 920167782, %v716
    %v732 = vshrl.u32 1326507024, %v717
    %v733 = vor.u32 %v731, %v732
    %vm734 = vcmp.lt.s32.totalorder %v715, 1
    %vm735 = vcmp.lt.s32.totalorder %v715, 2
    %vm736 = vcmp.lt.s32.totalorder %v715, 3
    %vm737 = vcmp.lt.s32.totalorder %v715, 4
    %v738 = vsel %vm734, %v718, %v721
    %v739 = vsel %vm737, %v727, 2102212464
    %v740 = vsel %vm736, %v724, %v739
    %v741 = vsel %vm735, %v738, %v740
    %v742 = vsel %vm734, %v721, %v724
    %v743 = vsel %vm737, %v730, 920167782
    %v744 = vsel %vm736, %v727, %v743
    %v745 = vsel %vm735, %v742, %v744
    %v746 = vsel %vm734, %v724, %v727
    %v747 = vsel %vm737, %v733, 1326507024
    %v748 = vsel %vm736, %v730, %v747
    %v749 = vsel %vm735, %v746, %v748
    %v750 = vshll.u32 %v710, 8
    %v751 = vand.u32 %v750, 65535
    %v752 = vshrl.u32 %v750, 16
    %v753 = vand.u32 %v749, 65535
    %v754 = vshrl.u32 %v749, 16
    %v755 = vmul.u32 %v751, %v753
    %v756 = vmul.u32 %v751, %v754
    %v757 = vmul.u32 %v752, %v753
    %v758 = vmul.u32 %v752, %v754
    %v759 = vshll.u32 %v756, 16
    %v760 = vshrl.u32 %v756, 16
    %v761 = vshll.u32 %v757, 16
    %v762 = vshrl.u32 %v757, 16
    %vm763 = vc.u32 %v755, %v759
    %v764 = vsel %vm763, 1, 0
    %v765 = vadd.s32 %v755, %v759
    %v766 = vadd.s32 %v758, %v764
    %vm767 = vc.u32 %v765, %v761
    %v768 = vsel %vm767, 1, 0
    %v769 = vadd.s32 %v765, %v761
    %v770 = vadd.s32 %v766, %v768
    %v771 = vadd.s32 %v770, %v760
    %v772 = vadd.s32 %v771, %v762
    %v773 = vand.u32 %v750, 65535
    %v774 = vshrl.u32 %v750, 16
    %v775 = vand.u32 %v745, 65535
    %v776 = vshrl.u32 %v745, 16
    %v777 = vmul.u32 %v773, %v775
    %v778 = vmul.u32 %v773, %v776
    %v779 = vmul.u32 %v774, %v775
    %v780 = vmul.u32 %v774, %v776
    %v781 = vshll.u32 %v778, 16
    %v782 = vshrl.u32 %v778, 16
    %v783 = vshll.u32 %v779, 16
    %v784 = vshrl.u32 %v779, 16
    %vm785 = vc.u32 %v777, %v781
    %v786 = vsel %vm785, 1, 0
    %v787 = vadd.s32 %v777, %v781
    %v788 = vadd.s32 %v780, %v786
    %vm789 = vc.u32 %v787, %v783
    %v790 = vsel %vm789, 1, 0
    %v791 = vadd.s32 %v787, %v783
    %v792 = vadd.s32 %v788, %v790
    %v793 = vadd.s32 %v792, %v782
    %v794 = vadd.s32 %v793, %v784
    %v795 = vmul.u32 %v750, %v741
    %v796 = vadd.s32 %v772, %v791
    %vm797 = vc.u32 %v772, %v791
    %v798 = vadd.s32 %v794, 1
    %v799 = vsel %vm797, %v798, %v794
    %v800 = vadd.s32 %v795, %v799
    %v801 = vadd.s32 %v800, 536870912
    %v802 = vshrl.u32 %v801, 30
    %v803 = vshll.u32 %v802, 30
    %v804 = vsub.s32 %v800, %v803
    %vm805 = vcmp.lt.s32.totalorder %v804, 0
    %v806 = vsub.s32 0, %v804
    %v807 = vsel %vm805, %v806, %v804
    %v808 = vclz %v807
    %v809 = vsub.s32 %v808, 2
    %vm810 = vcmp.gt.s32.totalorder 0, %v809
    %v811 = vsel %vm810, 0, %v809
    %v812 = vsub.s32 32, %v811
    %v813 = vshll.u32 %v804, %v811
    %v814 = vshrl.u32 %v796, %v812
    %v815 = vor.u32 %v813, %v814
    %v816 = vsub.s32 4294967266, %v811
    %v817 = vadd.s32 %v816, 127
    %v818 = vshll.u32 %v817, 23
    %v819 = vor.u32 4788187, %v818
    %v820 = vand.u32 2147483647, %v819
    %v822 = vcvt.s32.f32 %v815
    %v823 = vmul.f32 %v822, %v820
    %v824 = vxor.u32 %v823, 2147483648
    %v825 = vsel %vm704, %v824, %v823
    %v826 = vsub.s32 4, %v802
    %v827 = vsel %vm704, %v826, %v802
    %v828 = vsel %vm703, %v308, %v825
    %v829 = vsel %vm703, 0, %v827
    %v830 = vmul.f32 %v828, %v828
    %v831 = vmul.f32 %v830, -0.001358992
    %v832 = vadd.f32 %v831, 0.041655596
    %v833 = vmul.f32 %v830, %v832
    %v834 = vadd.f32 %v833, -0.4999988
    %v835 = vmul.f32 %v830, %v834
    %v836 = vadd.f32 1.0, %v835
    %v837 = vmul.f32 %v828, %v828
    %v838 = vmul.f32 %v837, -0.00019511016
    %v839 = vadd.f32 %v838, 0.008332121
    %v840 = vmul.f32 %v837, %v839
    %v841 = vadd.f32 %v840, -0.16666654
    %v842 = vmul.f32 %v837, %v841
    %v843 = vadd.f32 %v842, 1.0
    %v844 = vmul.f32 %v843, %v828
    %vm845 = vweird.f32 %v308
    %v846 = vadd.s32 %v829, 3
    %v847 = vand.u32 %v846, 3
    %vm848 = vcmp.lt.s32.totalorder %v847, 2
    %vm849 = vcmp.eq.s32.totalorder %v847, 0
    %v850 = vxor.u32 %v844, 2147483648
    %v851 = vsel %vm849, %v836, %v850
    %vm852 = vcmp.eq.s32.totalorder %v847, 2
    %v853 = vxor.u32 %v836, 2147483648
    %v854 = vsel %vm852, %v853, %v844
    %v855 = vsel %vm848, %v851, %v854
    %v856 = vsel %vm845, nan, %v855
    %v857 = vand.u32 2147483647, %v309
    %vm858 = vcmp.le.f32.partialorder %v857, 0.7853982
    %vm859 = vcmp.lt.s32.totalorder %v309, 0
    %v860 = vand.u32 %v309, 2139095040
    %v861 = vshrl.u32 %v860, 23
    %v862 = vsub.s32 %v861, 127
    %v863 = vand.u32 2147483647, %v309
    %v864 = vand.u32 %v863, 8388607
    %v865 = vor.u32 %v864, 8388608
    %v866 = vsub.s32 0, %v865
    %v867 = vadd.s32 %v862, 1
    %vm868 = vcmp.gt.s32.totalorder %v867, 0
    %v869 = vsel %vm868, %v867, 0
    %v870 = vshrl.u32 %v869, 5
    %v871 = vand.u32 %v869, 31
    %v872 = vsub.s32 32, %v871
    %v873 = vshrl.u32 683565275, %v872
    %v874 = vshll.u32 683565275, %v871
    %v875 = vshrl.u32 2475754826, %v872
    %v876 = vor.u32 %v874, %v875
    %v877 = vshll.u32 2475754826, %v871
    %v878 = vshrl.u32 2131351028, %v872
    %v879 = vor.u32 %v877, %v878
    %v880 = vshll.u32 2131351028, %v871
    %v881 = vshrl.u32 2102212464, %v872
    %v882 = vor.u32 %v880, %v881
    %v883 = vshll.u32 2102212464, %v871
    %v884 = vshrl.u32 920167782, %v872
    %v885 = vor.u32 %v883, %v884
    %v886 = vshll.u32 920167782, %v871
    %v887 = vshrl.u32 1326507024, %v872
    %v888 = vor.u32 %v886, %v887
    %vm889 = vcmp.lt.s32.totalorder %v870, 1
    %vm890 = vcmp.lt.s32.totalorder %v870, 2
    %vm891 = vcmp.lt.s32.totalorder %v870, 3
    %vm892 = vcmp.lt.s32.totalorder %v870, 4
    %v893 = vsel %vm889, %v873, %v876
    %v894 = vsel %vm892, %v882, 2102212464
    %v895 = vsel %vm891, %v879, %v894
    %v896 = vsel %vm890, %v893, %v895
    %v897 = vsel %vm889, %v876, %v879
    %v898 = vsel %vm892, %v885, 920167782
    %v899 = vsel %vm891, %v882, %v898
    %v900 = vsel %vm890, %v897, %v899
    %v901 = vsel %vm889, %v879, %v882
    %v902 = vsel %vm892, %v888, 1326507024
    %v903 = vsel %vm891, %v885, %v902
    %v904 = vsel %vm890, %v901, %v903
    %v905 = vshll.u32 %v865, 8
    %v906 = vand.u32 %v905, 65535
    %v907 = vshrl.u32 %v905, 16
    %v908 = vand.u32 %v904, 65535
    %v909 = vshrl.u32 %v904, 16
    %v910 = vmul.u32 %v906, %v908
    %v911 = vmul.u32 %v906, %v909
    %v912 = vmul.u32 %v907, %v908
    %v913 = vmul.u32 %v907, %v909
    %v914 = vshll.u32 %v911, 16
    %v915 = vshrl.u32 %v911, 16
    %v916 = vshll.u32 %v912, 16
    %v917 = vshrl.u32 %v912, 16
    %vm918 = vc.u32 %v910, %v914
    %v919 = vsel %vm918, 1, 0
    %v920 = vadd.s32 %v910, %v914
    %v921 = vadd.s32 %v913, %v919
    %vm922 = vc.u32 %v920, %v916
    %v923 = vsel %vm922, 1, 0
    %v924 = vadd.s32 %v920, %v916
    %v925 = vadd.s32 %v921, %v923
    %v926 = vadd.s32 %v925, %v915
    %v927 = vadd.s32 %v926, %v917
    %v928 = vand.u32 %v905, 65535
    %v929 = vshrl.u32 %v905, 16
    %v930 = vand.u32 %v900, 65535
    %v931 = vshrl.u32 %v900, 16
    %v932 = vmul.u32 %v928, %v930
    %v933 = vmul.u32 %v928, %v931
    %v934 = vmul.u32 %v929, %v930
    %v935 = vmul.u32 %v929, %v931
    %v936 = vshll.u32 %v933, 16
    %v937 = vshrl.u32 %v933, 16
    %v938 = vshll.u32 %v934, 16
    %v939 = vshrl.u32 %v934, 16
    %vm940 = vc.u32 %v932, %v936
    %v941 = vsel %vm940, 1, 0
    %v942 = vadd.s32 %v932, %v936
    %v943 = vadd.s32 %v935, %v941
    %vm944 = vc.u32 %v942, %v938
    %v945 = vsel %vm944, 1, 0
    %v946 = vadd.s32 %v942, %v938
    %v947 = vadd.s32 %v943, %v945
    %v948 = vadd.s32 %v947, %v937
    %v949 = vadd.s32 %v948, %v939
    %v950 = vmul.u32 %v905, %v896
    %v951 = vadd.s32 %v927, %v946
    %vm952 = vc.u32 %v927, %v946
    %v953 = vadd.s32 %v949, 1
    %v954 = vsel %vm952, %v953, %v949
    %v955 = vadd.s32 %v950, %v954
    %v956 = vadd.s32 %v955, 536870912
    %v957 = vshrl.u32 %v956, 30
    %v958 = vshll.u32 %v957, 30
    %v959 = vsub.s32 %v955, %v958
    %vm960 = vcmp.lt.s32.totalorder %v959, 0
    %v961 = vsub.s32 0, %v959
    %v962 = vsel %vm960, %v961, %v959
    %v963 = vclz %v962
    %v964 = vsub.s32 %v963, 2
    %vm965 = vcmp.gt.s32.totalorder 0, %v964
    %v966 = vsel %vm965, 0, %v964
    %v967 = vsub.s32 32, %v966
    %v968 = vshll.u32 %v959, %v966
    %v969 = vshrl.u32 %v951, %v967
    %v970 = vor.u32 %v968, %v969
    %v971 = vsub.s32 4294967266, %v966
    %v972 = vadd.s32 %v971, 127
    %v973 = vshll.u32 %v972, 23
    %v974 = vor.u32 4788187, %v973
    %v975 = vand.u32 2147483647, %v974
    %v977 = vcvt.s32.f32 %v970
    %v978 = vmul.f32 %v977, %v975
    %v979 = vxor.u32 %v978, 2147483648
    %v980 = vsel %vm859, %v979, %v978
    %v981 = vsub.s32 4, %v957
    %v982 = vsel %vm859, %v981, %v957
    %v983 = vsel %vm858, %v309, %v980
    %v984 = vsel %vm858, 0, %v982
    %v985 = vmul.f32 %v983, %v983
    %v986 = vmul.f32 %v985, -0.001358992
    %v987 = vadd.f32 %v986, 0.041655596
    %v988 = vmul.f32 %v985, %v987
    %v989 = vadd.f32 %v988, -0.4999988
    %v990 = vmul.f32 %v985, %v989
    %v991 = vadd.f32 1.0, %v990
    %v992 = vmul.f32 %v983, %v983
    %v993 = vmul.f32 %v992, -0.00019511016
    %v994 = vadd.f32 %v993, 0.008332121
    %v995 = vmul.f32 %v992, %v994
    %v996 = vadd.f32 %v995, -0.16666654
    %v997 = vmul.f32 %v992, %v996
    %v998 = vadd.f32 %v997, 1.0
    %v999 = vmul.f32 %v998, %v983
    %vm1000 = vweird.f32 %v309
    %v1001 = vadd.s32 %v984, 3
    %v1002 = vand.u32 %v1001, 3
    %vm1003 = vcmp.lt.s32.totalorder %v1002, 2
    %vm1004 = vcmp.eq.s32.totalorder %v1002, 0
    %v1005 = vxor.u32 %v999, 2147483648
    %v1006 = vsel %vm1004, %v991, %v1005
    %vm1007 = vcmp.eq.s32.totalorder %v1002, 2
    %v1008 = vxor.u32 %v991, 2147483648
    %v1009 = vsel %vm1007, %v1008, %v999
    %v1010 = vsel %vm1003, %v1006, %v1009
    %v1011 = vsel %vm1000, nan, %v1010
    %v1012 = vld [vmem:[%s3 + $0xa8] sm:$0xff]
    %v1013 = vld [vmem:[%s3 + $0xb0] sm:$0xff]
    %v1014 = vld [vmem:[%s3 + $0xb8] sm:$0xff]
    %v1015 = vld [vmem:[%s3 + $0xc0] sm:$0xff]
    %v1016 = vand.u32 2147483647, %v306
    %vm1017 = vcmp.le.f32.partialorder %v1016, 0.7853982
    %vm1018 = vcmp.lt.s32.totalorder %v306, 0
    %v1019 = vand.u32 %v306, 2139095040
    %v1020 = vshrl.u32 %v1019, 23
    %v1021 = vsub.s32 %v1020, 127
    %v1022 = vand.u32 2147483647, %v306
    %v1023 = vand.u32 %v1022, 8388607
    %v1024 = vor.u32 %v1023, 8388608
    %v1025 = vsub.s32 0, %v1024
    %v1026 = vadd.s32 %v1021, 1
    %vm1027 = vcmp.gt.s32.totalorder %v1026, 0
    %v1028 = vsel %vm1027, %v1026, 0
    %v1029 = vshrl.u32 %v1028, 5
    %v1030 = vand.u32 %v1028, 31
    %v1031 = vsub.s32 32, %v1030
    %v1032 = vshrl.u32 683565275, %v1031
    %v1033 = vshll.u32 683565275, %v1030
    %v1034 = vshrl.u32 2475754826, %v1031
    %v1035 = vor.u32 %v1033, %v1034
    %v1036 = vshll.u32 2475754826, %v1030
    %v1037 = vshrl.u32 2131351028, %v1031
    %v1038 = vor.u32 %v1036, %v1037
    %v1039 = vshll.u32 2131351028, %v1030
    %v1040 = vshrl.u32 2102212464, %v1031
    %v1041 = vor.u32 %v1039, %v1040
    %v1042 = vshll.u32 2102212464, %v1030
    %v1043 = vshrl.u32 920167782, %v1031
    %v1044 = vor.u32 %v1042, %v1043
    %v1045 = vshll.u32 920167782, %v1030
    %v1046 = vshrl.u32 1326507024, %v1031
    %v1047 = vor.u32 %v1045, %v1046
    %vm1048 = vcmp.lt.s32.totalorder %v1029, 1
    %vm1049 = vcmp.lt.s32.totalorder %v1029, 2
    %vm1050 = vcmp.lt.s32.totalorder %v1029, 3
    %vm1051 = vcmp.lt.s32.totalorder %v1029, 4
    %v1052 = vsel %vm1048, %v1032, %v1035
    %v1053 = vsel %vm1051, %v1041, 2102212464
    %v1054 = vsel %vm1050, %v1038, %v1053
    %v1055 = vsel %vm1049, %v1052, %v1054
    %v1056 = vsel %vm1048, %v1035, %v1038
    %v1057 = vsel %vm1051, %v1044, 920167782
    %v1058 = vsel %vm1050, %v1041, %v1057
    %v1059 = vsel %vm1049, %v1056, %v1058
    %v1060 = vsel %vm1048, %v1038, %v1041
    %v1061 = vsel %vm1051, %v1047, 1326507024
    %v1062 = vsel %vm1050, %v1044, %v1061
    %v1063 = vsel %vm1049, %v1060, %v1062
    %v1064 = vshll.u32 %v1024, 8
    %v1065 = vand.u32 %v1064, 65535
    %v1066 = vshrl.u32 %v1064, 16
    %v1067 = vand.u32 %v1063, 65535
    %v1068 = vshrl.u32 %v1063, 16
    %v1069 = vmul.u32 %v1065, %v1067
    %v1070 = vmul.u32 %v1065, %v1068
    %v1071 = vmul.u32 %v1066, %v1067
    %v1072 = vmul.u32 %v1066, %v1068
    %v1073 = vshll.u32 %v1070, 16
    %v1074 = vshrl.u32 %v1070, 16
    %v1075 = vshll.u32 %v1071, 16
    %v1076 = vshrl.u32 %v1071, 16
    %vm1077 = vc.u32 %v1069, %v1073
    %v1078 = vsel %vm1077, 1, 0
    %v1079 = vadd.s32 %v1069, %v1073
    %v1080 = vadd.s32 %v1072, %v1078
    %vm1081 = vc.u32 %v1079, %v1075
    %v1082 = vsel %vm1081, 1, 0
    %v1083 = vadd.s32 %v1079, %v1075
    %v1084 = vadd.s32 %v1080, %v1082
    %v1085 = vadd.s32 %v1084, %v1074
    %v1086 = vadd.s32 %v1085, %v1076
    %v1087 = vand.u32 %v1064, 65535
    %v1088 = vshrl.u32 %v1064, 16
    %v1089 = vand.u32 %v1059, 65535
    %v1090 = vshrl.u32 %v1059, 16
    %v1091 = vmul.u32 %v1087, %v1089
    %v1092 = vmul.u32 %v1087, %v1090
    %v1093 = vmul.u32 %v1088, %v1089
    %v1094 = vmul.u32 %v1088, %v1090
    %v1095 = vshll.u32 %v1092, 16
    %v1096 = vshrl.u32 %v1092, 16
    %v1097 = vshll.u32 %v1093, 16
    %v1098 = vshrl.u32 %v1093, 16
    %vm1099 = vc.u32 %v1091, %v1095
    %v1100 = vsel %vm1099, 1, 0
    %v1101 = vadd.s32 %v1091, %v1095
    %v1102 = vadd.s32 %v1094, %v1100
    %vm1103 = vc.u32 %v1101, %v1097
    %v1104 = vsel %vm1103, 1, 0
    %v1105 = vadd.s32 %v1101, %v1097
    %v1106 = vadd.s32 %v1102, %v1104
    %v1107 = vadd.s32 %v1106, %v1096
    %v1108 = vadd.s32 %v1107, %v1098
    %v1109 = vmul.u32 %v1064, %v1055
    %v1110 = vadd.s32 %v1086, %v1105
    %vm1111 = vc.u32 %v1086, %v1105
    %v1112 = vadd.s32 %v1108, 1
    %v1113 = vsel %vm1111, %v1112, %v1108
    %v1114 = vadd.s32 %v1109, %v1113
    %v1115 = vadd.s32 %v1114, 536870912
    %v1116 = vshrl.u32 %v1115, 30
    %v1117 = vshll.u32 %v1116, 30
    %v1118 = vsub.s32 %v1114, %v1117
    %vm1119 = vcmp.lt.s32.totalorder %v1118, 0
    %v1120 = vsub.s32 0, %v1118
    %v1121 = vsel %vm1119, %v1120, %v1118
    %v1122 = vclz %v1121
    %v1123 = vsub.s32 %v1122, 2
    %vm1124 = vcmp.gt.s32.totalorder 0, %v1123
    %v1125 = vsel %vm1124, 0, %v1123
    %v1126 = vsub.s32 32, %v1125
    %v1127 = vshll.u32 %v1118, %v1125
    %v1128 = vshrl.u32 %v1110, %v1126
    %v1129 = vor.u32 %v1127, %v1128
    %v1130 = vsub.s32 4294967266, %v1125
    %v1131 = vadd.s32 %v1130, 127
    %v1132 = vshll.u32 %v1131, 23
    %v1133 = vor.u32 4788187, %v1132
    %v1134 = vand.u32 2147483647, %v1133
    %v1136 = vcvt.s32.f32 %v1129
    %v1137 = vmul.f32 %v1136, %v1134
    %v1138 = vxor.u32 %v1137, 2147483648
    %v1139 = vsel %vm1018, %v1138, %v1137
    %v1140 = vsub.s32 4, %v1116
    %v1141 = vsel %vm1018, %v1140, %v1116
    %v1142 = vsel %vm1017, %v306, %v1139
    %v1143 = vsel %vm1017, 0, %v1141
    %v1144 = vmul.f32 %v1142, %v1142
    %v1145 = vmul.f32 %v1144, -0.001358992
    %v1146 = vadd.f32 %v1145, 0.041655596
    %v1147 = vmul.f32 %v1144, %v1146
    %v1148 = vadd.f32 %v1147, -0.4999988
    %v1149 = vmul.f32 %v1144, %v1148
    %v1150 = vadd.f32 1.0, %v1149
    %v1151 = vmul.f32 %v1142, %v1142
    %v1152 = vmul.f32 %v1151, -0.00019511016
    %v1153 = vadd.f32 %v1152, 0.008332121
    %v1154 = vmul.f32 %v1151, %v1153
    %v1155 = vadd.f32 %v1154, -0.16666654
    %v1156 = vmul.f32 %v1151, %v1155
    %v1157 = vadd.f32 %v1156, 1.0
    %v1158 = vmul.f32 %v1157, %v1142
    %vm1159 = vweird.f32 %v306
    %v1160 = vand.u32 %v1143, 3
    %vm1161 = vcmp.lt.s32.totalorder %v1160, 2
    %vm1162 = vcmp.eq.s32.totalorder %v1160, 0
    %v1163 = vxor.u32 %v1158, 2147483648
    %v1164 = vsel %vm1162, %v1150, %v1163
    %vm1165 = vcmp.eq.s32.totalorder %v1160, 2
    %v1166 = vxor.u32 %v1150, 2147483648
    %v1167 = vsel %vm1165, %v1166, %v1158
    %v1168 = vsel %vm1161, %v1164, %v1167
    %v1169 = vsel %vm1159, nan, %v1168
    %v1170 = vand.u32 2147483647, %v307
    %vm1171 = vcmp.le.f32.partialorder %v1170, 0.7853982
    %vm1172 = vcmp.lt.s32.totalorder %v307, 0
    %v1173 = vand.u32 %v307, 2139095040
    %v1174 = vshrl.u32 %v1173, 23
    %v1175 = vsub.s32 %v1174, 127
    %v1176 = vand.u32 2147483647, %v307
    %v1177 = vand.u32 %v1176, 8388607
    %v1178 = vor.u32 %v1177, 8388608
    %v1179 = vsub.s32 0, %v1178
    %v1180 = vadd.s32 %v1175, 1
    %vm1181 = vcmp.gt.s32.totalorder %v1180, 0
    %v1182 = vsel %vm1181, %v1180, 0
    %v1183 = vshrl.u32 %v1182, 5
    %v1184 = vand.u32 %v1182, 31
    %v1185 = vsub.s32 32, %v1184
    %v1186 = vshrl.u32 683565275, %v1185
    %v1187 = vshll.u32 683565275, %v1184
    %v1188 = vshrl.u32 2475754826, %v1185
    %v1189 = vor.u32 %v1187, %v1188
    %v1190 = vshll.u32 2475754826, %v1184
    %v1191 = vshrl.u32 2131351028, %v1185
    %v1192 = vor.u32 %v1190, %v1191
    %v1193 = vshll.u32 2131351028, %v1184
    %v1194 = vshrl.u32 2102212464, %v1185
    %v1195 = vor.u32 %v1193, %v1194
    %v1196 = vshll.u32 2102212464, %v1184
    %v1197 = vshrl.u32 920167782, %v1185
    %v1198 = vor.u32 %v1196, %v1197
    %v1199 = vshll.u32 920167782, %v1184
    %v1200 = vshrl.u32 1326507024, %v1185
    %v1201 = vor.u32 %v1199, %v1200
    %vm1202 = vcmp.lt.s32.totalorder %v1183, 1
    %vm1203 = vcmp.lt.s32.totalorder %v1183, 2
    %vm1204 = vcmp.lt.s32.totalorder %v1183, 3
    %vm1205 = vcmp.lt.s32.totalorder %v1183, 4
    %v1206 = vsel %vm1202, %v1186, %v1189
    %v1207 = vsel %vm1205, %v1195, 2102212464
    %v1208 = vsel %vm1204, %v1192, %v1207
    %v1209 = vsel %vm1203, %v1206, %v1208
    %v1210 = vsel %vm1202, %v1189, %v1192
    %v1211 = vsel %vm1205, %v1198, 920167782
    %v1212 = vsel %vm1204, %v1195, %v1211
    %v1213 = vsel %vm1203, %v1210, %v1212
    %v1214 = vsel %vm1202, %v1192, %v1195
    %v1215 = vsel %vm1205, %v1201, 1326507024
    %v1216 = vsel %vm1204, %v1198, %v1215
    %v1217 = vsel %vm1203, %v1214, %v1216
    %v1218 = vshll.u32 %v1178, 8
    %v1219 = vand.u32 %v1218, 65535
    %v1220 = vshrl.u32 %v1218, 16
    %v1221 = vand.u32 %v1217, 65535
    %v1222 = vshrl.u32 %v1217, 16
    %v1223 = vmul.u32 %v1219, %v1221
    %v1224 = vmul.u32 %v1219, %v1222
    %v1225 = vmul.u32 %v1220, %v1221
    %v1226 = vmul.u32 %v1220, %v1222
    %v1227 = vshll.u32 %v1224, 16
    %v1228 = vshrl.u32 %v1224, 16
    %v1229 = vshll.u32 %v1225, 16
    %v1230 = vshrl.u32 %v1225, 16
    %vm1231 = vc.u32 %v1223, %v1227
    %v1232 = vsel %vm1231, 1, 0
    %v1233 = vadd.s32 %v1223, %v1227
    %v1234 = vadd.s32 %v1226, %v1232
    %vm1235 = vc.u32 %v1233, %v1229
    %v1236 = vsel %vm1235, 1, 0
    %v1237 = vadd.s32 %v1233, %v1229
    %v1238 = vadd.s32 %v1234, %v1236
    %v1239 = vadd.s32 %v1238, %v1228
    %v1240 = vadd.s32 %v1239, %v1230
    %v1241 = vand.u32 %v1218, 65535
    %v1242 = vshrl.u32 %v1218, 16
    %v1243 = vand.u32 %v1213, 65535
    %v1244 = vshrl.u32 %v1213, 16
    %v1245 = vmul.u32 %v1241, %v1243
    %v1246 = vmul.u32 %v1241, %v1244
    %v1247 = vmul.u32 %v1242, %v1243
    %v1248 = vmul.u32 %v1242, %v1244
    %v1249 = vshll.u32 %v1246, 16
    %v1250 = vshrl.u32 %v1246, 16
    %v1251 = vshll.u32 %v1247, 16
    %v1252 = vshrl.u32 %v1247, 16
    %vm1253 = vc.u32 %v1245, %v1249
    %v1254 = vsel %vm1253, 1, 0
    %v1255 = vadd.s32 %v1245, %v1249
    %v1256 = vadd.s32 %v1248, %v1254
    %vm1257 = vc.u32 %v1255, %v1251
    %v1258 = vsel %vm1257, 1, 0
    %v1259 = vadd.s32 %v1255, %v1251
    %v1260 = vadd.s32 %v1256, %v1258
    %v1261 = vadd.s32 %v1260, %v1250
    %v1262 = vadd.s32 %v1261, %v1252
    %v1263 = vmul.u32 %v1218, %v1209
    %v1264 = vadd.s32 %v1240, %v1259
    %vm1265 = vc.u32 %v1240, %v1259
    %v1266 = vadd.s32 %v1262, 1
    %v1267 = vsel %vm1265, %v1266, %v1262
    %v1268 = vadd.s32 %v1263, %v1267
    %v1269 = vadd.s32 %v1268, 536870912
    %v1270 = vshrl.u32 %v1269, 30
    %v1271 = vshll.u32 %v1270, 30
    %v1272 = vsub.s32 %v1268, %v1271
    %vm1273 = vcmp.lt.s32.totalorder %v1272, 0
    %v1274 = vsub.s32 0, %v1272
    %v1275 = vsel %vm1273, %v1274, %v1272
    %v1276 = vclz %v1275
    %v1277 = vsub.s32 %v1276, 2
    %vm1278 = vcmp.gt.s32.totalorder 0, %v1277
    %v1279 = vsel %vm1278, 0, %v1277
    %v1280 = vsub.s32 32, %v1279
    %v1281 = vshll.u32 %v1272, %v1279
    %v1282 = vshrl.u32 %v1264, %v1280
    %v1283 = vor.u32 %v1281, %v1282
    %v1284 = vsub.s32 4294967266, %v1279
    %v1285 = vadd.s32 %v1284, 127
    %v1286 = vshll.u32 %v1285, 23
    %v1287 = vor.u32 4788187, %v1286
    %v1288 = vand.u32 2147483647, %v1287
    %v1290 = vcvt.s32.f32 %v1283
    %v1291 = vmul.f32 %v1290, %v1288
    %v1292 = vxor.u32 %v1291, 2147483648
    %v1293 = vsel %vm1172, %v1292, %v1291
    %v1294 = vsub.s32 4, %v1270
    %v1295 = vsel %vm1172, %v1294, %v1270
    %v1296 = vsel %vm1171, %v307, %v1293
    %v1297 = vsel %vm1171, 0, %v1295
    %v1298 = vmul.f32 %v1296, %v1296
    %v1299 = vmul.f32 %v1298, -0.001358992
    %v1300 = vadd.f32 %v1299, 0.041655596
    %v1301 = vmul.f32 %v1298, %v1300
    %v1302 = vadd.f32 %v1301, -0.4999988
    %v1303 = vmul.f32 %v1298, %v1302
    %v1304 = vadd.f32 1.0, %v1303
    %v1305 = vmul.f32 %v1296, %v1296
    %v1306 = vmul.f32 %v1305, -0.00019511016
    %v1307 = vadd.f32 %v1306, 0.008332121
    %v1308 = vmul.f32 %v1305, %v1307
    %v1309 = vadd.f32 %v1308, -0.16666654
    %v1310 = vmul.f32 %v1305, %v1309
    %v1311 = vadd.f32 %v1310, 1.0
    %v1312 = vmul.f32 %v1311, %v1296
    %vm1313 = vweird.f32 %v307
    %v1314 = vand.u32 %v1297, 3
    %vm1315 = vcmp.lt.s32.totalorder %v1314, 2
    %vm1316 = vcmp.eq.s32.totalorder %v1314, 0
    %v1317 = vxor.u32 %v1312, 2147483648
    %v1318 = vsel %vm1316, %v1304, %v1317
    %vm1319 = vcmp.eq.s32.totalorder %v1314, 2
    %v1320 = vxor.u32 %v1304, 2147483648
    %v1321 = vsel %vm1319, %v1320, %v1312
    %v1322 = vsel %vm1315, %v1318, %v1321
    %v1323 = vsel %vm1313, nan, %v1322
    %v1324 = vand.u32 2147483647, %v308
    %vm1325 = vcmp.le.f32.partialorder %v1324, 0.7853982
    %vm1326 = vcmp.lt.s32.totalorder %v308, 0
    %v1327 = vand.u32 %v308, 2139095040
    %v1328 = vshrl.u32 %v1327, 23
    %v1329 = vsub.s32 %v1328, 127
    %v1330 = vand.u32 2147483647, %v308
    %v1331 = vand.u32 %v1330, 8388607
    %v1332 = vor.u32 %v1331, 8388608
    %v1333 = vsub.s32 0, %v1332
    %v1334 = vadd.s32 %v1329, 1
    %vm1335 = vcmp.gt.s32.totalorder %v1334, 0
    %v1336 = vsel %vm1335, %v1334, 0
    %v1337 = vshrl.u32 %v1336, 5
    %v1338 = vand.u32 %v1336, 31
    %v1339 = vsub.s32 32, %v1338
    %v1340 = vshrl.u32 683565275, %v1339
    %v1341 = vshll.u32 683565275, %v1338
    %v1342 = vshrl.u32 2475754826, %v1339
    %v1343 = vor.u32 %v1341, %v1342
    %v1344 = vshll.u32 2475754826, %v1338
    %v1345 = vshrl.u32 2131351028, %v1339
    %v1346 = vor.u32 %v1344, %v1345
    %v1347 = vshll.u32 2131351028, %v1338
    %v1348 = vshrl.u32 2102212464, %v1339
    %v1349 = vor.u32 %v1347, %v1348
    %v1350 = vshll.u32 2102212464, %v1338
    %v1351 = vshrl.u32 920167782, %v1339
    %v1352 = vor.u32 %v1350, %v1351
    %v1353 = vshll.u32 920167782, %v1338
    %v1354 = vshrl.u32 1326507024, %v1339
    %v1355 = vor.u32 %v1353, %v1354
    %vm1356 = vcmp.lt.s32.totalorder %v1337, 1
    %vm1357 = vcmp.lt.s32.totalorder %v1337, 2
    %vm1358 = vcmp.lt.s32.totalorder %v1337, 3
    %vm1359 = vcmp.lt.s32.totalorder %v1337, 4
    %v1360 = vsel %vm1356, %v1340, %v1343
    %v1361 = vsel %vm1359, %v1349, 2102212464
    %v1362 = vsel %vm1358, %v1346, %v1361
    %v1363 = vsel %vm1357, %v1360, %v1362
    %v1364 = vsel %vm1356, %v1343, %v1346
    %v1365 = vsel %vm1359, %v1352, 920167782
    %v1366 = vsel %vm1358, %v1349, %v1365
    %v1367 = vsel %vm1357, %v1364, %v1366
    %v1368 = vsel %vm1356, %v1346, %v1349
    %v1369 = vsel %vm1359, %v1355, 1326507024
    %v1370 = vsel %vm1358, %v1352, %v1369
    %v1371 = vsel %vm1357, %v1368, %v1370
    %v1372 = vshll.u32 %v1332, 8
    %v1373 = vand.u32 %v1372, 65535
    %v1374 = vshrl.u32 %v1372, 16
    %v1375 = vand.u32 %v1371, 65535
    %v1376 = vshrl.u32 %v1371, 16
    %v1377 = vmul.u32 %v1373, %v1375
    %v1378 = vmul.u32 %v1373, %v1376
    %v1379 = vmul.u32 %v1374, %v1375
    %v1380 = vmul.u32 %v1374, %v1376
    %v1381 = vshll.u32 %v1378, 16
    %v1382 = vshrl.u32 %v1378, 16
    %v1383 = vshll.u32 %v1379, 16
    %v1384 = vshrl.u32 %v1379, 16
    %vm1385 = vc.u32 %v1377, %v1381
    %v1386 = vsel %vm1385, 1, 0
    %v1387 = vadd.s32 %v1377, %v1381
    %v1388 = vadd.s32 %v1380, %v1386
    %vm1389 = vc.u32 %v1387, %v1383
    %v1390 = vsel %vm1389, 1, 0
    %v1391 = vadd.s32 %v1387, %v1383
    %v1392 = vadd.s32 %v1388, %v1390
    %v1393 = vadd.s32 %v1392, %v1382
    %v1394 = vadd.s32 %v1393, %v1384
    %v1395 = vand.u32 %v1372, 65535
    %v1396 = vshrl.u32 %v1372, 16
    %v1397 = vand.u32 %v1367, 65535
    %v1398 = vshrl.u32 %v1367, 16
    %v1399 = vmul.u32 %v1395, %v1397
    %v1400 = vmul.u32 %v1395, %v1398
    %v1401 = vmul.u32 %v1396, %v1397
    %v1402 = vmul.u32 %v1396, %v1398
    %v1403 = vshll.u32 %v1400, 16
    %v1404 = vshrl.u32 %v1400, 16
    %v1405 = vshll.u32 %v1401, 16
    %v1406 = vshrl.u32 %v1401, 16
    %vm1407 = vc.u32 %v1399, %v1403
    %v1408 = vsel %vm1407, 1, 0
    %v1409 = vadd.s32 %v1399, %v1403
    %v1410 = vadd.s32 %v1402, %v1408
    %vm1411 = vc.u32 %v1409, %v1405
    %v1412 = vsel %vm1411, 1, 0
    %v1413 = vadd.s32 %v1409, %v1405
    %v1414 = vadd.s32 %v1410, %v1412
    %v1415 = vadd.s32 %v1414, %v1404
    %v1416 = vadd.s32 %v1415, %v1406
    %v1417 = vmul.u32 %v1372, %v1363
    %v1418 = vadd.s32 %v1394, %v1413
    %vm1419 = vc.u32 %v1394, %v1413
    %v1420 = vadd.s32 %v1416, 1
    %v1421 = vsel %vm1419, %v1420, %v1416
    %v1422 = vadd.s32 %v1417, %v1421
    %v1423 = vadd.s32 %v1422, 536870912
    %v1424 = vshrl.u32 %v1423, 30
    %v1425 = vshll.u32 %v1424, 30
    %v1426 = vsub.s32 %v1422, %v1425
    %vm1427 = vcmp.lt.s32.totalorder %v1426, 0
    %v1428 = vsub.s32 0, %v1426
    %v1429 = vsel %vm1427, %v1428, %v1426
    %v1430 = vclz %v1429
    %v1431 = vsub.s32 %v1430, 2
    %vm1432 = vcmp.gt.s32.totalorder 0, %v1431
    %v1433 = vsel %vm1432, 0, %v1431
    %v1434 = vsub.s32 32, %v1433
    %v1435 = vshll.u32 %v1426, %v1433
    %v1436 = vshrl.u32 %v1418, %v1434
    %v1437 = vor.u32 %v1435, %v1436
    %v1438 = vsub.s32 4294967266, %v1433
    %v1439 = vadd.s32 %v1438, 127
    %v1440 = vshll.u32 %v1439, 23
    %v1441 = vor.u32 4788187, %v1440
    %v1442 = vand.u32 2147483647, %v1441
    %v1444 = vcvt.s32.f32 %v1437
    %v1445 = vmul.f32 %v1444, %v1442
    %v1446 = vxor.u32 %v1445, 2147483648
    %v1447 = vsel %vm1326, %v1446, %v1445
    %v1448 = vsub.s32 4, %v1424
    %v1449 = vsel %vm1326, %v1448, %v1424
    %v1450 = vsel %vm1325, %v308, %v1447
    %v1451 = vsel %vm1325, 0, %v1449
    %v1452 = vmul.f32 %v1450, %v1450
    %v1453 = vmul.f32 %v1452, -0.001358992
    %v1454 = vadd.f32 %v1453, 0.041655596
    %v1455 = vmul.f32 %v1452, %v1454
    %v1456 = vadd.f32 %v1455, -0.4999988
    %v1457 = vmul.f32 %v1452, %v1456
    %v1458 = vadd.f32 1.0, %v1457
    %v1459 = vmul.f32 %v1450, %v1450
    %v1460 = vmul.f32 %v1459, -0.00019511016
    %v1461 = vadd.f32 %v1460, 0.008332121
    %v1462 = vmul.f32 %v1459, %v1461
    %v1463 = vadd.f32 %v1462, -0.16666654
    %v1464 = vmul.f32 %v1459, %v1463
    %v1465 = vadd.f32 %v1464, 1.0
    %v1466 = vmul.f32 %v1465, %v1450
    %vm1467 = vweird.f32 %v308
    %v1468 = vand.u32 %v1451, 3
    %vm1469 = vcmp.lt.s32.totalorder %v1468, 2
    %vm1470 = vcmp.eq.s32.totalorder %v1468, 0
    %v1471 = vxor.u32 %v1466, 2147483648
    %v1472 = vsel %vm1470, %v1458, %v1471
    %vm1473 = vcmp.eq.s32.totalorder %v1468, 2
    %v1474 = vxor.u32 %v1458, 2147483648
    %v1475 = vsel %vm1473, %v1474, %v1466
    %v1476 = vsel %vm1469, %v1472, %v1475
    %v1477 = vsel %vm1467, nan, %v1476
    %v1478 = vand.u32 2147483647, %v309
    %vm1479 = vcmp.le.f32.partialorder %v1478, 0.7853982
    %vm1480 = vcmp.lt.s32.totalorder %v309, 0
    %v1481 = vand.u32 %v309, 2139095040
    %v1482 = vshrl.u32 %v1481, 23
    %v1483 = vsub.s32 %v1482, 127
    %v1484 = vand.u32 2147483647, %v309
    %v1485 = vand.u32 %v1484, 8388607
    %v1486 = vor.u32 %v1485, 8388608
    %v1487 = vsub.s32 0, %v1486
    %v1488 = vadd.s32 %v1483, 1
    %vm1489 = vcmp.gt.s32.totalorder %v1488, 0
    %v1490 = vsel %vm1489, %v1488, 0
    %v1491 = vshrl.u32 %v1490, 5
    %v1492 = vand.u32 %v1490, 31
    %v1493 = vsub.s32 32, %v1492
    %v1494 = vshrl.u32 683565275, %v1493
    %v1495 = vshll.u32 683565275, %v1492
    %v1496 = vshrl.u32 2475754826, %v1493
    %v1497 = vor.u32 %v1495, %v1496
    %v1498 = vshll.u32 2475754826, %v1492
    %v1499 = vshrl.u32 2131351028, %v1493
    %v1500 = vor.u32 %v1498, %v1499
    %v1501 = vshll.u32 2131351028, %v1492
    %v1502 = vshrl.u32 2102212464, %v1493
    %v1503 = vor.u32 %v1501, %v1502
    %v1504 = vshll.u32 2102212464, %v1492
    %v1505 = vshrl.u32 920167782, %v1493
    %v1506 = vor.u32 %v1504, %v1505
    %v1507 = vshll.u32 920167782, %v1492
    %v1508 = vshrl.u32 1326507024, %v1493
    %v1509 = vor.u32 %v1507, %v1508
    %vm1510 = vcmp.lt.s32.totalorder %v1491, 1
    %vm1511 = vcmp.lt.s32.totalorder %v1491, 2
    %vm1512 = vcmp.lt.s32.totalorder %v1491, 3
    %vm1513 = vcmp.lt.s32.totalorder %v1491, 4
    %v1514 = vsel %vm1510, %v1494, %v1497
    %v1515 = vsel %vm1513, %v1503, 2102212464
    %v1516 = vsel %vm1512, %v1500, %v1515
    %v1517 = vsel %vm1511, %v1514, %v1516
    %v1518 = vsel %vm1510, %v1497, %v1500
    %v1519 = vsel %vm1513, %v1506, 920167782
    %v1520 = vsel %vm1512, %v1503, %v1519
    %v1521 = vsel %vm1511, %v1518, %v1520
    %v1522 = vsel %vm1510, %v1500, %v1503
    %v1523 = vsel %vm1513, %v1509, 1326507024
    %v1524 = vsel %vm1512, %v1506, %v1523
    %v1525 = vsel %vm1511, %v1522, %v1524
    %v1526 = vshll.u32 %v1486, 8
    %v1527 = vand.u32 %v1526, 65535
    %v1528 = vshrl.u32 %v1526, 16
    %v1529 = vand.u32 %v1525, 65535
    %v1530 = vshrl.u32 %v1525, 16
    %v1531 = vmul.u32 %v1527, %v1529
    %v1532 = vmul.u32 %v1527, %v1530
    %v1533 = vmul.u32 %v1528, %v1529
    %v1534 = vmul.u32 %v1528, %v1530
    %v1535 = vshll.u32 %v1532, 16
    %v1536 = vshrl.u32 %v1532, 16
    %v1537 = vshll.u32 %v1533, 16
    %v1538 = vshrl.u32 %v1533, 16
    %vm1539 = vc.u32 %v1531, %v1535
    %v1540 = vsel %vm1539, 1, 0
    %v1541 = vadd.s32 %v1531, %v1535
    %v1542 = vadd.s32 %v1534, %v1540
    %vm1543 = vc.u32 %v1541, %v1537
    %v1544 = vsel %vm1543, 1, 0
    %v1545 = vadd.s32 %v1541, %v1537
    %v1546 = vadd.s32 %v1542, %v1544
    %v1547 = vadd.s32 %v1546, %v1536
    %v1548 = vadd.s32 %v1547, %v1538
    %v1549 = vand.u32 %v1526, 65535
    %v1550 = vshrl.u32 %v1526, 16
    %v1551 = vand.u32 %v1521, 65535
    %v1552 = vshrl.u32 %v1521, 16
    %v1553 = vmul.u32 %v1549, %v1551
    %v1554 = vmul.u32 %v1549, %v1552
    %v1555 = vmul.u32 %v1550, %v1551
    %v1556 = vmul.u32 %v1550, %v1552
    %v1557 = vshll.u32 %v1554, 16
    %v1558 = vshrl.u32 %v1554, 16
    %v1559 = vshll.u32 %v1555, 16
    %v1560 = vshrl.u32 %v1555, 16
    %vm1561 = vc.u32 %v1553, %v1557
    %v1562 = vsel %vm1561, 1, 0
    %v1563 = vadd.s32 %v1553, %v1557
    %v1564 = vadd.s32 %v1556, %v1562
    %vm1565 = vc.u32 %v1563, %v1559
    %v1566 = vsel %vm1565, 1, 0
    %v1567 = vadd.s32 %v1563, %v1559
    %v1568 = vadd.s32 %v1564, %v1566
    %v1569 = vadd.s32 %v1568, %v1558
    %v1570 = vadd.s32 %v1569, %v1560
    %v1571 = vmul.u32 %v1526, %v1517
    %v1572 = vadd.s32 %v1548, %v1567
    %vm1573 = vc.u32 %v1548, %v1567
    %v1574 = vadd.s32 %v1570, 1
    %v1575 = vsel %vm1573, %v1574, %v1570
    %v1576 = vadd.s32 %v1571, %v1575
    %v1577 = vadd.s32 %v1576, 536870912
    %v1578 = vshrl.u32 %v1577, 30
    %v1579 = vshll.u32 %v1578, 30
    %v1580 = vsub.s32 %v1576, %v1579
    %vm1581 = vcmp.lt.s32.totalorder %v1580, 0
    %v1582 = vsub.s32 0, %v1580
    %v1583 = vsel %vm1581, %v1582, %v1580
    %v1584 = vclz %v1583
    %v1585 = vsub.s32 %v1584, 2
    %vm1586 = vcmp.gt.s32.totalorder 0, %v1585
    %v1587 = vsel %vm1586, 0, %v1585
    %v1588 = vsub.s32 32, %v1587
    %v1589 = vshll.u32 %v1580, %v1587
    %v1590 = vshrl.u32 %v1572, %v1588
    %v1591 = vor.u32 %v1589, %v1590
    %v1592 = vsub.s32 4294967266, %v1587
    %v1593 = vadd.s32 %v1592, 127
    %v1594 = vshll.u32 %v1593, 23
    %v1595 = vor.u32 4788187, %v1594
    %v1596 = vand.u32 2147483647, %v1595
    %v1598 = vcvt.s32.f32 %v1591
    %v1599 = vmul.f32 %v1598, %v1596
    %v1600 = vxor.u32 %v1599, 2147483648
    %v1601 = vsel %vm1480, %v1600, %v1599
    %v1602 = vsub.s32 4, %v1578
    %v1603 = vsel %vm1480, %v1602, %v1578
    %v1604 = vsel %vm1479, %v309, %v1601
    %v1605 = vsel %vm1479, 0, %v1603
    %v1606 = vmul.f32 %v1604, %v1604
    %v1607 = vmul.f32 %v1606, -0.001358992
    %v1608 = vadd.f32 %v1607, 0.041655596
    %v1609 = vmul.f32 %v1606, %v1608
    %v1610 = vadd.f32 %v1609, -0.4999988
    %v1611 = vmul.f32 %v1606, %v1610
    %v1612 = vadd.f32 1.0, %v1611
    %v1613 = vmul.f32 %v1604, %v1604
    %v1614 = vmul.f32 %v1613, -0.00019511016
    %v1615 = vadd.f32 %v1614, 0.008332121
    %v1616 = vmul.f32 %v1613, %v1615
    %v1617 = vadd.f32 %v1616, -0.16666654
    %v1618 = vmul.f32 %v1613, %v1617
    %v1619 = vadd.f32 %v1618, 1.0
    %v1620 = vmul.f32 %v1619, %v1604
    %vm1621 = vweird.f32 %v309
    %v1622 = vand.u32 %v1605, 3
    %vm1623 = vcmp.lt.s32.totalorder %v1622, 2
    %vm1624 = vcmp.eq.s32.totalorder %v1622, 0
    %v1625 = vxor.u32 %v1620, 2147483648
    %v1626 = vsel %vm1624, %v1612, %v1625
    %vm1627 = vcmp.eq.s32.totalorder %v1622, 2
    %v1628 = vxor.u32 %v1612, 2147483648
    %v1629 = vsel %vm1627, %v1628, %v1620
    %v1630 = vsel %vm1623, %v1626, %v1629
    %v1631 = vsel %vm1621, nan, %v1630
    %1632 = vxpose.xlu0.b32.start [1/16] %v1012, 128
    %1633 = vxpose.xlu0.b32.cont [2/16] %v1013, 128
    %1634 = vxpose.xlu0.b32.cont [3/16] %v1014, 128
    %1635 = vxpose.xlu0.b32.cont [4/16] %v1015, 128
    %1636 = vxpose.xlu0.b32.cont [5/16] 0.0, 128
    %1637 = vxpose.xlu0.b32.cont [6/16] 0.0, 128
    %1638 = vxpose.xlu0.b32.cont [7/16] 0.0, 128
    %1639 = vxpose.xlu0.b32.cont [8/16] 0.0, 128
    %1640 = vxpose.xlu0.b32.cont [9/16] 0.0, 128
    %1641 = vxpose.xlu0.b32.cont [10/16] 0.0, 128
    %1642 = vxpose.xlu0.b32.cont [11/16] 0.0, 128
    %1643 = vxpose.xlu0.b32.cont [12/16] 0.0, 128
    %1644 = vxpose.xlu0.b32.cont [13/16] 0.0, 128
    %1645 = vxpose.xlu0.b32.cont [14/16] 0.0, 128
    %1646 = vxpose.xlu0.b32.cont [15/16] 0.0, 128
    %1647 = vxpose.xlu0.b32.end [16/16] 0.0, 128
    %v1648 = vpop.trf.xlu0
    %v1649 = vpop.trf.xlu0
    %v1650 = vpop.trf.xlu0
    %v1651 = vpop.trf.xlu0
    %v1652 = vpop.trf.xlu0
    %v1653 = vpop.trf.xlu0
    %v1654 = vpop.trf.xlu0
    %v1655 = vpop.trf.xlu0
    %v1656 = vpop.trf.xlu0
    %v1657 = vpop.trf.xlu0
    %v1658 = vpop.trf.xlu0
    %v1659 = vpop.trf.xlu0
    %v1660 = vpop.trf.xlu0
    %v1661 = vpop.trf.xlu0
    %v1662 = vpop.trf.xlu0
    %v1663 = vpop.trf.xlu0
    %v1665 = vsel %vm346, %v1648, 0
    %v1668 = vsel %vm346, %v1649, 0
    %v1671 = vsel %vm346, %v1650, 0
    %v1674 = vsel %vm346, %v1651, 0
    %v1677 = vsel %vm346, %v1652, 0
    %v1680 = vsel %vm346, %v1653, 0
    %v1683 = vsel %vm346, %v1654, 0
    %v1686 = vsel %vm346, %v1655, 0
    %1688 = vmatpush.msra.mxu0 0.0
    %1689 = vmatpush.msra.mxu0 0.0
    %1690 = vmatpush.msra.mxu0 0.0
    %1691 = vmatpush.msra.mxu0 0.0
    %1692 = vmatpush.msra.mxu0 0.0
    %1693 = vmatpush.msra.mxu0 0.0
    %1694 = vmatpush.msra.mxu0 0.0
    %1695 = vmatpush.msra.mxu0 0.0
    %1696 = vmatpush.msra.mxu0 0.0
    %1697 = vmatpush.msra.mxu0 0.0
    %1698 = vmatpush.msra.mxu0 0.0
    %1699 = vmatpush.msra.mxu0 0.0
    %1700 = vmatpush.msra.mxu0 %v1631
    %1701 = vmatpush.msra.mxu0 %v1477
    %1702 = vmatpush.msra.mxu0 %v1323
    %1703 = vmatpush.msra.mxu0 %v1169
    %1704 = vmatmul.f32.gmra.mxu0 %v1665
    %v1705 = vpop.f32.mrf.mxu0
    %v1706 = vadd.f32 0.0, %v1705
    %1707 = vmatmul.f32.gmra.mxu0 %v1668
    %v1708 = vpop.f32.mrf.mxu0
    %v1709 = vadd.f32 0.0, %v1708
    %1710 = vmatmul.f32.gmra.mxu0 %v1671
    %v1711 = vpop.f32.mrf.mxu0
    %v1712 = vadd.f32 0.0, %v1711
    %1713 = vmatmul.f32.gmra.mxu0 %v1674
    %v1714 = vpop.f32.mrf.mxu0
    %v1715 = vadd.f32 0.0, %v1714
    %1716 = vmatmul.f32.gmra.mxu0 %v1677
    %v1717 = vpop.f32.mrf.mxu0
    %v1718 = vadd.f32 0.0, %v1717
    %1719 = vmatmul.f32.gmra.mxu0 %v1680
    %v1720 = vpop.f32.mrf.mxu0
    %v1721 = vadd.f32 0.0, %v1720
    %1722 = vmatmul.f32.gmra.mxu0 %v1683
    %v1723 = vpop.f32.mrf.mxu0
    %v1724 = vadd.f32 0.0, %v1723
    %1725 = vmatmul.f32.gmra.mxu0 %v1686
    %v1726 = vpop.f32.mrf.mxu0
    %v1727 = vadd.f32 0.0, %v1726
    %1728 = vdwg.mxu0
    %1729 = vxpose.xlu0.b32.start [1/16] %v388, 128
    %1730 = vxpose.xlu0.b32.cont [2/16] %v389, 128
    %1731 = vxpose.xlu0.b32.cont [3/16] %v390, 128
    %1732 = vxpose.xlu0.b32.cont [4/16] %v391, 128
    %1733 = vxpose.xlu0.b32.cont [5/16] 0.0, 128
    %1734 = vxpose.xlu0.b32.cont [6/16] 0.0, 128
    %1735 = vxpose.xlu0.b32.cont [7/16] 0.0, 128
    %1736 = vxpose.xlu0.b32.cont [8/16] 0.0, 128
    %1737 = vxpose.xlu0.b32.cont [9/16] 0.0, 128
    %1738 = vxpose.xlu0.b32.cont [10/16] 0.0, 128
    %1739 = vxpose.xlu0.b32.cont [11/16] 0.0, 128
    %1740 = vxpose.xlu0.b32.cont [12/16] 0.0, 128
    %1741 = vxpose.xlu0.b32.cont [13/16] 0.0, 128
    %1742 = vxpose.xlu0.b32.cont [14/16] 0.0, 128
    %1743 = vxpose.xlu0.b32.cont [15/16] 0.0, 128
    %1744 = vxpose.xlu0.b32.end [16/16] 0.0, 128
    %v1745 = vpop.trf.xlu0
    %v1746 = vpop.trf.xlu0
    %v1747 = vpop.trf.xlu0
    %v1748 = vpop.trf.xlu0
    %v1749 = vpop.trf.xlu0
    %v1750 = vpop.trf.xlu0
    %v1751 = vpop.trf.xlu0
    %v1752 = vpop.trf.xlu0
    %v1753 = vpop.trf.xlu0
    %v1754 = vpop.trf.xlu0
    %v1755 = vpop.trf.xlu0
    %v1756 = vpop.trf.xlu0
    %v1757 = vpop.trf.xlu0
    %v1758 = vpop.trf.xlu0
    %v1759 = vpop.trf.xlu0
    %v1760 = vpop.trf.xlu0
    %v1762 = vsel %vm346, %v1745, 0
    %v1765 = vsel %vm346, %v1746, 0
    %v1768 = vsel %vm346, %v1747, 0
    %v1771 = vsel %vm346, %v1748, 0
    %v1774 = vsel %vm346, %v1749, 0
    %v1777 = vsel %vm346, %v1750, 0
    %v1780 = vsel %vm346, %v1751, 0
    %v1783 = vsel %vm346, %v1752, 0
    %1785 = vmatpush.msra.mxu0 0.0
    %1786 = vmatpush.msra.mxu0 0.0
    %1787 = vmatpush.msra.mxu0 0.0
    %1788 = vmatpush.msra.mxu0 0.0
    %1789 = vmatpush.msra.mxu0 0.0
    %1790 = vmatpush.msra.mxu0 0.0
    %1791 = vmatpush.msra.mxu0 0.0
    %1792 = vmatpush.msra.mxu0 0.0
    %1793 = vmatpush.msra.mxu0 0.0
    %1794 = vmatpush.msra.mxu0 0.0
    %1795 = vmatpush.msra.mxu0 0.0
    %1796 = vmatpush.msra.mxu0 0.0
    %1797 = vmatpush.msra.mxu0 %v1011
    %1798 = vmatpush.msra.mxu0 %v856
    %1799 = vmatpush.msra.mxu0 %v701
    %1800 = vmatpush.msra.mxu0 %v546
    %1801 = vmatmul.f32.gmra.mxu0 %v1762
    %v1802 = vpop.f32.mrf.mxu0
    %v1803 = vadd.f32 %v1706, %v1802
    %1804 = vmatmul.f32.gmra.mxu0 %v1765
    %v1805 = vpop.f32.mrf.mxu0
    %v1806 = vadd.f32 %v1709, %v1805
    %1807 = vmatmul.f32.gmra.mxu0 %v1768
    %v1808 = vpop.f32.mrf.mxu0
    %v1809 = vadd.f32 %v1712, %v1808
    %1810 = vmatmul.f32.gmra.mxu0 %v1771
    %v1811 = vpop.f32.mrf.mxu0
    %v1812 = vadd.f32 %v1715, %v1811
    %1813 = vmatmul.f32.gmra.mxu0 %v1774
    %v1814 = vpop.f32.mrf.mxu0
    %v1815 = vadd.f32 %v1718, %v1814
    %1816 = vmatmul.f32.gmra.mxu0 %v1777
    %v1817 = vpop.f32.mrf.mxu0
    %v1818 = vadd.f32 %v1721, %v1817
    %1819 = vmatmul.f32.gmra.mxu0 %v1780
    %v1820 = vpop.f32.mrf.mxu0
    %v1821 = vadd.f32 %v1724, %v1820
    %1822 = vmatmul.f32.gmra.mxu0 %v1783
    %v1823 = vpop.f32.mrf.mxu0
    %v1824 = vadd.f32 %v1727, %v1823
    %1825 = vdwg.mxu0
    %v1826 = vld [vmem:[%s3 + $0xc8] sm:$0xff]
    %1827 = vxpose.xlu0.b32.start [1/16] %v1826, 128
    %1828 = vxpose.xlu0.b32.cont [2/16] 0.0, 128
    %1829 = vxpose.xlu0.b32.cont [3/16] 0.0, 128
    %1830 = vxpose.xlu0.b32.cont [4/16] 0.0, 128
    %1831 = vxpose.xlu0.b32.cont [5/16] 0.0, 128
    %1832 = vxpose.xlu0.b32.cont [6/16] 0.0, 128
    %1833 = vxpose.xlu0.b32.cont [7/16] 0.0, 128
    %1834 = vxpose.xlu0.b32.cont [8/16] 0.0, 128
    %1835 = vxpose.xlu0.b32.cont [9/16] 0.0, 128
    %1836 = vxpose.xlu0.b32.cont [10/16] 0.0, 128
    %1837 = vxpose.xlu0.b32.cont [11/16] 0.0, 128
    %1838 = vxpose.xlu0.b32.cont [12/16] 0.0, 128
    %1839 = vxpose.xlu0.b32.cont [13/16] 0.0, 128
    %1840 = vxpose.xlu0.b32.cont [14/16] 0.0, 128
    %1841 = vxpose.xlu0.b32.cont [15/16] 0.0, 128
    %1842 = vxpose.xlu0.b32.end [16/16] 0.0, 128
    %v1843 = vpop.trf.xlu0
    %v1844 = vpop.trf.xlu0
    %v1845 = vpop.trf.xlu0
    %v1846 = vpop.trf.xlu0
    %v1847 = vpop.trf.xlu0
    %v1848 = vpop.trf.xlu0
    %v1849 = vpop.trf.xlu0
    %v1850 = vpop.trf.xlu0
    %v1851 = vpop.trf.xlu0
    %v1852 = vpop.trf.xlu0
    %v1853 = vpop.trf.xlu0
    %v1854 = vpop.trf.xlu0
    %v1855 = vpop.trf.xlu0
    %v1856 = vpop.trf.xlu0
    %v1857 = vpop.trf.xlu0
    %v1858 = vpop.trf.xlu0
    %vm1859 = vcmask 64512
    %v1861 = vsel %vm1859, %v1843, 0
    %v1864 = vsel %vm1859, %v1844, 0
    %v1867 = vsel %vm1859, %v1845, 0
    %v1870 = vsel %vm1859, %v1846, 0
    %v1873 = vsel %vm1859, %v1847, 0
    %v1876 = vsel %vm1859, %v1848, 0
    %v1879 = vsel %vm1859, %v1849, 0
    %v1882 = vsel %vm1859, %v1850, 0
    %1884 = vmatpush.msra.mxu0 0.0
    %1885 = vmatpush.msra.mxu0 0.0
    %1886 = vmatpush.msra.mxu0 0.0
    %1887 = vmatpush.msra.mxu0 0.0
    %1888 = vmatpush.msra.mxu0 0.0
    %1889 = vmatpush.msra.mxu0 0.0
    %1890 = vmatpush.msra.mxu0 0.0
    %1891 = vmatpush.msra.mxu0 0.0
    %1892 = vmatpush.msra.mxu0 0.0
    %1893 = vmatpush.msra.mxu0 0.0
    %1894 = vmatpush.msra.mxu0 0.0
    %1895 = vmatpush.msra.mxu0 0.0
    %1896 = vmatpush.msra.mxu0 0.0
    %1897 = vmatpush.msra.mxu0 0.0
    %1898 = vmatpush.msra.mxu0 0.0
    %1899 = vmatpush.msra.mxu0 %v259
    %1900 = vmatmul.f32.gmra.mxu0 %v1861
    %v1901 = vpop.f32.mrf.mxu0
    %v1902 = vadd.f32 0.0, %v1901
    %1903 = vmatmul.f32.gmra.mxu0 %v1864
    %v1904 = vpop.f32.mrf.mxu0
    %v1905 = vadd.f32 0.0, %v1904
    %1906 = vmatmul.f32.gmra.mxu0 %v1867
    %v1907 = vpop.f32.mrf.mxu0
    %v1908 = vadd.f32 0.0, %v1907
    %1909 = vmatmul.f32.gmra.mxu0 %v1870
    %v1910 = vpop.f32.mrf.mxu0
    %v1911 = vadd.f32 0.0, %v1910
    %1912 = vmatmul.f32.gmra.mxu0 %v1873
    %v1913 = vpop.f32.mrf.mxu0
    %v1914 = vadd.f32 0.0, %v1913
    %1915 = vmatmul.f32.gmra.mxu0 %v1876
    %v1916 = vpop.f32.mrf.mxu0
    %v1917 = vadd.f32 0.0, %v1916
    %1918 = vmatmul.f32.gmra.mxu0 %v1879
    %v1919 = vpop.f32.mrf.mxu0
    %v1920 = vadd.f32 0.0, %v1919
    %1921 = vmatmul.f32.gmra.mxu0 %v1882
    %v1922 = vpop.f32.mrf.mxu0
    %v1923 = vadd.f32 0.0, %v1922
    %1924 = vdwg.mxu0
    %v1925 = vadd.f32 %v1803, %v1902
    %v1926 = vadd.f32 %v1806, %v1905
    %v1927 = vadd.f32 %v1809, %v1908
    %v1928 = vadd.f32 %v1812, %v1911
    %v1929 = vadd.f32 %v1815, %v1914
    %v1930 = vadd.f32 %v1818, %v1917
    %v1931 = vadd.f32 %v1821, %v1920
    %v1932 = vadd.f32 %v1824, %v1923
    %v1933 = vld [vmem:[%s3 + $0xf0] sm:$0xff]
    %v1934 = vld [vmem:[%s3 + $0xf8] sm:$0xff]
    %v1935 = vld [vmem:[%s3 + $0x100] sm:$0xff]
    %v1936 = vld [vmem:[%s3 + $0x108] sm:$0xff]
    %1937 = vxpose.xlu0.b32.start [1/16] %v1933, 128
    %1938 = vxpose.xlu0.b32.cont [2/16] %v1934, 128
    %1939 = vxpose.xlu0.b32.cont [3/16] %v1935, 128
    %1940 = vxpose.xlu0.b32.cont [4/16] %v1936, 128
    %1941 = vxpose.xlu0.b32.cont [5/16] 0.0, 128
    %1942 = vxpose.xlu0.b32.cont [6/16] 0.0, 128
    %1943 = vxpose.xlu0.b32.cont [7/16] 0.0, 128
    %1944 = vxpose.xlu0.b32.cont [8/16] 0.0, 128
    %1945 = vxpose.xlu0.b32.cont [9/16] 0.0, 128
    %1946 = vxpose.xlu0.b32.cont [10/16] 0.0, 128
    %1947 = vxpose.xlu0.b32.cont [11/16] 0.0, 128
    %1948 = vxpose.xlu0.b32.cont [12/16] 0.0, 128
    %1949 = vxpose.xlu0.b32.cont [13/16] 0.0, 128
    %1950 = vxpose.xlu0.b32.cont [14/16] 0.0, 128
    %1951 = vxpose.xlu0.b32.cont [15/16] 0.0, 128
    %1952 = vxpose.xlu0.b32.end [16/16] 0.0, 128
    %v1953 = vpop.trf.xlu0
    %v1954 = vpop.trf.xlu0
    %v1955 = vpop.trf.xlu0
    %v1956 = vpop.trf.xlu0
    %v1957 = vpop.trf.xlu0
    %v1958 = vpop.trf.xlu0
    %v1959 = vpop.trf.xlu0
    %v1960 = vpop.trf.xlu0
    %v1961 = vpop.trf.xlu0
    %v1962 = vpop.trf.xlu0
    %v1963 = vpop.trf.xlu0
    %v1964 = vpop.trf.xlu0
    %v1965 = vpop.trf.xlu0
    %v1966 = vpop.trf.xlu0
    %v1967 = vpop.trf.xlu0
    %v1968 = vpop.trf.xlu0
    %v1970 = vsel %vm346, %v1953, 0
    %v1973 = vsel %vm346, %v1954, 0
    %v1976 = vsel %vm346, %v1955, 0
    %v1979 = vsel %vm346, %v1956, 0
    %v1982 = vsel %vm346, %v1957, 0
    %v1985 = vsel %vm346, %v1958, 0
    %v1988 = vsel %vm346, %v1959, 0
    %v1991 = vsel %vm346, %v1960, 0
    %1993 = vmatpush.msra.mxu0 0.0
    %1994 = vmatpush.msra.mxu0 0.0
    %1995 = vmatpush.msra.mxu0 0.0
    %1996 = vmatpush.msra.mxu0 0.0
    %1997 = vmatpush.msra.mxu0 0.0
    %1998 = vmatpush.msra.mxu0 0.0
    %1999 = vmatpush.msra.mxu0 0.0
    %2000 = vmatpush.msra.mxu0 0.0
    %2001 = vmatpush.msra.mxu0 0.0
    %2002 = vmatpush.msra.mxu0 0.0
    %2003 = vmatpush.msra.mxu0 0.0
    %2004 = vmatpush.msra.mxu0 0.0
    %2005 = vmatpush.msra.mxu0 %v386
    %2006 = vmatpush.msra.mxu0 %v383
    %2007 = vmatpush.msra.mxu0 %v380
    %2008 = vmatpush.msra.mxu0 %v377
    %2009 = vmatmul.f32.gmra.mxu0 %v1970
    %v2010 = vpop.f32.mrf.mxu0
    %v2011 = vadd.f32 0.0, %v2010
    %2012 = vmatmul.f32.gmra.mxu0 %v1973
    %v2013 = vpop.f32.mrf.mxu0
    %v2014 = vadd.f32 0.0, %v2013
    %2015 = vmatmul.f32.gmra.mxu0 %v1976
    %v2016 = vpop.f32.mrf.mxu0
    %v2017 = vadd.f32 0.0, %v2016
    %2018 = vmatmul.f32.gmra.mxu0 %v1979
    %v2019 = vpop.f32.mrf.mxu0
    %v2020 = vadd.f32 0.0, %v2019
    %2021 = vmatmul.f32.gmra.mxu0 %v1982
    %v2022 = vpop.f32.mrf.mxu0
    %v2023 = vadd.f32 0.0, %v2022
    %2024 = vmatmul.f32.gmra.mxu0 %v1985
    %v2025 = vpop.f32.mrf.mxu0
    %v2026 = vadd.f32 0.0, %v2025
    %2027 = vmatmul.f32.gmra.mxu0 %v1988
    %v2028 = vpop.f32.mrf.mxu0
    %v2029 = vadd.f32 0.0, %v2028
    %2030 = vmatmul.f32.gmra.mxu0 %v1991
    %v2031 = vpop.f32.mrf.mxu0
    %v2032 = vadd.f32 0.0, %v2031
    %2033 = vdwg.mxu0
    %v2034 = vadd.f32 %v1925, %v2011
    %v2035 = vadd.f32 %v1926, %v2014
    %v2036 = vadd.f32 %v1927, %v2017
    %v2037 = vadd.f32 %v1928, %v2020
    %v2038 = vadd.f32 %v1929, %v2023
    %v2039 = vadd.f32 %v1930, %v2026
    %v2040 = vadd.f32 %v1931, %v2029
    %v2041 = vadd.f32 %v1932, %v2032
    %2043 = vset.pattern.permute.xlu0 0
    %2044 = vperm.xlu0 %2043, %v264
    %v2045 = vpop.permute.xlu0 %2044
    %2048 = vset.pattern.permute.xlu0 0
    %2049 = vperm.xlu0 %2048, %v265
    %v2050 = vpop.permute.xlu0 %2049
    %2053 = vset.pattern.permute.xlu0 0
    %2054 = vperm.xlu0 %2053, %v266
    %v2055 = vpop.permute.xlu0 %2054
    %2058 = vset.pattern.permute.xlu0 0
    %2059 = vperm.xlu0 %2058, %v267
    %v2060 = vpop.permute.xlu0 %2059
    %2063 = vset.pattern.permute.xlu0 0
    %2064 = vperm.xlu0 %2063, %v268
    %v2065 = vpop.permute.xlu0 %2064
    %2068 = vset.pattern.permute.xlu0 0
    %2069 = vperm.xlu0 %2068, %v269
    %v2070 = vpop.permute.xlu0 %2069
    %2073 = vset.pattern.permute.xlu0 0
    %2074 = vperm.xlu0 %2073, %v270
    %v2075 = vpop.permute.xlu0 %2074
    %2078 = vset.pattern.permute.xlu0 0
    %2079 = vperm.xlu0 %2078, %v271
    %v2080 = vpop.permute.xlu0 %2079
    %v2082 = vadd.f32 %v2034, %v2045
    %v2083 = vadd.f32 %v2035, %v2050
    %v2084 = vadd.f32 %v2036, %v2055
    %v2085 = vadd.f32 %v2037, %v2060
    %v2086 = vadd.f32 %v2038, %v2065
    %v2087 = vadd.f32 %v2039, %v2070
    %v2088 = vadd.f32 %v2040, %v2075
    %v2089 = vadd.f32 %v2041, %v2080
    %2091 = vset.pattern.permute.xlu0 0
    %2092 = vperm.xlu0 %2091, %v272
    %v2093 = vpop.permute.xlu0 %2092
    %2096 = vset.pattern.permute.xlu0 0
    %2097 = vperm.xlu0 %2096, %v273
    %v2098 = vpop.permute.xlu0 %2097
    %2101 = vset.pattern.permute.xlu0 0
    %2102 = vperm.xlu0 %2101, %v274
    %v2103 = vpop.permute.xlu0 %2102
    %2106 = vset.pattern.permute.xlu0 0
    %2107 = vperm.xlu0 %2106, %v275
    %v2108 = vpop.permute.xlu0 %2107
    %2111 = vset.pattern.permute.xlu0 0
    %2112 = vperm.xlu0 %2111, %v276
    %v2113 = vpop.permute.xlu0 %2112
    %2116 = vset.pattern.permute.xlu0 0
    %2117 = vperm.xlu0 %2116, %v277
    %v2118 = vpop.permute.xlu0 %2117
    %2121 = vset.pattern.permute.xlu0 0
    %2122 = vperm.xlu0 %2121, %v278
    %v2123 = vpop.permute.xlu0 %2122
    %2126 = vset.pattern.permute.xlu0 0
    %2127 = vperm.xlu0 %2126, %v279
    %v2128 = vpop.permute.xlu0 %2127
    %v2130 = vadd.f32 %v2082, %v2093
    %v2131 = vadd.f32 %v2083, %v2098
    %v2132 = vadd.f32 %v2084, %v2103
    %v2133 = vadd.f32 %v2085, %v2108
    %v2134 = vadd.f32 %v2086, %v2113
    %v2135 = vadd.f32 %v2087, %v2118
    %v2136 = vadd.f32 %v2088, %v2123
    %v2137 = vadd.f32 %v2089, %v2128
    %v2138 = vld [vmem:[%s2] sm:$0xff]
    %v2139 = vld [vmem:[%s2 + $0x8] sm:$0xff]
    %v2140 = vld [vmem:[%s3] sm:$0xff]
    %v2141 = vld [vmem:[%s3 + $0x8] sm:$0xff]
    %v2142 = vld [vmem:[%s3 + $0x10] sm:$0xff]
    %v2143 = vld [vmem:[%s3 + $0x18] sm:$0xff]
    %v2144 = vld [vmem:[%s3 + $0x20] sm:$0xff]
    %v2145 = vld [vmem:[%s3 + $0x28] sm:$0xff]
    %v2146 = vld [vmem:[%s3 + $0x30] sm:$0xff]
    %v2147 = vld [vmem:[%s3 + $0x38] sm:$0xff]
    %vm2148 = vcmask 523264
    %v2150 = vsel %vm2148, %v2138, 0
    %v2153 = vsel %vm2148, %v2139, 0
    %2155 = vmatpush.msra.mxu0 0.0
    %2156 = vmatpush.msra.mxu0 0.0
    %2157 = vmatpush.msra.mxu0 0.0
    %2158 = vmatpush.msra.mxu0 0.0
    %2159 = vmatpush.msra.mxu0 0.0
    %2160 = vmatpush.msra.mxu0 0.0
    %2161 = vmatpush.msra.mxu0 0.0
    %2162 = vmatpush.msra.mxu0 0.0
    %2163 = vmatpush.msra.mxu0 %v2147
    %2164 = vmatpush.msra.mxu0 %v2146
    %2165 = vmatpush.msra.mxu0 %v2145
    %2166 = vmatpush.msra.mxu0 %v2144
    %2167 = vmatpush.msra.mxu0 %v2143
    %2168 = vmatpush.msra.mxu0 %v2142
    %2169 = vmatpush.msra.mxu0 %v2141
    %2170 = vmatpush.msra.mxu0 %v2140
    %2171 = vmatmul.f32.gmra.mxu0 %v2150
    %v2172 = vpop.f32.mrf.mxu0
    %v2173 = vadd.f32 0.0, %v2172
    %2174 = vmatmul.f32.gmra.mxu0 %v2153
    %v2175 = vpop.f32.mrf.mxu0
    %v2176 = vadd.f32 0.0, %v2175
    %2177 = vdwg.mxu0
    %v2178 = vld [vmem:[%s3 + $0x40] sm:$0xff]
    %v2180 = vsel %vm2148, %v2178, 0
    %v2183 = vsel %vm2148, %v2173, 0
    %2185 = vmatpush.xpose.msra.mxu0 0.0
    %2186 = vmatpush.xpose.msra.mxu0 0.0
    %2187 = vmatpush.xpose.msra.mxu0 0.0
    %2188 = vmatpush.xpose.msra.mxu0 0.0
    %2189 = vmatpush.xpose.msra.mxu0 0.0
    %2190 = vmatpush.xpose.msra.mxu0 0.0
    %2191 = vmatpush.xpose.msra.mxu0 0.0
    %2192 = vmatpush.xpose.msra.mxu0 0.0
    %2193 = vmatpush.xpose.msra.mxu0 0.0
    %2194 = vmatpush.xpose.msra.mxu0 0.0
    %2195 = vmatpush.xpose.msra.mxu0 0.0
    %2196 = vmatpush.xpose.msra.mxu0 0.0
    %2197 = vmatpush.xpose.msra.mxu0 0.0
    %2198 = vmatpush.xpose.msra.mxu0 0.0
    %2199 = vmatpush.xpose.msra.mxu0 0.0
    %2200 = vmatpush.xpose.msra.mxu0 %v2183
    %2201 = vmatmul.f32.gmra.mxu0 %v2180
    %v2202 = vpop.f32.mrf.mxu0
    %v2203 = vadd.f32 0.0, %v2202
    %2204 = vdwg.mxu0
    %v2205 = vmul.f32 %v2203, 0.125
    %v2206 = vsel %vm1859, %v2205, -inf
    %2207 = vmax.xlane.f32.xlu0 %v2206
    %v2208 = vpop.xlane.xlu0 %2207
    %v2209 = vsub.f32 %v2205, %v2208
    %v2210 = vmul.f32 %v2209, 1.442695
    %v2211 = vpow.pop %v2210
    %v2212 = vsel %vm1859, %v2211, 0.0
    %2213 = vadd.xlane.f32.xlu0 %v2212
    %v2214 = vpop.xlane.xlu0 %2213
    %v2215 = vrcp.pop %v2214
    %v2216 = vmul.f32 %v2211, %v2215
    %v2218 = vsel %vm1859, %v2216, 0
    %2220 = vmatpush.msra.mxu0 0.0
    %2221 = vmatpush.msra.mxu0 0.0
    %2222 = vmatpush.msra.mxu0 0.0
    %2223 = vmatpush.msra.mxu0 0.0
    %2224 = vmatpush.msra.mxu0 0.0
    %2225 = vmatpush.msra.mxu0 0.0
    %2226 = vmatpush.msra.mxu0 0.0
    %2227 = vmatpush.msra.mxu0 0.0
    %2228 = vmatpush.msra.mxu0 0.0
    %2229 = vmatpush.msra.mxu0 0.0
    %2230 = vmatpush.msra.mxu0 0.0
    %2231 = vmatpush.msra.mxu0 0.0
    %2232 = vmatpush.msra.mxu0 0.0
    %2233 = vmatpush.msra.mxu0 0.0
    %2234 = vmatpush.msra.mxu0 0.0
    %2235 = vmatpush.msra.mxu0 %v2173
    %2236 = vmatmul.f32.gmra.mxu0 %v2218
    %v2237 = vpop.f32.mrf.mxu0
    %v2238 = vadd.f32 0.0, %v2237
    %2239 = vdwg.mxu0
    %v2241 = vsel %vm2148, %v2176, 0
    %2243 = vmatpush.xpose.msra.mxu0 0.0
    %2244 = vmatpush.xpose.msra.mxu0 0.0
    %2245 = vmatpush.xpose.msra.mxu0 0.0
    %2246 = vmatpush.xpose.msra.mxu0 0.0
    %2247 = vmatpush.xpose.msra.mxu0 0.0
    %2248 = vmatpush.xpose.msra.mxu0 0.0
    %2249 = vmatpush.xpose.msra.mxu0 0.0
    %2250 = vmatpush.xpose.msra.mxu0 0.0
    %2251 = vmatpush.xpose.msra.mxu0 0.0
    %2252 = vmatpush.xpose.msra.mxu0 0.0
    %2253 = vmatpush.xpose.msra.mxu0 0.0
    %2254 = vmatpush.xpose.msra.mxu0 0.0
    %2255 = vmatpush.xpose.msra.mxu0 0.0
    %2256 = vmatpush.xpose.msra.mxu0 0.0
    %2257 = vmatpush.xpose.msra.mxu0 0.0
    %2258 = vmatpush.xpose.msra.mxu0 %v2241
    %2259 = vmatmul.f32.gmra.mxu0 %v2180
    %v2260 = vpop.f32.mrf.mxu0
    %v2261 = vadd.f32 0.0, %v2260
    %2262 = vdwg.mxu0
    %v2263 = vmul.f32 %v2261, 0.125
    %v2264 = vsel %vm1859, %v2263, -inf
    %2265 = vmax.xlane.f32.xlu0 %v2264
    %v2266 = vpop.xlane.xlu0 %2265
    %v2267 = vsub.f32 %v2263, %v2266
    %v2268 = vmul.f32 %v2267, 1.442695
    %v2269 = vpow.pop %v2268
    %v2270 = vsel %vm1859, %v2269, 0.0
    %2271 = vadd.xlane.f32.xlu0 %v2270
    %v2272 = vpop.xlane.xlu0 %2271
    %v2273 = vrcp.pop %v2272
    %v2274 = vmul.f32 %v2269, %v2273
    %v2276 = vsel %vm1859, %v2274, 0
    %2278 = vmatpush.msra.mxu0 0.0
    %2279 = vmatpush.msra.mxu0 0.0
    %2280 = vmatpush.msra.mxu0 0.0
    %2281 = vmatpush.msra.mxu0 0.0
    %2282 = vmatpush.msra.mxu0 0.0
    %2283 = vmatpush.msra.mxu0 0.0
    %2284 = vmatpush.msra.mxu0 0.0
    %2285 = vmatpush.msra.mxu0 0.0
    %2286 = vmatpush.msra.mxu0 0.0
    %2287 = vmatpush.msra.mxu0 0.0
    %2288 = vmatpush.msra.mxu0 0.0
    %2289 = vmatpush.msra.mxu0 0.0
    %2290 = vmatpush.msra.mxu0 0.0
    %2291 = vmatpush.msra.mxu0 0.0
    %2292 = vmatpush.msra.mxu0 0.0
    %2293 = vmatpush.msra.mxu0 %v2176
    %2294 = vmatmul.f32.gmra.mxu0 %v2276
    %v2295 = vpop.f32.mrf.mxu0
    %v2296 = vadd.f32 0.0, %v2295
    %2297 = vdwg.mxu0
    %v2298 = vld [vmem:[%s3 + $0x48] sm:$0xff]
    %v2299 = vld [vmem:[%s3 + $0x50] sm:$0xff]
    %v2300 = vld [vmem:[%s3 + $0x58] sm:$0xff]
    %v2301 = vld [vmem:[%s3 + $0x60] sm:$0xff]
    %v2302 = vld [vmem:[%s3 + $0x68] sm:$0xff]
    %v2303 = vld [vmem:[%s3 + $0x70] sm:$0xff]
    %v2304 = vld [vmem:[%s3 + $0x78] sm:$0xff]
    %v2305 = vld [vmem:[%s3 + $0x80] sm:$0xff]
    %v2307 = vsel %vm2148, %v2238, 0
    %v2310 = vsel %vm2148, %v2296, 0
    %2312 = vmatpush.msra.mxu0 0.0
    %2313 = vmatpush.msra.mxu0 0.0
    %2314 = vmatpush.msra.mxu0 0.0
    %2315 = vmatpush.msra.mxu0 0.0
    %2316 = vmatpush.msra.mxu0 0.0
    %2317 = vmatpush.msra.mxu0 0.0
    %2318 = vmatpush.msra.mxu0 0.0
    %2319 = vmatpush.msra.mxu0 0.0
    %2320 = vmatpush.msra.mxu0 %v2305
    %2321 = vmatpush.msra.mxu0 %v2304
    %2322 = vmatpush.msra.mxu0 %v2303
    %2323 = vmatpush.msra.mxu0 %v2302
    %2324 = vmatpush.msra.mxu0 %v2301
    %2325 = vmatpush.msra.mxu0 %v2300
    %2326 = vmatpush.msra.mxu0 %v2299
    %2327 = vmatpush.msra.mxu0 %v2298
    %2328 = vmatmul.f32.gmra.mxu0 %v2307
    %v2329 = vpop.f32.mrf.mxu0
    %v2330 = vadd.f32 0.0, %v2329
    %2331 = vmatmul.f32.gmra.mxu0 %v2310
    %v2332 = vpop.f32.mrf.mxu0
    %v2333 = vadd.f32 0.0, %v2332
    %2334 = vdwg.mxu0
    %v2335 = vld [vmem:[%s3 + $0x178] sm:$0xff]
    %v2336 = vld [vmem:[%s3 + $0x180] sm:$0xff]
    %v2337 = vld [vmem:[%s3 + $0x188] sm:$0xff]
    %v2338 = vld [vmem:[%s3 + $0x190] sm:$0xff]
    %v2339 = vld [vmem:[%s3 + $0x198] sm:$0xff]
    %v2340 = vld [vmem:[%s3 + $0x1a0] sm:$0xff]
    %v2341 = vld [vmem:[%s3 + $0x1a8] sm:$0xff]
    %v2342 = vld [vmem:[%s3 + $0x1b0] sm:$0xff]
    %v2344 = vsel %vm2148, %v2330, 0
    %v2347 = vsel %vm2148, %v2333, 0
    %2349 = vmatpush.msra.mxu0 0.0
    %2350 = vmatpush.msra.mxu0 0.0
    %2351 = vmatpush.msra.mxu0 0.0
    %2352 = vmatpush.msra.mxu0 0.0
    %2353 = vmatpush.msra.mxu0 0.0
    %2354 = vmatpush.msra.mxu0 0.0
    %2355 = vmatpush.msra.mxu0 0.0
    %2356 = vmatpush.msra.mxu0 0.0
    %2357 = vmatpush.msra.mxu0 %v2342
    %2358 = vmatpush.msra.mxu0 %v2341
    %2359 = vmatpush.msra.mxu0 %v2340
    %2360 = vmatpush.msra.mxu0 %v2339
    %2361 = vmatpush.msra.mxu0 %v2338
    %2362 = vmatpush.msra.mxu0 %v2337
    %2363 = vmatpush.msra.mxu0 %v2336
    %2364 = vmatpush.msra.mxu0 %v2335
    %2365 = vmatmul.f32.gmra.mxu0 %v2344
    %v2366 = vpop.f32.mrf.mxu0
    %v2367 = vadd.f32 0.0, %v2366
    %2368 = vmatmul.f32.gmra.mxu0 %v2347
    %v2369 = vpop.f32.mrf.mxu0
    %v2370 = vadd.f32 0.0, %v2369
    %2371 = vdwg.mxu0
    %v2372 = vld [vmem:[%s3 + $0x110] sm:$0xff]
    %v2373 = vld [vmem:[%s0] sm:$0xff]
    %v2374 = vld [vmem:[%s0 + $0x8] sm:$0xff]
    %v2375 = vld [vmem:[%s0 + $0x10] sm:$0xff]
    %v2376 = vld [vmem:[%s0 + $0x18] sm:$0xff]
    %2378 = vset.pattern.permute.xlu0 0
    %2379 = vperm.xlu0 %2378, %v2130
    %v2380 = vpop.permute.xlu0 %2379
    %2383 = vset.pattern.permute.xlu0 0
    %2384 = vperm.xlu0 %2383, %v2131
    %v2385 = vpop.permute.xlu0 %2384
    %2388 = vset.pattern.permute.xlu0 0
    %2389 = vperm.xlu0 %2388, %v2132
    %v2390 = vpop.permute.xlu0 %2389
    %2393 = vset.pattern.permute.xlu0 0
    %2394 = vperm.xlu0 %2393, %v2133
    %v2395 = vpop.permute.xlu0 %2394
    %2398 = vset.pattern.permute.xlu0 0
    %2399 = vperm.xlu0 %2398, %v2134
    %v2400 = vpop.permute.xlu0 %2399
    %2403 = vset.pattern.permute.xlu0 0
    %2404 = vperm.xlu0 %2403, %v2135
    %v2405 = vpop.permute.xlu0 %2404
    %2408 = vset.pattern.permute.xlu0 0
    %2409 = vperm.xlu0 %2408, %v2136
    %v2410 = vpop.permute.xlu0 %2409
    %2413 = vset.pattern.permute.xlu0 0
    %2414 = vperm.xlu0 %2413, %v2137
    %v2415 = vpop.permute.xlu0 %2414
    %2417 = vset.pattern.permute.xlu0 1
    %2418 = vperm.xlu0 %2417, %v2130
    %v2419 = vpop.permute.xlu0 %2418
    %2421 = vset.pattern.permute.xlu0 1
    %2422 = vperm.xlu0 %2421, %v2131
    %v2423 = vpop.permute.xlu0 %2422
    %2425 = vset.pattern.permute.xlu0 1
    %2426 = vperm.xlu0 %2425, %v2132
    %v2427 = vpop.permute.xlu0 %2426
    %2429 = vset.pattern.permute.xlu0 1
    %2430 = vperm.xlu0 %2429, %v2133
    %v2431 = vpop.permute.xlu0 %2430
    %2433 = vset.pattern.permute.xlu0 1
    %2434 = vperm.xlu0 %2433, %v2134
    %v2435 = vpop.permute.xlu0 %2434
    %2437 = vset.pattern.permute.xlu0 1
    %2438 = vperm.xlu0 %2437, %v2135
    %v2439 = vpop.permute.xlu0 %2438
    %2441 = vset.pattern.permute.xlu0 1
    %2442 = vperm.xlu0 %2441, %v2136
    %v2443 = vpop.permute.xlu0 %2442
    %2445 = vset.pattern.permute.xlu0 1
    %2446 = vperm.xlu0 %2445, %v2137
    %v2447 = vpop.permute.xlu0 %2446
    %2449 = vxpose.xlu0.b32.start [1/16] %v2372, 128
    %2450 = vxpose.xlu0.b32.cont [2/16] 0.0, 128
    %2451 = vxpose.xlu0.b32.cont [3/16] 0.0, 128
    %2452 = vxpose.xlu0.b32.cont [4/16] 0.0, 128
    %2453 = vxpose.xlu0.b32.cont [5/16] 0.0, 128
    %2454 = vxpose.xlu0.b32.cont [6/16] 0.0, 128
    %2455 = vxpose.xlu0.b32.cont [7/16] 0.0, 128
    %2456 = vxpose.xlu0.b32.cont [8/16] 0.0, 128
    %2457 = vxpose.xlu0.b32.cont [9/16] 0.0, 128
    %2458 = vxpose.xlu0.b32.cont [10/16] 0.0, 128
    %2459 = vxpose.xlu0.b32.cont [11/16] 0.0, 128
    %2460 = vxpose.xlu0.b32.cont [12/16] 0.0, 128
    %2461 = vxpose.xlu0.b32.cont [13/16] 0.0, 128
    %2462 = vxpose.xlu0.b32.cont [14/16] 0.0, 128
    %2463 = vxpose.xlu0.b32.cont [15/16] 0.0, 128
    %2464 = vxpose.xlu0.b32.end [16/16] 0.0, 128
    %v2465 = vpop.trf.xlu0
    %v2466 = vpop.trf.xlu0
    %v2467 = vpop.trf.xlu0
    %v2468 = vpop.trf.xlu0
    %v2469 = vpop.trf.xlu0
    %v2470 = vpop.trf.xlu0
    %v2471 = vpop.trf.xlu0
    %v2472 = vpop.trf.xlu0
    %v2473 = vpop.trf.xlu0
    %v2474 = vpop.trf.xlu0
    %v2475 = vpop.trf.xlu0
    %v2476 = vpop.trf.xlu0
    %v2477 = vpop.trf.xlu0
    %v2478 = vpop.trf.xlu0
    %v2479 = vpop.trf.xlu0
    %v2480 = vpop.trf.xlu0
    %v2482 = vsel %vm1859, %v2465, 0
    %v2485 = vsel %vm1859, %v2466, 0
    %v2488 = vsel %vm1859, %v2467, 0
    %v2491 = vsel %vm1859, %v2468, 0
    %v2494 = vsel %vm1859, %v2469, 0
    %v2497 = vsel %vm1859, %v2470, 0
    %v2500 = vsel %vm1859, %v2471, 0
    %v2503 = vsel %vm1859, %v2472, 0
    %2505 = vmatpush.msra.mxu0 0.0
    %2506 = vmatpush.msra.mxu0 0.0
    %2507 = vmatpush.msra.mxu0 0.0
    %2508 = vmatpush.msra.mxu0 0.0
    %2509 = vmatpush.msra.mxu0 0.0
    %2510 = vmatpush.msra.mxu0 0.0
    %2511 = vmatpush.msra.mxu0 0.0
    %2512 = vmatpush.msra.mxu0 0.0
    %2513 = vmatpush.msra.mxu0 0.0
    %2514 = vmatpush.msra.mxu0 0.0
    %2515 = vmatpush.msra.mxu0 0.0
    %2516 = vmatpush.msra.mxu0 0.0
    %2517 = vmatpush.msra.mxu0 0.0
    %2518 = vmatpush.msra.mxu0 0.0
    %2519 = vmatpush.msra.mxu0 0.0
    %2520 = vmatpush.msra.mxu0 %v2373
    %2521 = vmatmul.f32.gmra.mxu0 %v2482
    %v2522 = vpop.f32.mrf.mxu0
    %v2523 = vadd.f32 %v2380, %v2522
    %2524 = vmatmul.f32.gmra.mxu0 %v2485
    %v2525 = vpop.f32.mrf.mxu0
    %v2526 = vadd.f32 %v2385, %v2525
    %2527 = vmatmul.f32.gmra.mxu0 %v2488
    %v2528 = vpop.f32.mrf.mxu0
    %v2529 = vadd.f32 %v2390, %v2528
    %2530 = vmatmul.f32.gmra.mxu0 %v2491
    %v2531 = vpop.f32.mrf.mxu0
    %v2532 = vadd.f32 %v2395, %v2531
    %2533 = vmatmul.f32.gmra.mxu0 %v2494
    %v2534 = vpop.f32.mrf.mxu0
    %v2535 = vadd.f32 %v2400, %v2534
    %2536 = vmatmul.f32.gmra.mxu0 %v2497
    %v2537 = vpop.f32.mrf.mxu0
    %v2538 = vadd.f32 %v2405, %v2537
    %2539 = vmatmul.f32.gmra.mxu0 %v2500
    %v2540 = vpop.f32.mrf.mxu0
    %v2541 = vadd.f32 %v2410, %v2540
    %2542 = vmatmul.f32.gmra.mxu0 %v2503
    %v2543 = vpop.f32.mrf.mxu0
    %v2544 = vadd.f32 %v2415, %v2543
    %2545 = vdwg.mxu0
    %2546 = vmatpush.msra.mxu0 0.0
    %2547 = vmatpush.msra.mxu0 0.0
    %2548 = vmatpush.msra.mxu0 0.0
    %2549 = vmatpush.msra.mxu0 0.0
    %2550 = vmatpush.msra.mxu0 0.0
    %2551 = vmatpush.msra.mxu0 0.0
    %2552 = vmatpush.msra.mxu0 0.0
    %2553 = vmatpush.msra.mxu0 0.0
    %2554 = vmatpush.msra.mxu0 0.0
    %2555 = vmatpush.msra.mxu0 0.0
    %2556 = vmatpush.msra.mxu0 0.0
    %2557 = vmatpush.msra.mxu0 0.0
    %2558 = vmatpush.msra.mxu0 0.0
    %2559 = vmatpush.msra.mxu0 0.0
    %2560 = vmatpush.msra.mxu0 0.0
    %2561 = vmatpush.msra.mxu0 %v2374
    %2562 = vmatmul.f32.gmra.mxu0 %v2482
    %v2563 = vpop.f32.mrf.mxu0
    %v2564 = vadd.f32 %v2380, %v2563
    %2565 = vmatmul.f32.gmra.mxu0 %v2485
    %v2566 = vpop.f32.mrf.mxu0
    %v2567 = vadd.f32 %v2385, %v2566
    %2568 = vmatmul.f32.gmra.mxu0 %v2488
    %v2569 = vpop.f32.mrf.mxu0
    %v2570 = vadd.f32 %v2390, %v2569
    %2571 = vmatmul.f32.gmra.mxu0 %v2491
    %v2572 = vpop.f32.mrf.mxu0
    %v2573 = vadd.f32 %v2395, %v2572
    %2574 = vmatmul.f32.gmra.mxu0 %v2494
    %v2575 = vpop.f32.mrf.mxu0
    %v2576 = vadd.f32 %v2400, %v2575
    %2577 = vmatmul.f32.gmra.mxu0 %v2497
    %v2578 = vpop.f32.mrf.mxu0
    %v2579 = vadd.f32 %v2405, %v2578
    %2580 = vmatmul.f32.gmra.mxu0 %v2500
    %v2581 = vpop.f32.mrf.mxu0
    %v2582 = vadd.f32 %v2410, %v2581
    %2583 = vmatmul.f32.gmra.mxu0 %v2503
    %v2584 = vpop.f32.mrf.mxu0
    %v2585 = vadd.f32 %v2415, %v2584
    %2586 = vdwg.mxu0
    %2587 = vmatpush.msra.mxu0 0.0
    %2588 = vmatpush.msra.mxu0 0.0
    %2589 = vmatpush.msra.mxu0 0.0
    %2590 = vmatpush.msra.mxu0 0.0
    %2591 = vmatpush.msra.mxu0 0.0
    %2592 = vmatpush.msra.mxu0 0.0
    %2593 = vmatpush.msra.mxu0 0.0
    %2594 = vmatpush.msra.mxu0 0.0
    %2595 = vmatpush.msra.mxu0 0.0
    %2596 = vmatpush.msra.mxu0 0.0
    %2597 = vmatpush.msra.mxu0 0.0
    %2598 = vmatpush.msra.mxu0 0.0
    %2599 = vmatpush.msra.mxu0 0.0
    %2600 = vmatpush.msra.mxu0 0.0
    %2601 = vmatpush.msra.mxu0 0.0
    %2602 = vmatpush.msra.mxu0 %v2375
    %2603 = vmatmul.f32.gmra.mxu0 %v2482
    %v2604 = vpop.f32.mrf.mxu0
    %v2605 = vadd.f32 %v2419, %v2604
    %2606 = vmatmul.f32.gmra.mxu0 %v2485
    %v2607 = vpop.f32.mrf.mxu0
    %v2608 = vadd.f32 %v2423, %v2607
    %2609 = vmatmul.f32.gmra.mxu0 %v2488
    %v2610 = vpop.f32.mrf.mxu0
    %v2611 = vadd.f32 %v2427, %v2610
    %2612 = vmatmul.f32.gmra.mxu0 %v2491
    %v2613 = vpop.f32.mrf.mxu0
    %v2614 = vadd.f32 %v2431, %v2613
    %2615 = vmatmul.f32.gmra.mxu0 %v2494
    %v2616 = vpop.f32.mrf.mxu0
    %v2617 = vadd.f32 %v2435, %v2616
    %2618 = vmatmul.f32.gmra.mxu0 %v2497
    %v2619 = vpop.f32.mrf.mxu0
    %v2620 = vadd.f32 %v2439, %v2619
    %2621 = vmatmul.f32.gmra.mxu0 %v2500
    %v2622 = vpop.f32.mrf.mxu0
    %v2623 = vadd.f32 %v2443, %v2622
    %2624 = vmatmul.f32.gmra.mxu0 %v2503
    %v2625 = vpop.f32.mrf.mxu0
    %v2626 = vadd.f32 %v2447, %v2625
    %2627 = vdwg.mxu0
    %2628 = vmatpush.msra.mxu0 0.0
    %2629 = vmatpush.msra.mxu0 0.0
    %2630 = vmatpush.msra.mxu0 0.0
    %2631 = vmatpush.msra.mxu0 0.0
    %2632 = vmatpush.msra.mxu0 0.0
    %2633 = vmatpush.msra.mxu0 0.0
    %2634 = vmatpush.msra.mxu0 0.0
    %2635 = vmatpush.msra.mxu0 0.0
    %2636 = vmatpush.msra.mxu0 0.0
    %2637 = vmatpush.msra.mxu0 0.0
    %2638 = vmatpush.msra.mxu0 0.0
    %2639 = vmatpush.msra.mxu0 0.0
    %2640 = vmatpush.msra.mxu0 0.0
    %2641 = vmatpush.msra.mxu0 0.0
    %2642 = vmatpush.msra.mxu0 0.0
    %2643 = vmatpush.msra.mxu0 %v2376
    %2644 = vmatmul.f32.gmra.mxu0 %v2482
    %v2645 = vpop.f32.mrf.mxu0
    %v2646 = vadd.f32 %v2419, %v2645
    %2647 = vmatmul.f32.gmra.mxu0 %v2485
    %v2648 = vpop.f32.mrf.mxu0
    %v2649 = vadd.f32 %v2423, %v2648
    %2650 = vmatmul.f32.gmra.mxu0 %v2488
    %v2651 = vpop.f32.mrf.mxu0
    %v2652 = vadd.f32 %v2427, %v2651
    %2653 = vmatmul.f32.gmra.mxu0 %v2491
    %v2654 = vpop.f32.mrf.mxu0
    %v2655 = vadd.f32 %v2431, %v2654
    %2656 = vmatmul.f32.gmra.mxu0 %v2494
    %v2657 = vpop.f32.mrf.mxu0
    %v2658 = vadd.f32 %v2435, %v2657
    %2659 = vmatmul.f32.gmra.mxu0 %v2497
    %v2660 = vpop.f32.mrf.mxu0
    %v2661 = vadd.f32 %v2439, %v2660
    %2662 = vmatmul.f32.gmra.mxu0 %v2500
    %v2663 = vpop.f32.mrf.mxu0
    %v2664 = vadd.f32 %v2443, %v2663
    %2665 = vmatmul.f32.gmra.mxu0 %v2503
    %v2666 = vpop.f32.mrf.mxu0
    %v2667 = vadd.f32 %v2447, %v2666
    %2668 = vdwg.mxu0
    %2669 = vxpose.xlu0.b32.start [1/16] %v133, 128
    %2670 = vxpose.xlu0.b32.cont [2/16] %v134, 128
    %2671 = vxpose.xlu0.b32.cont [3/16] %v135, 128
    %2672 = vxpose.xlu0.b32.cont [4/16] %v136, 128
    %2673 = vxpose.xlu0.b32.cont [5/16] %v137, 128
    %2674 = vxpose.xlu0.b32.cont [6/16] %v138, 128
    %2675 = vxpose.xlu0.b32.cont [7/16] %v139, 128
    %2676 = vxpose.xlu0.b32.cont [8/16] %v140, 128
    %2677 = vxpose.xlu0.b32.cont [9/16] 0.0, 128
    %2678 = vxpose.xlu0.b32.cont [10/16] 0.0, 128
    %2679 = vxpose.xlu0.b32.cont [11/16] 0.0, 128
    %2680 = vxpose.xlu0.b32.cont [12/16] 0.0, 128
    %2681 = vxpose.xlu0.b32.cont [13/16] 0.0, 128
    %2682 = vxpose.xlu0.b32.cont [14/16] 0.0, 128
    %2683 = vxpose.xlu0.b32.cont [15/16] 0.0, 128
    %2684 = vxpose.xlu0.b32.end [16/16] 0.0, 128
    %v2685 = vpop.trf.xlu0
    %v2686 = vpop.trf.xlu0
    %v2687 = vpop.trf.xlu0
    %v2688 = vpop.trf.xlu0
    %v2689 = vpop.trf.xlu0
    %v2690 = vpop.trf.xlu0
    %v2691 = vpop.trf.xlu0
    %v2692 = vpop.trf.xlu0
    %v2693 = vpop.trf.xlu0
    %v2694 = vpop.trf.xlu0
    %v2695 = vpop.trf.xlu0
    %v2696 = vpop.trf.xlu0
    %v2697 = vpop.trf.xlu0
    %v2698 = vpop.trf.xlu0
    %v2699 = vpop.trf.xlu0
    %v2700 = vpop.trf.xlu0
    %v2702 = vsel %vm2148, %v2685, 0
    %v2705 = vsel %vm2148, %v2686, 0
    %v2708 = vsel %vm2148, %v2687, 0
    %v2711 = vsel %vm2148, %v2688, 0
    %v2714 = vsel %vm2148, %v2689, 0
    %v2717 = vsel %vm2148, %v2690, 0
    %v2720 = vsel %vm2148, %v2691, 0
    %v2723 = vsel %vm2148, %v2692, 0
    %2725 = vmatpush.msra.mxu0 0.0
    %2726 = vmatpush.msra.mxu0 0.0
    %2727 = vmatpush.msra.mxu0 0.0
    %2728 = vmatpush.msra.mxu0 0.0
    %2729 = vmatpush.msra.mxu0 0.0
    %2730 = vmatpush.msra.mxu0 0.0
    %2731 = vmatpush.msra.mxu0 0.0
    %2732 = vmatpush.msra.mxu0 0.0
    %2733 = vmatpush.msra.mxu0 %v2544
    %2734 = vmatpush.msra.mxu0 %v2541
    %2735 = vmatpush.msra.mxu0 %v2538
    %2736 = vmatpush.msra.mxu0 %v2535
    %2737 = vmatpush.msra.mxu0 %v2532
    %2738 = vmatpush.msra.mxu0 %v2529
    %2739 = vmatpush.msra.mxu0 %v2526
    %2740 = vmatpush.msra.mxu0 %v2523
    %2741 = vmatmul.f32.gmra.mxu0 %v2702
    %v2742 = vpop.f32.mrf.mxu0
    %v2743 = vadd.f32 0.0, %v2742
    %2744 = vmatmul.f32.gmra.mxu0 %v2705
    %v2745 = vpop.f32.mrf.mxu0
    %v2746 = vadd.f32 0.0, %v2745
    %2747 = vmatmul.f32.gmra.mxu0 %v2708
    %v2748 = vpop.f32.mrf.mxu0
    %v2749 = vadd.f32 0.0, %v2748
    %2750 = vmatmul.f32.gmra.mxu0 %v2711
    %v2751 = vpop.f32.mrf.mxu0
    %v2752 = vadd.f32 0.0, %v2751
    %2753 = vmatmul.f32.gmra.mxu0 %v2714
    %v2754 = vpop.f32.mrf.mxu0
    %v2755 = vadd.f32 0.0, %v2754
    %2756 = vmatmul.f32.gmra.mxu0 %v2717
    %v2757 = vpop.f32.mrf.mxu0
    %v2758 = vadd.f32 0.0, %v2757
    %2759 = vmatmul.f32.gmra.mxu0 %v2720
    %v2760 = vpop.f32.mrf.mxu0
    %v2761 = vadd.f32 0.0, %v2760
    %2762 = vmatmul.f32.gmra.mxu0 %v2723
    %v2763 = vpop.f32.mrf.mxu0
    %v2764 = vadd.f32 0.0, %v2763
    %2765 = vdwg.mxu0
    %2766 = vmatpush.msra.mxu0 0.0
    %2767 = vmatpush.msra.mxu0 0.0
    %2768 = vmatpush.msra.mxu0 0.0
    %2769 = vmatpush.msra.mxu0 0.0
    %2770 = vmatpush.msra.mxu0 0.0
    %2771 = vmatpush.msra.mxu0 0.0
    %2772 = vmatpush.msra.mxu0 0.0
    %2773 = vmatpush.msra.mxu0 0.0
    %2774 = vmatpush.msra.mxu0 %v2585
    %2775 = vmatpush.msra.mxu0 %v2582
    %2776 = vmatpush.msra.mxu0 %v2579
    %2777 = vmatpush.msra.mxu0 %v2576
    %2778 = vmatpush.msra.mxu0 %v2573
    %2779 = vmatpush.msra.mxu0 %v2570
    %2780 = vmatpush.msra.mxu0 %v2567
    %2781 = vmatpush.msra.mxu0 %v2564
    %2782 = vmatmul.f32.gmra.mxu0 %v2702
    %v2783 = vpop.f32.mrf.mxu0
    %v2784 = vadd.f32 0.0, %v2783
    %2785 = vmatmul.f32.gmra.mxu0 %v2705
    %v2786 = vpop.f32.mrf.mxu0
    %v2787 = vadd.f32 0.0, %v2786
    %2788 = vmatmul.f32.gmra.mxu0 %v2708
    %v2789 = vpop.f32.mrf.mxu0
    %v2790 = vadd.f32 0.0, %v2789
    %2791 = vmatmul.f32.gmra.mxu0 %v2711
    %v2792 = vpop.f32.mrf.mxu0
    %v2793 = vadd.f32 0.0, %v2792
    %2794 = vmatmul.f32.gmra.mxu0 %v2714
    %v2795 = vpop.f32.mrf.mxu0
    %v2796 = vadd.f32 0.0, %v2795
    %2797 = vmatmul.f32.gmra.mxu0 %v2717
    %v2798 = vpop.f32.mrf.mxu0
    %v2799 = vadd.f32 0.0, %v2798
    %2800 = vmatmul.f32.gmra.mxu0 %v2720
    %v2801 = vpop.f32.mrf.mxu0
    %v2802 = vadd.f32 0.0, %v2801
    %2803 = vmatmul.f32.gmra.mxu0 %v2723
    %v2804 = vpop.f32.mrf.mxu0
    %v2805 = vadd.f32 0.0, %v2804
    %2806 = vdwg.mxu0
    %2807 = vmatpush.msra.mxu0 0.0
    %2808 = vmatpush.msra.mxu0 0.0
    %2809 = vmatpush.msra.mxu0 0.0
    %2810 = vmatpush.msra.mxu0 0.0
    %2811 = vmatpush.msra.mxu0 0.0
    %2812 = vmatpush.msra.mxu0 0.0
    %2813 = vmatpush.msra.mxu0 0.0
    %2814 = vmatpush.msra.mxu0 0.0
    %2815 = vmatpush.msra.mxu0 %v2626
    %2816 = vmatpush.msra.mxu0 %v2623
    %2817 = vmatpush.msra.mxu0 %v2620
    %2818 = vmatpush.msra.mxu0 %v2617
    %2819 = vmatpush.msra.mxu0 %v2614
    %2820 = vmatpush.msra.mxu0 %v2611
    %2821 = vmatpush.msra.mxu0 %v2608
    %2822 = vmatpush.msra.mxu0 %v2605
    %2823 = vmatmul.f32.gmra.mxu0 %v2702
    %v2824 = vpop.f32.mrf.mxu0
    %v2825 = vadd.f32 0.0, %v2824
    %2826 = vmatmul.f32.gmra.mxu0 %v2705
    %v2827 = vpop.f32.mrf.mxu0
    %v2828 = vadd.f32 0.0, %v2827
    %2829 = vmatmul.f32.gmra.mxu0 %v2708
    %v2830 = vpop.f32.mrf.mxu0
    %v2831 = vadd.f32 0.0, %v2830
    %2832 = vmatmul.f32.gmra.mxu0 %v2711
    %v2833 = vpop.f32.mrf.mxu0
    %v2834 = vadd.f32 0.0, %v2833
    %2835 = vmatmul.f32.gmra.mxu0 %v2714
    %v2836 = vpop.f32.mrf.mxu0
    %v2837 = vadd.f32 0.0, %v2836
    %2838 = vmatmul.f32.gmra.mxu0 %v2717
    %v2839 = vpop.f32.mrf.mxu0
    %v2840 = vadd.f32 0.0, %v2839
    %2841 = vmatmul.f32.gmra.mxu0 %v2720
    %v2842 = vpop.f32.mrf.mxu0
    %v2843 = vadd.f32 0.0, %v2842
    %2844 = vmatmul.f32.gmra.mxu0 %v2723
    %v2845 = vpop.f32.mrf.mxu0
    %v2846 = vadd.f32 0.0, %v2845
    %2847 = vdwg.mxu0
    %2848 = vmatpush.msra.mxu0 0.0
    %2849 = vmatpush.msra.mxu0 0.0
    %2850 = vmatpush.msra.mxu0 0.0
    %2851 = vmatpush.msra.mxu0 0.0
    %2852 = vmatpush.msra.mxu0 0.0
    %2853 = vmatpush.msra.mxu0 0.0
    %2854 = vmatpush.msra.mxu0 0.0
    %2855 = vmatpush.msra.mxu0 0.0
    %2856 = vmatpush.msra.mxu0 %v2667
    %2857 = vmatpush.msra.mxu0 %v2664
    %2858 = vmatpush.msra.mxu0 %v2661
    %2859 = vmatpush.msra.mxu0 %v2658
    %2860 = vmatpush.msra.mxu0 %v2655
    %2861 = vmatpush.msra.mxu0 %v2652
    %2862 = vmatpush.msra.mxu0 %v2649
    %2863 = vmatpush.msra.mxu0 %v2646
    %2864 = vmatmul.f32.gmra.mxu0 %v2702
    %v2865 = vpop.f32.mrf.mxu0
    %v2866 = vadd.f32 0.0, %v2865
    %2867 = vmatmul.f32.gmra.mxu0 %v2705
    %v2868 = vpop.f32.mrf.mxu0
    %v2869 = vadd.f32 0.0, %v2868
    %2870 = vmatmul.f32.gmra.mxu0 %v2708
    %v2871 = vpop.f32.mrf.mxu0
    %v2872 = vadd.f32 0.0, %v2871
    %2873 = vmatmul.f32.gmra.mxu0 %v2711
    %v2874 = vpop.f32.mrf.mxu0
    %v2875 = vadd.f32 0.0, %v2874
    %2876 = vmatmul.f32.gmra.mxu0 %v2714
    %v2877 = vpop.f32.mrf.mxu0
    %v2878 = vadd.f32 0.0, %v2877
    %2879 = vmatmul.f32.gmra.mxu0 %v2717
    %v2880 = vpop.f32.mrf.mxu0
    %v2881 = vadd.f32 0.0, %v2880
    %2882 = vmatmul.f32.gmra.mxu0 %v2720
    %v2883 = vpop.f32.mrf.mxu0
    %v2884 = vadd.f32 0.0, %v2883
    %2885 = vmatmul.f32.gmra.mxu0 %v2723
    %v2886 = vpop.f32.mrf.mxu0
    %v2887 = vadd.f32 0.0, %v2886
    %2888 = vdwg.mxu0
    %v2890 = vsel %vm2148, %v2367, 0
    %2892 = vmatpush.msra.mxu0 0.0
    %2893 = vmatpush.msra.mxu0 0.0
    %2894 = vmatpush.msra.mxu0 0.0
    %2895 = vmatpush.msra.mxu0 0.0
    %2896 = vmatpush.msra.mxu0 0.0
    %2897 = vmatpush.msra.mxu0 0.0
    %2898 = vmatpush.msra.mxu0 0.0
    %2899 = vmatpush.msra.mxu0 0.0
    %2900 = vmatpush.msra.mxu0 %v2764
    %2901 = vmatpush.msra.mxu0 %v2761
    %2902 = vmatpush.msra.mxu0 %v2758
    %2903 = vmatpush.msra.mxu0 %v2755
    %2904 = vmatpush.msra.mxu0 %v2752
    %2905 = vmatpush.msra.mxu0 %v2749
    %2906 = vmatpush.msra.mxu0 %v2746
    %2907 = vmatpush.msra.mxu0 %v2743
    %2908 = vmatmul.f32.gmra.mxu0 %v2890
    %v2909 = vpop.f32.mrf.mxu0
    %v2910 = vadd.f32 0.0, %v2909
    %2911 = vdwg.mxu0
    %2912 = vmatpush.msra.mxu0 0.0
    %2913 = vmatpush.msra.mxu0 0.0
    %2914 = vmatpush.msra.mxu0 0.0
    %2915 = vmatpush.msra.mxu0 0.0
    %2916 = vmatpush.msra.mxu0 0.0
    %2917 = vmatpush.msra.mxu0 0.0
    %2918 = vmatpush.msra.mxu0 0.0
    %2919 = vmatpush.msra.mxu0 0.0
    %2920 = vmatpush.msra.mxu0 %v2805
    %2921 = vmatpush.msra.mxu0 %v2802
    %2922 = vmatpush.msra.mxu0 %v2799
    %2923 = vmatpush.msra.mxu0 %v2796
    %2924 = vmatpush.msra.mxu0 %v2793
    %2925 = vmatpush.msra.mxu0 %v2790
    %2926 = vmatpush.msra.mxu0 %v2787
    %2927 = vmatpush.msra.mxu0 %v2784
    %2928 = vmatmul.f32.gmra.mxu0 %v2890
    %v2929 = vpop.f32.mrf.mxu0
    %v2930 = vadd.f32 0.0, %v2929
    %2931 = vdwg.mxu0
    %v2932 = vmul.f32 %v2910, 0.125
    %v2933 = vmul.f32 %v2930, 0.125
    %v2934 = vrot.slane %v2932, 4
    %v2935 = vmax.f32 %v2932, %v2934
    %v2936 = vrot.slane %v2935, 2
    %v2937 = vmax.f32 %v2935, %v2936
    %v2938 = vrot.slane %v2937, 1
    %v2939 = vmax.f32 %v2937, %v2938
    %v2940 = vrot.slane %v2933, 4
    %v2941 = vmax.f32 %v2933, %v2940
    %v2942 = vrot.slane %v2941, 2
    %v2943 = vmax.f32 %v2941, %v2942
    %v2944 = vrot.slane %v2943, 1
    %v2945 = vmax.f32 %v2943, %v2944
    %v2946 = vsub.f32 %v2932, %v2939
    %v2947 = vsub.f32 %v2933, %v2945
    %v2948 = vmul.f32 %v2946, 1.442695
    %v2949 = vpow.pop %v2948
    %v2950 = vmul.f32 %v2947, 1.442695
    %v2951 = vpow.pop %v2950
    %v2952 = vrot.slane %v2949, 4
    %v2953 = vadd.f32 %v2949, %v2952
    %v2954 = vrot.slane %v2953, 2
    %v2955 = vadd.f32 %v2953, %v2954
    %v2956 = vrot.slane %v2955, 1
    %v2957 = vadd.f32 %v2955, %v2956
    %v2958 = vrot.slane %v2951, 4
    %v2959 = vadd.f32 %v2951, %v2958
    %v2960 = vrot.slane %v2959, 2
    %v2961 = vadd.f32 %v2959, %v2960
    %v2962 = vrot.slane %v2961, 1
    %v2963 = vadd.f32 %v2961, %v2962
    %v2964 = vrcp.pop %v2957
    %v2965 = vrcp.pop %v2963
    %v2966 = vmul.f32 %v2949, %v2964
    %v2967 = vmul.f32 %v2951, %v2965
    %2968 = vrot.lane.b32.xlu0 %v2367, 64
    %v2969 = vpop.permute.xlu0 %2968
    %2971 = vxpose.xlu0.b32.start [1/16] %v2969, 128
    %2972 = vxpose.xlu0.b32.cont [2/16] 0.0, 128
    %2973 = vxpose.xlu0.b32.cont [3/16] 0.0, 128
    %2974 = vxpose.xlu0.b32.cont [4/16] 0.0, 128
    %2975 = vxpose.xlu0.b32.cont [5/16] 0.0, 128
    %2976 = vxpose.xlu0.b32.cont [6/16] 0.0, 128
    %2977 = vxpose.xlu0.b32.cont [7/16] 0.0, 128
    %2978 = vxpose.xlu0.b32.cont [8/16] 0.0, 128
    %2979 = vxpose.xlu0.b32.cont [9/16] 0.0, 128
    %2980 = vxpose.xlu0.b32.cont [10/16] 0.0, 128
    %2981 = vxpose.xlu0.b32.cont [11/16] 0.0, 128
    %2982 = vxpose.xlu0.b32.cont [12/16] 0.0, 128
    %2983 = vxpose.xlu0.b32.cont [13/16] 0.0, 128
    %2984 = vxpose.xlu0.b32.cont [14/16] 0.0, 128
    %2985 = vxpose.xlu0.b32.cont [15/16] 0.0, 128
    %2986 = vxpose.xlu0.b32.end [16/16] 0.0, 128
    %v2987 = vpop.trf.xlu0
    %v2988 = vpop.trf.xlu0
    %v2989 = vpop.trf.xlu0
    %v2990 = vpop.trf.xlu0
    %v2991 = vpop.trf.xlu0
    %v2992 = vpop.trf.xlu0
    %v2993 = vpop.trf.xlu0
    %v2994 = vpop.trf.xlu0
    %v2995 = vpop.trf.xlu0
    %v2996 = vpop.trf.xlu0
    %v2997 = vpop.trf.xlu0
    %v2998 = vpop.trf.xlu0
    %v2999 = vpop.trf.xlu0
    %v3000 = vpop.trf.xlu0
    %v3001 = vpop.trf.xlu0
    %v3002 = vpop.trf.xlu0
    %v3004 = vsel %vm1859, %v2987, 0
    %v3007 = vsel %vm1859, %v2988, 0
    %v3010 = vsel %vm1859, %v2989, 0
    %v3013 = vsel %vm1859, %v2990, 0
    %v3016 = vsel %vm1859, %v2991, 0
    %v3019 = vsel %vm1859, %v2992, 0
    %v3022 = vsel %vm1859, %v2993, 0
    %v3025 = vsel %vm1859, %v2994, 0
    %3027 = vmatpush.msra.mxu0 0.0
    %3028 = vmatpush.msra.mxu0 0.0
    %3029 = vmatpush.msra.mxu0 0.0
    %3030 = vmatpush.msra.mxu0 0.0
    %3031 = vmatpush.msra.mxu0 0.0
    %3032 = vmatpush.msra.mxu0 0.0
    %3033 = vmatpush.msra.mxu0 0.0
    %3034 = vmatpush.msra.mxu0 0.0
    %3035 = vmatpush.msra.mxu0 0.0
    %3036 = vmatpush.msra.mxu0 0.0
    %3037 = vmatpush.msra.mxu0 0.0
    %3038 = vmatpush.msra.mxu0 0.0
    %3039 = vmatpush.msra.mxu0 0.0
    %3040 = vmatpush.msra.mxu0 0.0
    %3041 = vmatpush.msra.mxu0 0.0
    %3042 = vmatpush.msra.mxu0 %v2966
    %3043 = vmatmul.f32.gmra.mxu0 %v3004
    %v3044 = vpop.f32.mrf.mxu0
    %v3045 = vadd.f32 0.0, %v3044
    %3046 = vmatmul.f32.gmra.mxu0 %v3007
    %v3047 = vpop.f32.mrf.mxu0
    %v3048 = vadd.f32 0.0, %v3047
    %3049 = vmatmul.f32.gmra.mxu0 %v3010
    %v3050 = vpop.f32.mrf.mxu0
    %v3051 = vadd.f32 0.0, %v3050
    %3052 = vmatmul.f32.gmra.mxu0 %v3013
    %v3053 = vpop.f32.mrf.mxu0
    %v3054 = vadd.f32 0.0, %v3053
    %3055 = vmatmul.f32.gmra.mxu0 %v3016
    %v3056 = vpop.f32.mrf.mxu0
    %v3057 = vadd.f32 0.0, %v3056
    %3058 = vmatmul.f32.gmra.mxu0 %v3019
    %v3059 = vpop.f32.mrf.mxu0
    %v3060 = vadd.f32 0.0, %v3059
    %3061 = vmatmul.f32.gmra.mxu0 %v3022
    %v3062 = vpop.f32.mrf.mxu0
    %v3063 = vadd.f32 0.0, %v3062
    %3064 = vmatmul.f32.gmra.mxu0 %v3025
    %v3065 = vpop.f32.mrf.mxu0
    %v3066 = vadd.f32 0.0, %v3065
    %3067 = vdwg.mxu0
    %3068 = vmatpush.msra.mxu0 0.0
    %3069 = vmatpush.msra.mxu0 0.0
    %3070 = vmatpush.msra.mxu0 0.0
    %3071 = vmatpush.msra.mxu0 0.0
    %3072 = vmatpush.msra.mxu0 0.0
    %3073 = vmatpush.msra.mxu0 0.0
    %3074 = vmatpush.msra.mxu0 0.0
    %3075 = vmatpush.msra.mxu0 0.0
    %3076 = vmatpush.msra.mxu0 0.0
    %3077 = vmatpush.msra.mxu0 0.0
    %3078 = vmatpush.msra.mxu0 0.0
    %3079 = vmatpush.msra.mxu0 0.0
    %3080 = vmatpush.msra.mxu0 0.0
    %3081 = vmatpush.msra.mxu0 0.0
    %3082 = vmatpush.msra.mxu0 0.0
    %3083 = vmatpush.msra.mxu0 %v2967
    %3084 = vmatmul.f32.gmra.mxu0 %v3004
    %v3085 = vpop.f32.mrf.mxu0
    %v3086 = vadd.f32 0.0, %v3085
    %3087 = vmatmul.f32.gmra.mxu0 %v3007
    %v3088 = vpop.f32.mrf.mxu0
    %v3089 = vadd.f32 0.0, %v3088
    %3090 = vmatmul.f32.gmra.mxu0 %v3010
    %v3091 = vpop.f32.mrf.mxu0
    %v3092 = vadd.f32 0.0, %v3091
    %3093 = vmatmul.f32.gmra.mxu0 %v3013
    %v3094 = vpop.f32.mrf.mxu0
    %v3095 = vadd.f32 0.0, %v3094
    %3096 = vmatmul.f32.gmra.mxu0 %v3016
    %v3097 = vpop.f32.mrf.mxu0
    %v3098 = vadd.f32 0.0, %v3097
    %3099 = vmatmul.f32.gmra.mxu0 %v3019
    %v3100 = vpop.f32.mrf.mxu0
    %v3101 = vadd.f32 0.0, %v3100
    %3102 = vmatmul.f32.gmra.mxu0 %v3022
    %v3103 = vpop.f32.mrf.mxu0
    %v3104 = vadd.f32 0.0, %v3103
    %3105 = vmatmul.f32.gmra.mxu0 %v3025
    %v3106 = vpop.f32.mrf.mxu0
    %v3107 = vadd.f32 0.0, %v3106
    %3108 = vdwg.mxu0
    %v3110 = vsel %vm2148, %v2370, 0
    %3112 = vmatpush.msra.mxu0 0.0
    %3113 = vmatpush.msra.mxu0 0.0
    %3114 = vmatpush.msra.mxu0 0.0
    %3115 = vmatpush.msra.mxu0 0.0
    %3116 = vmatpush.msra.mxu0 0.0
    %3117 = vmatpush.msra.mxu0 0.0
    %3118 = vmatpush.msra.mxu0 0.0
    %3119 = vmatpush.msra.mxu0 0.0
    %3120 = vmatpush.msra.mxu0 %v2846
    %3121 = vmatpush.msra.mxu0 %v2843
    %3122 = vmatpush.msra.mxu0 %v2840
    %3123 = vmatpush.msra.mxu0 %v2837
    %3124 = vmatpush.msra.mxu0 %v2834
    %3125 = vmatpush.msra.mxu0 %v2831
    %3126 = vmatpush.msra.mxu0 %v2828
    %3127 = vmatpush.msra.mxu0 %v2825
    %3128 = vmatmul.f32.gmra.mxu0 %v3110
    %v3129 = vpop.f32.mrf.mxu0
    %v3130 = vadd.f32 0.0, %v3129
    %3131 = vdwg.mxu0
    %3132 = vmatpush.msra.mxu0 0.0
    %3133 = vmatpush.msra.mxu0 0.0
    %3134 = vmatpush.msra.mxu0 0.0
    %3135 = vmatpush.msra.mxu0 0.0
    %3136 = vmatpush.msra.mxu0 0.0
    %3137 = vmatpush.msra.mxu0 0.0
    %3138 = vmatpush.msra.mxu0 0.0
    %3139 = vmatpush.msra.mxu0 0.0
    %3140 = vmatpush.msra.mxu0 %v2887
    %3141 = vmatpush.msra.mxu0 %v2884
    %3142 = vmatpush.msra.mxu0 %v2881
    %3143 = vmatpush.msra.mxu0 %v2878
    %3144 = vmatpush.msra.mxu0 %v2875
    %3145 = vmatpush.msra.mxu0 %v2872
    %3146 = vmatpush.msra.mxu0 %v2869
    %3147 = vmatpush.msra.mxu0 %v2866
    %3148 = vmatmul.f32.gmra.mxu0 %v3110
    %v3149 = vpop.f32.mrf.mxu0
    %v3150 = vadd.f32 0.0, %v3149
    %3151 = vdwg.mxu0
    %v3152 = vmul.f32 %v3130, 0.125
    %v3153 = vmul.f32 %v3150, 0.125
    %v3154 = vrot.slane %v3152, 4
    %v3155 = vmax.f32 %v3152, %v3154
    %v3156 = vrot.slane %v3155, 2
    %v3157 = vmax.f32 %v3155, %v3156
    %v3158 = vrot.slane %v3157, 1
    %v3159 = vmax.f32 %v3157, %v3158
    %v3160 = vrot.slane %v3153, 4
    %v3161 = vmax.f32 %v3153, %v3160
    %v3162 = vrot.slane %v3161, 2
    %v3163 = vmax.f32 %v3161, %v3162
    %v3164 = vrot.slane %v3163, 1
    %v3165 = vmax.f32 %v3163, %v3164
    %v3166 = vsub.f32 %v3152, %v3159
    %v3167 = vsub.f32 %v3153, %v3165
    %v3168 = vmul.f32 %v3166, 1.442695
    %v3169 = vpow.pop %v3168
    %v3170 = vmul.f32 %v3167, 1.442695
    %v3171 = vpow.pop %v3170
    %v3172 = vrot.slane %v3169, 4
    %v3173 = vadd.f32 %v3169, %v3172
    %v3174 = vrot.slane %v3173, 2
    %v3175 = vadd.f32 %v3173, %v3174
    %v3176 = vrot.slane %v3175, 1
    %v3177 = vadd.f32 %v3175, %v3176
    %v3178 = vrot.slane %v3171, 4
    %v3179 = vadd.f32 %v3171, %v3178
    %v3180 = vrot.slane %v3179, 2
    %v3181 = vadd.f32 %v3179, %v3180
    %v3182 = vrot.slane %v3181, 1
    %v3183 = vadd.f32 %v3181, %v3182
    %v3184 = vrcp.pop %v3177
    %v3185 = vrcp.pop %v3183
    %v3186 = vmul.f32 %v3169, %v3184
    %v3187 = vmul.f32 %v3171, %v3185
    %3188 = vrot.lane.b32.xlu0 %v2370, 64
    %v3189 = vpop.permute.xlu0 %3188
    %3191 = vxpose.xlu0.b32.start [1/16] %v3189, 128
    %3192 = vxpose.xlu0.b32.cont [2/16] 0.0, 128
    %3193 = vxpose.xlu0.b32.cont [3/16] 0.0, 128
    %3194 = vxpose.xlu0.b32.cont [4/16] 0.0, 128
    %3195 = vxpose.xlu0.b32.cont [5/16] 0.0, 128
    %3196 = vxpose.xlu0.b32.cont [6/16] 0.0, 128
    %3197 = vxpose.xlu0.b32.cont [7/16] 0.0, 128
    %3198 = vxpose.xlu0.b32.cont [8/16] 0.0, 128
    %3199 = vxpose.xlu0.b32.cont [9/16] 0.0, 128
    %3200 = vxpose.xlu0.b32.cont [10/16] 0.0, 128
    %3201 = vxpose.xlu0.b32.cont [11/16] 0.0, 128
    %3202 = vxpose.xlu0.b32.cont [12/16] 0.0, 128
    %3203 = vxpose.xlu0.b32.cont [13/16] 0.0, 128
    %3204 = vxpose.xlu0.b32.cont [14/16] 0.0, 128
    %3205 = vxpose.xlu0.b32.cont [15/16] 0.0, 128
    %3206 = vxpose.xlu0.b32.end [16/16] 0.0, 128
    %v3207 = vpop.trf.xlu0
    %v3208 = vpop.trf.xlu0
    %v3209 = vpop.trf.xlu0
    %v3210 = vpop.trf.xlu0
    %v3211 = vpop.trf.xlu0
    %v3212 = vpop.trf.xlu0
    %v3213 = vpop.trf.xlu0
    %v3214 = vpop.trf.xlu0
    %v3215 = vpop.trf.xlu0
    %v3216 = vpop.trf.xlu0
    %v3217 = vpop.trf.xlu0
    %v3218 = vpop.trf.xlu0
    %v3219 = vpop.trf.xlu0
    %v3220 = vpop.trf.xlu0
    %v3221 = vpop.trf.xlu0
    %v3222 = vpop.trf.xlu0
    %v3224 = vsel %vm1859, %v3207, 0
    %v3227 = vsel %vm1859, %v3208, 0
    %v3230 = vsel %vm1859, %v3209, 0
    %v3233 = vsel %vm1859, %v3210, 0
    %v3236 = vsel %vm1859, %v3211, 0
    %v3239 = vsel %vm1859, %v3212, 0
    %v3242 = vsel %vm1859, %v3213, 0
    %v3245 = vsel %vm1859, %v3214, 0
    %3247 = vmatpush.msra.mxu0 0.0
    %3248 = vmatpush.msra.mxu0 0.0
    %3249 = vmatpush.msra.mxu0 0.0
    %3250 = vmatpush.msra.mxu0 0.0
    %3251 = vmatpush.msra.mxu0 0.0
    %3252 = vmatpush.msra.mxu0 0.0
    %3253 = vmatpush.msra.mxu0 0.0
    %3254 = vmatpush.msra.mxu0 0.0
    %3255 = vmatpush.msra.mxu0 0.0
    %3256 = vmatpush.msra.mxu0 0.0
    %3257 = vmatpush.msra.mxu0 0.0
    %3258 = vmatpush.msra.mxu0 0.0
    %3259 = vmatpush.msra.mxu0 0.0
    %3260 = vmatpush.msra.mxu0 0.0
    %3261 = vmatpush.msra.mxu0 0.0
    %3262 = vmatpush.msra.mxu0 %v3186
    %3263 = vmatmul.f32.gmra.mxu0 %v3224
    %v3264 = vpop.f32.mrf.mxu0
    %v3265 = vadd.f32 0.0, %v3264
    %3266 = vmatmul.f32.gmra.mxu0 %v3227
    %v3267 = vpop.f32.mrf.mxu0
    %v3268 = vadd.f32 0.0, %v3267
    %3269 = vmatmul.f32.gmra.mxu0 %v3230
    %v3270 = vpop.f32.mrf.mxu0
    %v3271 = vadd.f32 0.0, %v3270
    %3272 = vmatmul.f32.gmra.mxu0 %v3233
    %v3273 = vpop.f32.mrf.mxu0
    %v3274 = vadd.f32 0.0, %v3273
    %3275 = vmatmul.f32.gmra.mxu0 %v3236
    %v3276 = vpop.f32.mrf.mxu0
    %v3277 = vadd.f32 0.0, %v3276
    %3278 = vmatmul.f32.gmra.mxu0 %v3239
    %v3279 = vpop.f32.mrf.mxu0
    %v3280 = vadd.f32 0.0, %v3279
    %3281 = vmatmul.f32.gmra.mxu0 %v3242
    %v3282 = vpop.f32.mrf.mxu0
    %v3283 = vadd.f32 0.0, %v3282
    %3284 = vmatmul.f32.gmra.mxu0 %v3245
    %v3285 = vpop.f32.mrf.mxu0
    %v3286 = vadd.f32 0.0, %v3285
    %3287 = vdwg.mxu0
    %3288 = vmatpush.msra.mxu0 0.0
    %3289 = vmatpush.msra.mxu0 0.0
    %3290 = vmatpush.msra.mxu0 0.0
    %3291 = vmatpush.msra.mxu0 0.0
    %3292 = vmatpush.msra.mxu0 0.0
    %3293 = vmatpush.msra.mxu0 0.0
    %3294 = vmatpush.msra.mxu0 0.0
    %3295 = vmatpush.msra.mxu0 0.0
    %3296 = vmatpush.msra.mxu0 0.0
    %3297 = vmatpush.msra.mxu0 0.0
    %3298 = vmatpush.msra.mxu0 0.0
    %3299 = vmatpush.msra.mxu0 0.0
    %3300 = vmatpush.msra.mxu0 0.0
    %3301 = vmatpush.msra.mxu0 0.0
    %3302 = vmatpush.msra.mxu0 0.0
    %3303 = vmatpush.msra.mxu0 %v3187
    %3304 = vmatmul.f32.gmra.mxu0 %v3224
    %v3305 = vpop.f32.mrf.mxu0
    %v3306 = vadd.f32 0.0, %v3305
    %3307 = vmatmul.f32.gmra.mxu0 %v3227
    %v3308 = vpop.f32.mrf.mxu0
    %v3309 = vadd.f32 0.0, %v3308
    %3310 = vmatmul.f32.gmra.mxu0 %v3230
    %v3311 = vpop.f32.mrf.mxu0
    %v3312 = vadd.f32 0.0, %v3311
    %3313 = vmatmul.f32.gmra.mxu0 %v3233
    %v3314 = vpop.f32.mrf.mxu0
    %v3315 = vadd.f32 0.0, %v3314
    %3316 = vmatmul.f32.gmra.mxu0 %v3236
    %v3317 = vpop.f32.mrf.mxu0
    %v3318 = vadd.f32 0.0, %v3317
    %3319 = vmatmul.f32.gmra.mxu0 %v3239
    %v3320 = vpop.f32.mrf.mxu0
    %v3321 = vadd.f32 0.0, %v3320
    %3322 = vmatmul.f32.gmra.mxu0 %v3242
    %v3323 = vpop.f32.mrf.mxu0
    %v3324 = vadd.f32 0.0, %v3323
    %3325 = vmatmul.f32.gmra.mxu0 %v3245
    %v3326 = vpop.f32.mrf.mxu0
    %v3327 = vadd.f32 0.0, %v3326
    %3328 = vdwg.mxu0
    %3329 = vxpose.xlu0.b32.start [1/16] %v250, 128
    %3330 = vxpose.xlu0.b32.cont [2/16] %v251, 128
    %3331 = vxpose.xlu0.b32.cont [3/16] %v252, 128
    %3332 = vxpose.xlu0.b32.cont [4/16] %v253, 128
    %3333 = vxpose.xlu0.b32.cont [5/16] %v254, 128
    %3334 = vxpose.xlu0.b32.cont [6/16] %v255, 128
    %3335 = vxpose.xlu0.b32.cont [7/16] %v256, 128
    %3336 = vxpose.xlu0.b32.cont [8/16] %v257, 128
    %3337 = vxpose.xlu0.b32.cont [9/16] 0.0, 128
    %3338 = vxpose.xlu0.b32.cont [10/16] 0.0, 128
    %3339 = vxpose.xlu0.b32.cont [11/16] 0.0, 128
    %3340 = vxpose.xlu0.b32.cont [12/16] 0.0, 128
    %3341 = vxpose.xlu0.b32.cont [13/16] 0.0, 128
    %3342 = vxpose.xlu0.b32.cont [14/16] 0.0, 128
    %3343 = vxpose.xlu0.b32.cont [15/16] 0.0, 128
    %3344 = vxpose.xlu0.b32.end [16/16] 0.0, 128
    %v3345 = vpop.trf.xlu0
    %v3346 = vpop.trf.xlu0
    %v3347 = vpop.trf.xlu0
    %v3348 = vpop.trf.xlu0
    %v3349 = vpop.trf.xlu0
    %v3350 = vpop.trf.xlu0
    %v3351 = vpop.trf.xlu0
    %v3352 = vpop.trf.xlu0
    %v3353 = vpop.trf.xlu0
    %v3354 = vpop.trf.xlu0
    %v3355 = vpop.trf.xlu0
    %v3356 = vpop.trf.xlu0
    %v3357 = vpop.trf.xlu0
    %v3358 = vpop.trf.xlu0
    %v3359 = vpop.trf.xlu0
    %v3360 = vpop.trf.xlu0
    %v3362 = vsel %vm2148, %v3345, 0
    %v3365 = vsel %vm2148, %v3346, 0
    %v3368 = vsel %vm2148, %v3347, 0
    %v3371 = vsel %vm2148, %v3348, 0
    %v3374 = vsel %vm2148, %v3349, 0
    %v3377 = vsel %vm2148, %v3350, 0
    %v3380 = vsel %vm2148, %v3351, 0
    %v3383 = vsel %vm2148, %v3352, 0
    %3385 = vmatpush.msra.mxu0 0.0
    %3386 = vmatpush.msra.mxu0 0.0
    %3387 = vmatpush.msra.mxu0 0.0
    %3388 = vmatpush.msra.mxu0 0.0
    %3389 = vmatpush.msra.mxu0 0.0
    %3390 = vmatpush.msra.mxu0 0.0
    %3391 = vmatpush.msra.mxu0 0.0
    %3392 = vmatpush.msra.mxu0 0.0
    %3393 = vmatpush.msra.mxu0 %v3066
    %3394 = vmatpush.msra.mxu0 %v3063
    %3395 = vmatpush.msra.mxu0 %v3060
    %3396 = vmatpush.msra.mxu0 %v3057
    %3397 = vmatpush.msra.mxu0 %v3054
    %3398 = vmatpush.msra.mxu0 %v3051
    %3399 = vmatpush.msra.mxu0 %v3048
    %3400 = vmatpush.msra.mxu0 %v3045
    %3401 = vmatmul.f32.gmra.mxu0 %v3362
    %v3402 = vpop.f32.mrf.mxu0
    %v3403 = vadd.f32 0.0, %v3402
    %3404 = vmatmul.f32.gmra.mxu0 %v3365
    %v3405 = vpop.f32.mrf.mxu0
    %v3406 = vadd.f32 0.0, %v3405
    %3407 = vmatmul.f32.gmra.mxu0 %v3368
    %v3408 = vpop.f32.mrf.mxu0
    %v3409 = vadd.f32 0.0, %v3408
    %3410 = vmatmul.f32.gmra.mxu0 %v3371
    %v3411 = vpop.f32.mrf.mxu0
    %v3412 = vadd.f32 0.0, %v3411
    %3413 = vmatmul.f32.gmra.mxu0 %v3374
    %v3414 = vpop.f32.mrf.mxu0
    %v3415 = vadd.f32 0.0, %v3414
    %3416 = vmatmul.f32.gmra.mxu0 %v3377
    %v3417 = vpop.f32.mrf.mxu0
    %v3418 = vadd.f32 0.0, %v3417
    %3419 = vmatmul.f32.gmra.mxu0 %v3380
    %v3420 = vpop.f32.mrf.mxu0
    %v3421 = vadd.f32 0.0, %v3420
    %3422 = vmatmul.f32.gmra.mxu0 %v3383
    %v3423 = vpop.f32.mrf.mxu0
    %v3424 = vadd.f32 0.0, %v3423
    %3425 = vdwg.mxu0
    %3426 = vmatpush.msra.mxu0 0.0
    %3427 = vmatpush.msra.mxu0 0.0
    %3428 = vmatpush.msra.mxu0 0.0
    %3429 = vmatpush.msra.mxu0 0.0
    %3430 = vmatpush.msra.mxu0 0.0
    %3431 = vmatpush.msra.mxu0 0.0
    %3432 = vmatpush.msra.mxu0 0.0
    %3433 = vmatpush.msra.mxu0 0.0
    %3434 = vmatpush.msra.mxu0 %v3107
    %3435 = vmatpush.msra.mxu0 %v3104
    %3436 = vmatpush.msra.mxu0 %v3101
    %3437 = vmatpush.msra.mxu0 %v3098
    %3438 = vmatpush.msra.mxu0 %v3095
    %3439 = vmatpush.msra.mxu0 %v3092
    %3440 = vmatpush.msra.mxu0 %v3089
    %3441 = vmatpush.msra.mxu0 %v3086
    %3442 = vmatmul.f32.gmra.mxu0 %v3362
    %v3443 = vpop.f32.mrf.mxu0
    %v3444 = vadd.f32 0.0, %v3443
    %3445 = vmatmul.f32.gmra.mxu0 %v3365
    %v3446 = vpop.f32.mrf.mxu0
    %v3447 = vadd.f32 0.0, %v3446
    %3448 = vmatmul.f32.gmra.mxu0 %v3368
    %v3449 = vpop.f32.mrf.mxu0
    %v3450 = vadd.f32 0.0, %v3449
    %3451 = vmatmul.f32.gmra.mxu0 %v3371
    %v3452 = vpop.f32.mrf.mxu0
    %v3453 = vadd.f32 0.0, %v3452
    %3454 = vmatmul.f32.gmra.mxu0 %v3374
    %v3455 = vpop.f32.mrf.mxu0
    %v3456 = vadd.f32 0.0, %v3455
    %3457 = vmatmul.f32.gmra.mxu0 %v3377
    %v3458 = vpop.f32.mrf.mxu0
    %v3459 = vadd.f32 0.0, %v3458
    %3460 = vmatmul.f32.gmra.mxu0 %v3380
    %v3461 = vpop.f32.mrf.mxu0
    %v3462 = vadd.f32 0.0, %v3461
    %3463 = vmatmul.f32.gmra.mxu0 %v3383
    %v3464 = vpop.f32.mrf.mxu0
    %v3465 = vadd.f32 0.0, %v3464
    %3466 = vdwg.mxu0
    %3467 = vmatpush.msra.mxu0 0.0
    %3468 = vmatpush.msra.mxu0 0.0
    %3469 = vmatpush.msra.mxu0 0.0
    %3470 = vmatpush.msra.mxu0 0.0
    %3471 = vmatpush.msra.mxu0 0.0
    %3472 = vmatpush.msra.mxu0 0.0
    %3473 = vmatpush.msra.mxu0 0.0
    %3474 = vmatpush.msra.mxu0 0.0
    %3475 = vmatpush.msra.mxu0 %v3286
    %3476 = vmatpush.msra.mxu0 %v3283
    %3477 = vmatpush.msra.mxu0 %v3280
    %3478 = vmatpush.msra.mxu0 %v3277
    %3479 = vmatpush.msra.mxu0 %v3274
    %3480 = vmatpush.msra.mxu0 %v3271
    %3481 = vmatpush.msra.mxu0 %v3268
    %3482 = vmatpush.msra.mxu0 %v3265
    %3483 = vmatmul.f32.gmra.mxu0 %v3362
    %v3484 = vpop.f32.mrf.mxu0
    %v3485 = vadd.f32 0.0, %v3484
    %3486 = vmatmul.f32.gmra.mxu0 %v3365
    %v3487 = vpop.f32.mrf.mxu0
    %v3488 = vadd.f32 0.0, %v3487
    %3489 = vmatmul.f32.gmra.mxu0 %v3368
    %v3490 = vpop.f32.mrf.mxu0
    %v3491 = vadd.f32 0.0, %v3490
    %3492 = vmatmul.f32.gmra.mxu0 %v3371
    %v3493 = vpop.f32.mrf.mxu0
    %v3494 = vadd.f32 0.0, %v3493
    %3495 = vmatmul.f32.gmra.mxu0 %v3374
    %v3496 = vpop.f32.mrf.mxu0
    %v3497 = vadd.f32 0.0, %v3496
    %3498 = vmatmul.f32.gmra.mxu0 %v3377
    %v3499 = vpop.f32.mrf.mxu0
    %v3500 = vadd.f32 0.0, %v3499
    %3501 = vmatmul.f32.gmra.mxu0 %v3380
    %v3502 = vpop.f32.mrf.mxu0
    %v3503 = vadd.f32 0.0, %v3502
    %3504 = vmatmul.f32.gmra.mxu0 %v3383
    %v3505 = vpop.f32.mrf.mxu0
    %v3506 = vadd.f32 0.0, %v3505
    %3507 = vdwg.mxu0
    %3508 = vmatpush.msra.mxu0 0.0
    %3509 = vmatpush.msra.mxu0 0.0
    %3510 = vmatpush.msra.mxu0 0.0
    %3511 = vmatpush.msra.mxu0 0.0
    %3512 = vmatpush.msra.mxu0 0.0
    %3513 = vmatpush.msra.mxu0 0.0
    %3514 = vmatpush.msra.mxu0 0.0
    %3515 = vmatpush.msra.mxu0 0.0
    %3516 = vmatpush.msra.mxu0 %v3327
    %3517 = vmatpush.msra.mxu0 %v3324
    %3518 = vmatpush.msra.mxu0 %v3321
    %3519 = vmatpush.msra.mxu0 %v3318
    %3520 = vmatpush.msra.mxu0 %v3315
    %3521 = vmatpush.msra.mxu0 %v3312
    %3522 = vmatpush.msra.mxu0 %v3309
    %3523 = vmatpush.msra.mxu0 %v3306
    %3524 = vmatmul.f32.gmra.mxu0 %v3362
    %v3525 = vpop.f32.mrf.mxu0
    %v3526 = vadd.f32 0.0, %v3525
    %3527 = vmatmul.f32.gmra.mxu0 %v3365
    %v3528 = vpop.f32.mrf.mxu0
    %v3529 = vadd.f32 0.0, %v3528
    %3530 = vmatmul.f32.gmra.mxu0 %v3368
    %v3531 = vpop.f32.mrf.mxu0
    %v3532 = vadd.f32 0.0, %v3531
    %3533 = vmatmul.f32.gmra.mxu0 %v3371
    %v3534 = vpop.f32.mrf.mxu0
    %v3535 = vadd.f32 0.0, %v3534
    %3536 = vmatmul.f32.gmra.mxu0 %v3374
    %v3537 = vpop.f32.mrf.mxu0
    %v3538 = vadd.f32 0.0, %v3537
    %3539 = vmatmul.f32.gmra.mxu0 %v3377
    %v3540 = vpop.f32.mrf.mxu0
    %v3541 = vadd.f32 0.0, %v3540
    %3542 = vmatmul.f32.gmra.mxu0 %v3380
    %v3543 = vpop.f32.mrf.mxu0
    %v3544 = vadd.f32 0.0, %v3543
    %3545 = vmatmul.f32.gmra.mxu0 %v3383
    %v3546 = vpop.f32.mrf.mxu0
    %v3547 = vadd.f32 0.0, %v3546
    %3548 = vdwg.mxu0
    %v3549 = vadd.f32 %v2523, %v3403
    %v3550 = vadd.f32 %v2564, %v3444
    %v3551 = vadd.f32 %v2605, %v3485
    %v3552 = vadd.f32 %v2646, %v3526
    %v3553 = vadd.f32 %v2526, %v3406
    %v3554 = vadd.f32 %v2567, %v3447
    %v3555 = vadd.f32 %v2608, %v3488
    %v3556 = vadd.f32 %v2649, %v3529
    %v3557 = vadd.f32 %v2529, %v3409
    %v3558 = vadd.f32 %v2570, %v3450
    %v3559 = vadd.f32 %v2611, %v3491
    %v3560 = vadd.f32 %v2652, %v3532
    %v3561 = vadd.f32 %v2532, %v3412
    %v3562 = vadd.f32 %v2573, %v3453
    %v3563 = vadd.f32 %v2614, %v3494
    %v3564 = vadd.f32 %v2655, %v3535
    %v3565 = vadd.f32 %v2535, %v3415
    %v3566 = vadd.f32 %v2576, %v3456
    %v3567 = vadd.f32 %v2617, %v3497
    %v3568 = vadd.f32 %v2658, %v3538
    %v3569 = vadd.f32 %v2538, %v3418
    %v3570 = vadd.f32 %v2579, %v3459
    %v3571 = vadd.f32 %v2620, %v3500
    %v3572 = vadd.f32 %v2661, %v3541
    %v3573 = vadd.f32 %v2541, %v3421
    %v3574 = vadd.f32 %v2582, %v3462
    %v3575 = vadd.f32 %v2623, %v3503
    %v3576 = vadd.f32 %v2664, %v3544
    %v3577 = vadd.f32 %v2544, %v3424
    %v3578 = vadd.f32 %v2585, %v3465
    %v3579 = vadd.f32 %v2626, %v3506
    %v3580 = vadd.f32 %v2667, %v3547
    %v3581 = vld [vmem:[%s3 + $0x218] sm:$0xf]
    %3583 = vset.pattern.permute.xlu0 0
    %3584 = vperm.xlu0 %3583, %v280
    %v3585 = vpop.permute.xlu0 %3584
    %v3588 = vsel %vm2148, %v3581, 0
    %3590 = vmatpush.msra.mxu0 0.0
    %3591 = vmatpush.msra.mxu0 0.0
    %3592 = vmatpush.msra.mxu0 0.0
    %3593 = vmatpush.msra.mxu0 0.0
    %3594 = vmatpush.msra.mxu0 0.0
    %3595 = vmatpush.msra.mxu0 0.0
    %3596 = vmatpush.msra.mxu0 0.0
    %3597 = vmatpush.msra.mxu0 0.0
    %3598 = vmatpush.msra.mxu0 %v3577
    %3599 = vmatpush.msra.mxu0 %v3573
    %3600 = vmatpush.msra.mxu0 %v3569
    %3601 = vmatpush.msra.mxu0 %v3565
    %3602 = vmatpush.msra.mxu0 %v3561
    %3603 = vmatpush.msra.mxu0 %v3557
    %3604 = vmatpush.msra.mxu0 %v3553
    %3605 = vmatpush.msra.mxu0 %v3549
    %3606 = vmatmul.f32.gmra.mxu0 %v3588
    %v3607 = vpop.f32.mrf.mxu0
    %v3608 = vadd.f32 %v3585, %v3607
    %3609 = vdwg.mxu0
    %3610 = vmatpush.msra.mxu0 0.0
    %3611 = vmatpush.msra.mxu0 0.0
    %3612 = vmatpush.msra.mxu0 0.0
    %3613 = vmatpush.msra.mxu0 0.0
    %3614 = vmatpush.msra.mxu0 0.0
    %3615 = vmatpush.msra.mxu0 0.0
    %3616 = vmatpush.msra.mxu0 0.0
    %3617 = vmatpush.msra.mxu0 0.0
    %3618 = vmatpush.msra.mxu0 %v3578
    %3619 = vmatpush.msra.mxu0 %v3574
    %3620 = vmatpush.msra.mxu0 %v3570
    %3621 = vmatpush.msra.mxu0 %v3566
    %3622 = vmatpush.msra.mxu0 %v3562
    %3623 = vmatpush.msra.mxu0 %v3558
    %3624 = vmatpush.msra.mxu0 %v3554
    %3625 = vmatpush.msra.mxu0 %v3550
    %3626 = vmatmul.f32.gmra.mxu0 %v3588
    %v3627 = vpop.f32.mrf.mxu0
    %v3628 = vadd.f32 %v3585, %v3627
    %3629 = vdwg.mxu0
    %3630 = vmatpush.msra.mxu0 0.0
    %3631 = vmatpush.msra.mxu0 0.0
    %3632 = vmatpush.msra.mxu0 0.0
    %3633 = vmatpush.msra.mxu0 0.0
    %3634 = vmatpush.msra.mxu0 0.0
    %3635 = vmatpush.msra.mxu0 0.0
    %3636 = vmatpush.msra.mxu0 0.0
    %3637 = vmatpush.msra.mxu0 0.0
    %3638 = vmatpush.msra.mxu0 %v3579
    %3639 = vmatpush.msra.mxu0 %v3575
    %3640 = vmatpush.msra.mxu0 %v3571
    %3641 = vmatpush.msra.mxu0 %v3567
    %3642 = vmatpush.msra.mxu0 %v3563
    %3643 = vmatpush.msra.mxu0 %v3559
    %3644 = vmatpush.msra.mxu0 %v3555
    %3645 = vmatpush.msra.mxu0 %v3551
    %3646 = vmatmul.f32.gmra.mxu0 %v3588
    %v3647 = vpop.f32.mrf.mxu0
    %v3648 = vadd.f32 %v3585, %v3647
    %3649 = vdwg.mxu0
    %3650 = vmatpush.msra.mxu0 0.0
    %3651 = vmatpush.msra.mxu0 0.0
    %3652 = vmatpush.msra.mxu0 0.0
    %3653 = vmatpush.msra.mxu0 0.0
    %3654 = vmatpush.msra.mxu0 0.0
    %3655 = vmatpush.msra.mxu0 0.0
    %3656 = vmatpush.msra.mxu0 0.0
    %3657 = vmatpush.msra.mxu0 0.0
    %3658 = vmatpush.msra.mxu0 %v3580
    %3659 = vmatpush.msra.mxu0 %v3576
    %3660 = vmatpush.msra.mxu0 %v3572
    %3661 = vmatpush.msra.mxu0 %v3568
    %3662 = vmatpush.msra.mxu0 %v3564
    %3663 = vmatpush.msra.mxu0 %v3560
    %3664 = vmatpush.msra.mxu0 %v3556
    %3665 = vmatpush.msra.mxu0 %v3552
    %3666 = vmatmul.f32.gmra.mxu0 %v3588
    %v3667 = vpop.f32.mrf.mxu0
    %v3668 = vadd.f32 %v3585, %v3667
    %3669 = vdwg.mxu0
    %v3672 = vrot.slane %v3628, 4
    %vm3673 = vcmask 1043456
    %v3674 = vsel %vm3673, %v3608, %v3672
    %3676 = vst [vmem:[%s5] sm:$0xff] %v3674
    %v3679 = vrot.slane %v3668, 4
    %v3680 = vsel %vm3673, %v3648, %v3679
    %s3682 = scalar_lea.vmem %s5, 8
    %3683 = vst [vmem:[%s3682] sm:$0xff] %v3680
    %v3684 = vld [vmem:[%s1] sm:$0xff]
    %v3685 = vld [vmem:[%s1 + $0x8] sm:$0xff]
    %3688 = vst [vmem:[#allocation1] ss:$2 sm:$0xff] %v3684
    %s3689 = scalar_lea.vmem [#allocation1], 16
    %3690 = vst [vmem:[%s3689] ss:$2 sm:$0xff] %v3685
    %v3691 = vld.sshfl [vmem:[#allocation1] sm:$0xff pattern:$0x75316420]
    %v3692 = vld.sshfl [vmem:[#allocation1 + $0x8] sm:$0xff pattern:$0x75316420]
    %v3693 = vld.sshfl [vmem:[#allocation1 + $0x10] sm:$0xff pattern:$0x75316420]
    %v3694 = vld.sshfl [vmem:[#allocation1 + $0x18] sm:$0xff pattern:$0x75316420]
    %v3699 = vsub.f32 %v3608, %v3691
    %v3700 = vsub.f32 %v3628, %v3692
    %v3701 = vsub.f32 %v3648, %v3693
    %v3702 = vsub.f32 %v3668, %v3694
    %v3703 = vmul.f32 %v3699, %v3699
    %v3704 = vmul.f32 %v3700, %v3700
    %v3705 = vmul.f32 %v3701, %v3701
    %v3706 = vmul.f32 %v3702, %v3702
    %v3707 = vsel %vm3673, %v3703, 0.0
    %v3708 = vsel %vm3673, %v3704, 0.0
    %v3709 = vadd.f32 %v3707, %v3708
    %v3710 = vsel %vm3673, %v3705, 0.0
    %v3711 = vadd.f32 %v3709, %v3710
    %v3712 = vsel %vm3673, %v3706, 0.0
    %v3713 = vadd.f32 %v3711, %v3712
    %3714 = vadd.xlane.f32.xlu0 %v3713
    %v3715 = vpop.xlane.xlu0 %3714
    %v3716 = vrot.slane %v3715, 4
    %v3717 = vadd.f32 %v3715, %v3716
    %v3718 = vrot.slane %v3717, 2
    %v3719 = vadd.f32 %v3717, %v3718
    %v3720 = vrot.slane %v3719, 1
    %v3721 = vadd.f32 %v3719, %v3720
    %s3722 = vtos %v3721
    %s3723 = smul.f32 %s3722, 0.00048828125
    %s3724 = scalar_lea.smem [#allocation2], 0
    %3725 = sst [smem:[%s3724]] %s3723
    // Predicated region
    $region22: #{sdxl_adapter_forward.1} parent=1 // pred_check
      _
    $region23: #{sdxl_adapter_forward.1} parent=1 // pred_check_branch
      %3727 = sbr.rel (0) target = $region25
    $region24: #{sdxl_adapter_forward.1} parent=1 // pred_region
      _
    $region25: #{sdxl_adapter_forward.1} parent=1 // pred_fallthru
      _
    // Predicated region
    $region26: #{sdxl_adapter_forward.1} parent=1 // pred_check
      _
    $region27: #{sdxl_adapter_forward.1} parent=1 // pred_check_branch
      %3729 = sbr.rel (0) target = $region29
    $region28: #{sdxl_adapter_forward.1} parent=1 // pred_region
      %3731 = vsyncadd [#allocation3], 0
      %s3733 = sshll.u32 %s6, 4
      %s3734 = int_to_ptr.hbm [resolvable:$true] %s3733
      %3736 = dma.smem_to_hbm [#allocation2], 16, %s3734, [#allocation3]
    $region29: #{sdxl_adapter_forward.1} parent=1 // pred_fallthru
      _
    // Predicated region
    $region30: #{sdxl_adapter_forward.1} parent=1 // pred_check
      _
    $region31: #{sdxl_adapter_forward.1} parent=1 // pred_check_branch
      %3738 = sbr.rel (0) target = $region33
    $region32: #{sdxl_adapter_forward.1} parent=1 // pred_region
      _
    $region33: #{sdxl_adapter_forward.1} parent=1 // pred_fallthru
      _
    // Predicated region
    $region34: #{sdxl_adapter_forward.1} parent=1 // pred_check
      _
    $region35: #{sdxl_adapter_forward.1} parent=1 // pred_check_branch
      %3740 = sbr.rel (0) target = $region37
    $region36: #{sdxl_adapter_forward.1} parent=1 // pred_region
      %3742 = dma.done [#allocation3], 16
    $region37: #{sdxl_adapter_forward.1} parent=1 // pred_fallthru
      _
    %3743 = sfence
    %3744 = vsyncpa [#allocation3], 1

</llo_original>
